<compile_context>
chip_gen: v7x
topology: tpu7x:2x2x1
jax: 0.10.0
libtpu: 0.0.40
codegen_flags: <defaults>
</compile_context>

<pallas_src>
from functools import partial

import jax
import jax.numpy as jnp
from jax import lax
from jax.experimental import pallas as pl
from jax.experimental.pallas import tpu as pltpu

EPS = 1e-6  # matches partial(nn.BatchNorm1d, eps=1e-06) in the module

# Generation-aware budgets (v5e/v6e: 128 MiB VMEM, v7x: 64 MiB).  Guarded so a
# failing query just falls back to conservative values.
try:
    _VMEM_CAP = int(pltpu.get_tpu_info().vmem_capacity_bytes)
except Exception:  # pragma: no cover - conservative fallback
    _VMEM_CAP = 64 * 1024 * 1024
_TILE_BUDGET = max(2 * 1024 * 1024, _VMEM_CAP // 10)      # heaviest step working set
_VMEM_LIMIT = min(_VMEM_CAP // 2, 100 * 1024 * 1024)       # scoped VMEM limit


def _rup(v, m):
    return (v + m - 1) // m * m


# ----------------------------------------------------------------------------
# In-kernel helpers
# ----------------------------------------------------------------------------
def _acc_stats(stats_ref, h):
    """Accumulate per-channel [sum, sumsq] of the f32 slab h (C, W) into lanes
    0/1 of a VMEM-resident (1, C, 128) stats block (padded columns are zero)."""
    ssum = jnp.sum(h, axis=1, keepdims=True)               # (C, 1)
    ssq = jnp.sum(h * h, axis=1, keepdims=True)            # (C, 1)
    lane = lax.broadcasted_iota(jnp.int32, (h.shape[0], 128), 1)
    stats_ref[0] += (jnp.where(lane == 0, ssum, 0.0) +
                     jnp.where(lane == 1, ssq, 0.0))


# ----------------------------------------------------------------------------
# Pass 1: conv1 (k=1) + residual_conv (k=1) + their BN partial stats.
# ----------------------------------------------------------------------------
def _make_pass1_stride1():
    def kernel(x_ref, w1_ref, wr_ref, h1_ref, r_ref, s1_ref, sr_ref):
        @pl.when(pl.program_id(1) == 0)
        def _():
            s1_ref[...] = jnp.zeros_like(s1_ref)
            sr_ref[...] = jnp.zeros_like(sr_ref)
        x = x_ref[0]                                                # (Cin_p, T) bf16
        h1 = jnp.dot(w1_ref[...], x, preferred_element_type=jnp.float32)
        h1_ref[0] = h1.astype(jnp.bfloat16)
        _acc_stats(s1_ref, h1)                                      # stats from f32
        r = jnp.dot(wr_ref[...], x, preferred_element_type=jnp.float32)
        r_ref[0] = r.astype(jnp.bfloat16)
        _acc_stats(sr_ref, r)
    return kernel


def _make_pass1_strided():
    def kernel(x_ref, xs_ref, w1_ref, wr_ref, h1_ref, r_ref, s1_ref, sr_ref):
        @pl.when(pl.program_id(1) == 0)
        def _():
            s1_ref[...] = jnp.zeros_like(s1_ref)
            sr_ref[...] = jnp.zeros_like(sr_ref)
        x = x_ref[0]                                                # (Cin_p, W) bf16
        h1 = jnp.dot(w1_ref[...], x, preferred_element_type=jnp.float32)
        h1_ref[0] = h1.astype(jnp.bfloat16)
        _acc_stats(s1_ref, h1)
        # residual input was pre-strided in the wrapper (only Lout lanes DMA'd)
        r = jnp.dot(wr_ref[...], xs_ref[0], preferred_element_type=jnp.float32)
        r_ref[0] = r.astype(jnp.bfloat16)
        _acc_stats(sr_ref, r)
    return kernel


# ----------------------------------------------------------------------------
# Pass 2: bn1 + relu -> conv2 (k=3, pad=1, stride) with halo'd L-tiles.
# ----------------------------------------------------------------------------
def _make_pass2(L, Lout, T_out, stride):
    W = stride * T_out                                              # input-tile width

    def kernel(h1_ref, hl_ref, hr_ref, w2_ref, a1_ref, h2_ref, s2_ref):
        l = pl.program_id(1)

        @pl.when(l == 0)
        def _():
            s2_ref[...] = jnp.zeros_like(s2_ref)

        scale = a1_ref[:, 0:1]
        bias = a1_ref[:, 1:2]
        col0 = l * W

        h1 = h1_ref[0].astype(jnp.float32)                          # (Cmed_p, W)
        act = jnp.maximum(h1 * scale + bias, 0.0)
        lane = lax.broadcasted_iota(jnp.int32, (1, W), 1)
        # Single mask: zero all columns beyond the real length L (this is also
        # the conv's zero padding and keeps padded-lane garbage out).
        act = jnp.where(col0 + lane < L, act, 0.0)

        # Halo columns (1 column from each neighbouring 128-lane block of h1).
        lcol = jnp.maximum(hl_ref[0][:, 127:128].astype(jnp.float32) * scale + bias, 0.0)
        rcol = jnp.maximum(hr_ref[0][:, 0:1].astype(jnp.float32) * scale + bias, 0.0)
        lcol = jnp.where(jnp.logical_and(l > 0, col0 - 1 < L), lcol, 0.0)
        rcol = jnp.where(col0 + W < L, rcol, 0.0)

        if stride == 1:
            # bf16 shifts: halves VPU copy traffic of the tap construction.
            act_b = act.astype(jnp.bfloat16)
            left = jnp.concatenate([lcol.astype(jnp.bfloat16), act_b[:, :W - 1]], axis=1)
            center = act_b
            right = jnp.concatenate([act_b[:, 1:], rcol.astype(jnp.bfloat16)], axis=1)
        else:
            left = jnp.concatenate([lcol, act[:, :W - 1]], axis=1)[:, ::stride]
            center = act[:, ::stride]
            right = jnp.concatenate([act[:, 1:], rcol], axis=1)[:, ::stride]
            left = left.astype(jnp.bfloat16)
            center = center.astype(jnp.bfloat16)
            right = right.astype(jnp.bfloat16)

        # Three f32-accumulated MXU dots: no (3*C, T) concat buffer.
        h2 = (jnp.dot(w2_ref[0], left, preferred_element_type=jnp.float32) +
              jnp.dot(w2_ref[1], center, preferred_element_type=jnp.float32) +
              jnp.dot(w2_ref[2], right, preferred_element_type=jnp.float32))

        lane_o = lax.broadcasted_iota(jnp.int32, (1, T_out), 1)
        h2 = jnp.where(l * T_out + lane_o < Lout, h2, 0.0)          # clean pads for stats
        h2_ref[0] = h2.astype(jnp.bfloat16)
        _acc_stats(s2_ref, h2)
    return kernel


# ----------------------------------------------------------------------------
# Pass 3: bn2 + relu (= x2 output) -> conv3 (k=1) + bn3 partial stats.
# ----------------------------------------------------------------------------
def _make_pass3(Lout, T_out):
    def kernel(h2_ref, w3_ref, a2_ref, x2_ref, h3_ref, s3_ref):
        l = pl.program_id(1)

        @pl.when(l == 0)
        def _():
            s3_ref[...] = jnp.zeros_like(s3_ref)

        scale = a2_ref[:, 0:1]
        bias = a2_ref[:, 1:2]
        h2 = h2_ref[0].astype(jnp.float32)                          # (Cmed_p, T)
        x2 = jnp.maximum(h2 * scale + bias, 0.0)
        lane = lax.broadcasted_iota(jnp.int32, (1, T_out), 1)
        x2 = jnp.where(l * T_out + lane < Lout, x2, 0.0)
        x2_ref[0] = x2                                              # f32 module output
        h3 = jnp.dot(w3_ref[...], x2.astype(jnp.bfloat16),
                     preferred_element_type=jnp.float32)
        h3_ref[0] = h3.astype(jnp.bfloat16)
        _acc_stats(s3_ref, h3)
    return kernel


# ----------------------------------------------------------------------------
# Pass 4: bn3 + residual_bn + add + relu.
# ----------------------------------------------------------------------------
def _pass4_kernel(h3_ref, r_ref, a34_ref, out_ref):
    s3 = a34_ref[:, 0:1]
    b3 = a34_ref[:, 1:2]
    sr = a34_ref[:, 2:3]
    br = a34_ref[:, 3:4]
    y = (h3_ref[0].astype(jnp.float32) * s3 + b3 +
         r_ref[0].astype(jnp.float32) * sr + br)
    out_ref[0] = jnp.maximum(y, 0.0)


# ----------------------------------------------------------------------------
# Parameter prep (one-time, outside the per-call jitted path).
# ----------------------------------------------------------------------------
def prepare_params(params):
    """Pad/cast weights & BN affines once.  Channel dims padded to multiples
    of 16 (bf16 sublane packing).  NOTE: gamma/beta are zero-padded so padded
    channels stay exactly zero through bn+relu; do not change to ones."""
    W1, W2, W3, Wr, bnm, bno = params
    Cmed, Cin = W1.shape
    Cout = W3.shape[0]
    Cin_p, Cmed_p, Cout_p = _rup(Cin, 16), _rup(Cmed, 16), _rup(Cout, 16)
    bf16 = jnp.bfloat16

    W1p = jnp.pad(W1, ((0, Cmed_p - Cmed), (0, Cin_p - Cin))).astype(bf16)
    W2p = jnp.pad(W2, ((0, 0), (0, Cmed_p - Cmed), (0, Cmed_p - Cmed))).astype(bf16)
    W3p = jnp.pad(W3, ((0, Cout_p - Cout), (0, Cmed_p - Cmed))).astype(bf16)
    Wrp = jnp.pad(Wr, ((0, Cout_p - Cout), (0, Cin_p - Cin))).astype(bf16)

    pc_m = (0, Cmed_p - Cmed)
    pc_o = (0, Cout_p - Cout)
    g1, b1 = jnp.pad(bnm[:, 0], pc_m), jnp.pad(bnm[:, 1], pc_m)
    g2, b2 = jnp.pad(bnm[:, 2], pc_m), jnp.pad(bnm[:, 3], pc_m)
    g3, b3 = jnp.pad(bno[:, 0], pc_o), jnp.pad(bno[:, 1], pc_o)
    gr, br = jnp.pad(bno[:, 2], pc_o), jnp.pad(bno[:, 3], pc_o)
    return (W1p, W2p, W3p, Wrp, g1, b1, g2, b2, g3, b3, gr, br)


# ----------------------------------------------------------------------------
# Wrapper
# ----------------------------------------------------------------------------
def _finalize_bn(stats, count, gamma, beta):
    """stats: (N, C, 128) per-batch partials; returns fused (scale, bias)."""
    total = jnp.sum(stats[:, :, 0], axis=0)
    totsq = jnp.sum(stats[:, :, 1], axis=0)
    mean = total / count
    # TODO(synk): single-pass E[x^2]-E[x]^2 (clamped); switch to Welford if
    #             activations ever have mean >> spread at large N*L.
    var = jnp.maximum(totsq / count - mean * mean, 0.0)
    scale = gamma * lax.rsqrt(var + EPS)
    bias = beta - mean * scale
    return scale, bias


@partial(jax.jit, static_argnames=("cmed", "cout", "stride", "tile_cap"))
def conv_block_forward(x, prepared, *, cmed, cout, stride=1, tile_cap=None):
    """x: (N, Cin, L) float32.  Returns (out, x2) like ConvBlock.forward with
    res_conv=True, x_t=None, return_x_2=True (training-mode BatchNorm)."""
    (W1p, W2p, W3p, Wrp, g1, b1, g2, b2, g3, b3, gr, br) = prepared
    N, Cin, L = x.shape
    Cmed_p, Cin_p = W1p.shape
    Cout_p = W3p.shape[0]
    Lout = (L - 1) // stride + 1

    # ---- L-tiling (generation-aware) ----------------------------------------
    Lout_p0 = _rup(Lout, 128)
    # rough per-output-column VMEM bytes of the heaviest step, double-buffered
    p1 = 2 * (Cin_p * stride + (Cin_p if stride > 1 else 0) + Cmed_p * stride + Cout_p)
    p2 = 2 * (Cmed_p * stride + Cmed_p)
    p3 = 2 * Cmed_p + 4 * Cmed_p + 2 * Cout_p
    p4 = 2 * Cout_p + 2 * Cout_p + 4 * Cout_p
    bytes_per_col = 2 * max(p1, p2, p3, p4)
    cap = max(128, (_TILE_BUDGET // max(bytes_per_col, 1)) // 128 * 128)
    if tile_cap is not None:
        cap = min(cap, max(128, (int(tile_cap) // 128) * 128))
    n_tiles = -(-Lout_p0 // cap)
    T = _rup(-(-Lout_p0 // n_tiles), 128)          # output-tile width (lanes)
    Lout_p = n_tiles * T
    W = stride * T                                  # input-tile width (lanes)
    Lp = stride * Lout_p

    f32, bf16 = jnp.float32, jnp.bfloat16

    # ---- pad & pack activations ---------------------------------------------
    xp = jnp.pad(x, ((0, 0), (0, Cin_p - Cin), (0, Lp - L))).astype(bf16)
    if stride > 1:
        xs = x[:, :, ::stride]
        xsp = jnp.pad(xs, ((0, 0), (0, Cin_p - Cin),
                           (0, Lout_p - Lout))).astype(bf16)

    cparams_red = pltpu.CompilerParams(
        dimension_semantics=("parallel", "arbitrary"),   # L axis carries stats accum
        vmem_limit_bytes=_VMEM_LIMIT)
    cparams_par = pltpu.CompilerParams(
        dimension_semantics=("parallel", "parallel"),
        vmem_limit_bytes=_VMEM_LIMIT)

    def tile_spec(c, w):
        return pl.BlockSpec((1, c, w), lambda n, l: (n, 0, l))

    def stat_spec(c):                                # VMEM-resident accumulator over l
        return pl.BlockSpec((1, c, 128), lambda n, l: (n, 0, 0))

    def const_spec(shape):                           # VMEM-resident operand
        nd = len(shape)
        return pl.BlockSpec(shape, lambda n, l: (0,) * nd)

    # ---- pass 1: conv1 + residual conv (+ bn1 / residual_bn partial stats) --
    if stride == 1:
        p1_in = [tile_spec(Cin_p, W), const_spec(W1p.shape), const_spec(Wrp.shape)]
        p1_args = (xp, W1p, Wrp)
        kern1 = _make_pass1_stride1()
    else:
        p1_in = [tile_spec(Cin_p, W), tile_spec(Cin_p, T),
                 const_spec(W1p.shape), const_spec(Wrp.shape)]
        p1_args = (xp, xsp, W1p, Wrp)
        kern1 = _make_pass1_strided()

    h1, r, s1, sr = pl.pallas_call(
        kern1,
        grid=(N, n_tiles),
        in_specs=p1_in,
        out_specs=(tile_spec(Cmed_p, W), tile_spec(Cout_p, T),
                   stat_spec(Cmed_p), stat_spec(Cout_p)),
        out_shape=(jax.ShapeDtypeStruct((N, Cmed_p, Lp), bf16),
                   jax.ShapeDtypeStruct((N, Cout_p, Lout_p), bf16),
                   jax.ShapeDtypeStruct((N, Cmed_p, 128), f32),
                   jax.ShapeDtypeStruct((N, Cout_p, 128), f32)),
        compiler_params=cparams_red,
    )(*p1_args)

    scale1, bias1 = _finalize_bn(s1, N * L, g1, b1)
    scaleR, biasR = _finalize_bn(sr, N * Lout, gr, br)
    a1 = jnp.stack([scale1, bias1], axis=1)                       # (Cmed_p, 2)

    # ---- pass 2: bn1 + relu -> conv2 (k=3, halo'd L-tiles, stride) ----------
    bpt = W // 128                                  # 128-lane blocks per input tile
    nblk = Lp // 128
    lhalo_spec = pl.BlockSpec(
        (1, Cmed_p, 128), lambda n, l: (n, 0, jnp.maximum(l * bpt - 1, 0)))
    rhalo_spec = pl.BlockSpec(
        (1, Cmed_p, 128), lambda n, l: (n, 0, jnp.minimum((l + 1) * bpt, nblk - 1)))

    h2, s2 = pl.pallas_call(
        _make_pass2(L, Lout, T, stride),
        grid=(N, n_tiles),
        in_specs=[tile_spec(Cmed_p, W), lhalo_spec, rhalo_spec,
                  const_spec(W2p.shape), const_spec((Cmed_p, 2))],
        out_specs=(tile_spec(Cmed_p, T), stat_spec(Cmed_p)),
        out_shape=(jax.ShapeDtypeStruct((N, Cmed_p, Lout_p), bf16),
                   jax.ShapeDtypeStruct((N, Cmed_p, 128), f32)),
        compiler_params=cparams_red,
    )(h1, h1, h1, W2p, a1)

    scale2, bias2 = _finalize_bn(s2, N * Lout, g2, b2)
    a2 = jnp.stack([scale2, bias2], axis=1)                       # (Cmed_p, 2)

    # ---- pass 3: bn2 + relu (= x2) -> conv3 ---------------------------------
    x2p, h3, s3 = pl.pallas_call(
        _make_pass3(Lout, T),
        grid=(N, n_tiles),
        in_specs=[tile_spec(Cmed_p, T), const_spec(W3p.shape),
                  const_spec((Cmed_p, 2))],
        out_specs=(tile_spec(Cmed_p, T), tile_spec(Cout_p, T), stat_spec(Cout_p)),
        out_shape=(jax.ShapeDtypeStruct((N, Cmed_p, Lout_p), f32),
                   jax.ShapeDtypeStruct((N, Cout_p, Lout_p), bf16),
                   jax.ShapeDtypeStruct((N, Cout_p, 128), f32)),
        compiler_params=cparams_red,
    )(h2, W3p, a2)

    scale3, bias3 = _finalize_bn(s3, N * Lout, g3, b3)
    a34 = jnp.stack([scale3, bias3, scaleR, biasR], axis=1)       # (Cout_p, 4)

    # ---- pass 4: bn3 + residual_bn + add + relu -----------------------------
    outp = pl.pallas_call(
        _pass4_kernel,
        grid=(N, n_tiles),
        in_specs=[tile_spec(Cout_p, T), tile_spec(Cout_p, T),
                  const_spec((Cout_p, 4))],
        out_specs=tile_spec(Cout_p, T),
        out_shape=jax.ShapeDtypeStruct((N, Cout_p, Lout_p), f32),
        compiler_params=cparams_par,
    )(h3, r, a34)

    out = outp[:, :cout, :Lout]
    x2 = x2p[:, :cmed, :Lout]
    return out, x2


# ----------------------------------------------------------------------------
# Pure-JAX reference (mirrors the PyTorch module, training-mode BN, f32).
# ----------------------------------------------------------------------------
def ref_forward(x, params, stride=1):
    W1, W2, W3, Wr, bnm, bno = params

    def conv1d(x, w, stride=1, padding=0):
        return lax.conv_general_dilated(
            x, w, (stride,), [(padding, padding)],
            dimension_numbers=("NCH", "OIH", "NCH"))

    def bn(x, g, b):
        mean = jnp.mean(x, axis=(0, 2), keepdims=True)
        var = jnp.mean((x - mean) ** 2, axis=(0, 2), keepdims=True)
        return (x - mean) / jnp.sqrt(var + EPS) * g[None, :, None] + b[None, :, None]

    relu = lambda v: jnp.maximum(v, 0.0)

    h = relu(bn(conv1d(x, W1[:, :, None]), bnm[:, 0], bnm[:, 1]))
    h2 = conv1d(h, jnp.transpose(W2, (1, 2, 0)), stride=stride, padding=1)
    x2 = relu(bn(h2, bnm[:, 2], bnm[:, 3]))
    h3 = bn(conv1d(x2, W3[:, :, None]), bno[:, 0], bno[:, 1])
    r = bn(conv1d(x, Wr[:, :, None], stride=stride), bno[:, 2], bno[:, 3])
    return relu(h3 + r), x2


# ----------------------------------------------------------------------------
def _make_params(key, inplanes, outplanes):
    med = outplanes // 2
    ks = jax.random.split(key, 13)

    def bf16_vals(k, shape, scale=1.0):
        v = jax.random.normal(k, shape, dtype=jnp.float32) * scale
        return v.astype(jnp.bfloat16).astype(jnp.float32)

    W1 = bf16_vals(ks[1], (med, inplanes), 0.2)
    W2 = bf16_vals(ks[2], (3, med, med), 0.2)          # (k, out, in)
    W3 = bf16_vals(ks[3], (outplanes, med), 0.2)
    Wr = bf16_vals(ks[4], (outplanes, inplanes), 0.2)

    bnm = jnp.stack([
        1.0 + 0.1 * jax.random.normal(ks[5], (med,)),          # bn1 gamma
        0.1 * jax.random.normal(ks[6], (med,)),                 # bn1 beta
        1.0 + 0.1 * jax.random.normal(ks[7], (med,)),           # bn2 gamma
        0.1 * jax.random.normal(ks[8], (med,)),                 # bn2 beta
    ], axis=1).astype(jnp.float32)
    bno = jnp.stack([
        1.0 + 0.1 * jax.random.normal(ks[9], (outplanes,)),     # bn3 gamma
        0.1 * jax.random.normal(ks[10], (outplanes,)),           # bn3 beta
        1.0 + 0.1 * jax.random.normal(ks[11], (outplanes,)),     # residual_bn gamma
        0.1 * jax.random.normal(ks[12], (outplanes,)),           # residual_bn beta
    ], axis=1).astype(jnp.float32)
    return (W1, W2, W3, Wr, bnm, bno)


if __name__ == "__main__":
    key = jax.random.PRNGKey(0)

    # (N, inplanes, outplanes, L, stride, tile_cap)
    cases = [
        (2, 8, 16, 16, 1, None),     # tiny, single L-tile (module-sized example)
        (2, 24, 40, 300, 1, 128),    # multi L-tile: exercises halos + channel padding
    ]

    for idx, (N, cin, cout_, L, stride, tile_cap) in enumerate(cases):
        k_case = jax.random.fold_in(key, idx)
        kx, kp = jax.random.split(k_case)
        med = cout_ // 2

        params = _make_params(kp, cin, cout_)
        # inputs pre-rounded to bf16 precision so the f32 reference and the
        # bf16-operand kernel consume identical values
        x = (jax.random.normal(kx, (N, cin, L), dtype=jnp.float32)
             .astype(jnp.bfloat16).astype(jnp.float32))

        prepared = prepare_params(params)
        out, x2 = conv_block_forward(x, prepared, cmed=med, cout=cout_,
                                     stride=stride, tile_cap=tile_cap)
        out = jax.block_until_ready(out)
        x2 = jax.block_until_ready(x2)

        out_ref, x2_ref = ref_forward(x, params, stride=stride)
        Lout = (L - 1) // stride + 1

        assert out.shape == (N, cout_, Lout) and x2.shape == (N, med, Lout)
        # Tolerance covers bf16 inter-pass intermediates + bf16 matmul operands.
        assert jnp.allclose(out, out_ref, atol=4e-2, rtol=4e-2), f"out mismatch (case {idx})"
        assert jnp.allclose(x2, x2_ref, atol=4e-2, rtol=4e-2), f"x2 mismatch (case {idx})"

    print("KERNEL_OK")
</pallas_src>

<mosaic_0001>
module attributes {stable_mosaic.version = 11 : i64} {
  func.func @kernel(%arg0: i32, %arg1: i32, %arg2: memref<1x16x128xbf16, #tpu.memory_space<vmem>>, %arg3: memref<16x16xbf16, #tpu.memory_space<vmem>>, %arg4: memref<16x16xbf16, #tpu.memory_space<vmem>>, %arg5: memref<1x16x128xbf16, #tpu.memory_space<vmem>>, %arg6: memref<1x16x128xbf16, #tpu.memory_space<vmem>>, %arg7: memref<1x16x128xf32, #tpu.memory_space<vmem>>, %arg8: memref<1x16x128xf32, #tpu.memory_space<vmem>>) attributes {dimension_semantics = [#tpu.dimension_semantics<parallel>, #tpu.dimension_semantics<arbitrary>], iteration_bounds = array<i64: 2, 1>, scalar_prefetch = 0 : i64, scratch_operands = 0 : i64, tpu.core_type = #tpu.core_type<tc>, window_params = [{transform_indices = @transform_0, window_bounds = array<i64: 1, 16, 128>}, {pipeline_mode = #tpu.pipeline_mode<synchronous>, transform_indices = @transform_1, window_bounds = array<i64: 16, 16>}, {pipeline_mode = #tpu.pipeline_mode<synchronous>, transform_indices = @transform_2, window_bounds = array<i64: 16, 16>}, {transform_indices = @transform_3, window_bounds = array<i64: 1, 16, 128>}, {transform_indices = @transform_4, window_bounds = array<i64: 1, 16, 128>}, {transform_indices = @transform_5, window_bounds = array<i64: 1, 16, 128>}, {transform_indices = @transform_6, window_bounds = array<i64: 1, 16, 128>}]} {
    %c0_i32 = arith.constant 0 : i32
    %0 = arith.cmpi eq, %arg1, %c0_i32 : i32
    %1 = arith.extui %0 : i1 to i32
    %c0_i32_0 = arith.constant 0 : i32
    %2 = arith.cmpi ne, %1, %c0_i32_0 : i32
    scf.if %2 {
      %cst_37 = arith.constant 0.000000e+00 : f32
      %67 = vector.broadcast %cst_37 : f32 to vector<1x16x128xf32>
      %c0_38 = arith.constant 0 : index
      %c0_39 = arith.constant 0 : index
      %c0_40 = arith.constant 0 : index
      %68 = vector.load %arg7[%c0_38, %c0_39, %c0_40] : memref<1x16x128xf32, #tpu.memory_space<vmem>>, vector<1x16x128xf32>
      tpu.vector_store %arg7[%c0_38, %c0_39, %c0_40], %67 {strides = array<i32>} : memref<1x16x128xf32, #tpu.memory_space<vmem>>, vector<1x16x128xf32>,
      %cst_41 = arith.constant 0.000000e+00 : f32
      %69 = vector.broadcast %cst_41 : f32 to vector<1x16x128xf32>
      %c0_42 = arith.constant 0 : index
      %c0_43 = arith.constant 0 : index
      %c0_44 = arith.constant 0 : index
      %70 = vector.load %arg8[%c0_42, %c0_43, %c0_44] : memref<1x16x128xf32, #tpu.memory_space<vmem>>, vector<1x16x128xf32>
      tpu.vector_store %arg8[%c0_42, %c0_43, %c0_44], %69 {strides = array<i32>} : memref<1x16x128xf32, #tpu.memory_space<vmem>>, vector<1x16x128xf32>,
    } else {
    }
    %c0 = arith.constant 0 : index
    %c0_1 = arith.constant 0 : index
    %c0_2 = arith.constant 0 : index
    %3 = vector.load %arg2[%c0, %c0_1, %c0_2] : memref<1x16x128xbf16, #tpu.memory_space<vmem>>, vector<1x16x128xbf16>
    %4 = vector.shape_cast %3 : vector<1x16x128xbf16> to vector<16x128xbf16>
    %c0_3 = arith.constant 0 : index
    %c0_4 = arith.constant 0 : index
    %5 = vector.load %arg3[%c0_3, %c0_4] : memref<16x16xbf16, #tpu.memory_space<vmem>>, vector<16x16xbf16>
    %cst = arith.constant dense<0.000000e+00> : vector<16x128xf32>
    %6 = tpu.matmul %5, %4, %cst {dimension_numbers = #tpu.dot_dimension_numbers<[1], [0], [0], [1], [0, 0, 1, 1], [], []>} : vector<16x16xbf16>, vector<16x128xbf16>, vector<16x128xf32> -> vector<16x128xf32>
    %7 = arith.truncf %6 : vector<16x128xf32> to vector<16x128xbf16>
    %c0_5 = arith.constant 0 : index
    %c0_6 = arith.constant 0 : index
    %c0_7 = arith.constant 0 : index
    %8 = vector.load %arg5[%c0_5, %c0_6, %c0_7] : memref<1x16x128xbf16, #tpu.memory_space<vmem>>, vector<1x16x128xbf16>
    %9 = vector.shape_cast %8 : vector<1x16x128xbf16> to vector<16x128xbf16>
    %10 = vector.shape_cast %7 : vector<16x128xbf16> to vector<1x16x128xbf16>
    tpu.vector_store %arg5[%c0_5, %c0_6, %c0_7], %10 {strides = array<i32>} : memref<1x16x128xbf16, #tpu.memory_space<vmem>>, vector<1x16x128xbf16>,
    %cst_8 = arith.constant dense<0.000000e+00> : vector<16xf32>
    %11 = vector.multi_reduction <add>, %6, %cst_8 [1] : vector<16x128xf32> to vector<16xf32>
    %12 = vector.shape_cast %11 : vector<16xf32> to vector<16x1xf32>
    %13 = arith.mulf %6, %6 : vector<16x128xf32>
    %cst_9 = arith.constant dense<0.000000e+00> : vector<16xf32>
    %14 = vector.multi_reduction <add>, %13, %cst_9 [1] : vector<16x128xf32> to vector<16xf32>
    %15 = vector.shape_cast %14 : vector<16xf32> to vector<16x1xf32>
    %16 = tpu.iota {dimensions = array<i32: 1>} : vector<16x128xi32>
    %c0_10 = arith.constant 0 : index
    %c0_11 = arith.constant 0 : index
    %c0_12 = arith.constant 0 : index
    %17 = vector.load %arg7[%c0_10, %c0_11, %c0_12] : memref<1x16x128xf32, #tpu.memory_space<vmem>>, vector<1x16x128xf32>
    %18 = vector.shape_cast %17 : vector<1x16x128xf32> to vector<16x128xf32>
    %c0_i32_13 = arith.constant 0 : i32
    %19 = vector.broadcast %c0_i32_13 : i32 to vector<16x128xi32>
    %20 = arith.cmpi eq, %16, %19 : vector<16x128xi32>
    %cst_14 = arith.constant 0.000000e+00 : f32
    %21 = vector.shape_cast %12 : vector<16x1xf32> to vector<16x1xf32>
    %22 = vector.broadcast %21 : vector<16x1xf32> to vector<16x128xf32>
    %23 = vector.broadcast %cst_14 : f32 to vector<16x128xf32>
    %24 = arith.select %20, %22, %23 : vector<16x128xi1>, vector<16x128xf32>
    %c1_i32 = arith.constant 1 : i32
    %25 = vector.broadcast %c1_i32 : i32 to vector<16x128xi32>
    %26 = arith.cmpi eq, %16, %25 : vector<16x128xi32>
    %cst_15 = arith.constant 0.000000e+00 : f32
    %27 = vector.shape_cast %15 : vector<16x1xf32> to vector<16x1xf32>
    %28 = vector.broadcast %27 : vector<16x1xf32> to vector<16x128xf32>
    %29 = vector.broadcast %cst_15 : f32 to vector<16x128xf32>
    %30 = arith.select %26, %28, %29 : vector<16x128xi1>, vector<16x128xf32>
    %31 = arith.addf %24, %30 : vector<16x128xf32>
    %32 = arith.addf %18, %31 : vector<16x128xf32>
    %c0_16 = arith.constant 0 : index
    %c0_17 = arith.constant 0 : index
    %c0_18 = arith.constant 0 : index
    %33 = vector.load %arg7[%c0_16, %c0_17, %c0_18] : memref<1x16x128xf32, #tpu.memory_space<vmem>>, vector<1x16x128xf32>
    %34 = vector.shape_cast %33 : vector<1x16x128xf32> to vector<16x128xf32>
    %35 = vector.shape_cast %32 : vector<16x128xf32> to vector<1x16x128xf32>
    tpu.vector_store %arg7[%c0_16, %c0_17, %c0_18], %35 {strides = array<i32>} : memref<1x16x128xf32, #tpu.memory_space<vmem>>, vector<1x16x128xf32>,
    %c0_19 = arith.constant 0 : index
    %c0_20 = arith.constant 0 : index
    %36 = vector.load %arg4[%c0_19, %c0_20] : memref<16x16xbf16, #tpu.memory_space<vmem>>, vector<16x16xbf16>
    %cst_21 = arith.constant dense<0.000000e+00> : vector<16x128xf32>
    %37 = tpu.matmul %36, %4, %cst_21 {dimension_numbers = #tpu.dot_dimension_numbers<[1], [0], [0], [1], [0, 0, 1, 1], [], []>} : vector<16x16xbf16>, vector<16x128xbf16>, vector<16x128xf32> -> vector<16x128xf32>
    %38 = arith.truncf %37 : vector<16x128xf32> to vector<16x128xbf16>
    %c0_22 = arith.constant 0 : index
    %c0_23 = arith.constant 0 : index
    %c0_24 = arith.constant 0 : index
    %39 = vector.load %arg6[%c0_22, %c0_23, %c0_24] : memref<1x16x128xbf16, #tpu.memory_space<vmem>>, vector<1x16x128xbf16>
    %40 = vector.shape_cast %39 : vector<1x16x128xbf16> to vector<16x128xbf16>
    %41 = vector.shape_cast %38 : vector<16x128xbf16> to vector<1x16x128xbf16>
    tpu.vector_store %arg6[%c0_22, %c0_23, %c0_24], %41 {strides = array<i32>} : memref<1x16x128xbf16, #tpu.memory_space<vmem>>, vector<1x16x128xbf16>,
    %cst_25 = arith.constant dense<0.000000e+00> : vector<16xf32>
    %42 = vector.multi_reduction <add>, %37, %cst_25 [1] : vector<16x128xf32> to vector<16xf32>
    %43 = vector.shape_cast %42 : vector<16xf32> to vector<16x1xf32>
    %44 = arith.mulf %37, %37 : vector<16x128xf32>
    %cst_26 = arith.constant dense<0.000000e+00> : vector<16xf32>
    %45 = vector.multi_reduction <add>, %44, %cst_26 [1] : vector<16x128xf32> to vector<16xf32>
    %46 = vector.shape_cast %45 : vector<16xf32> to vector<16x1xf32>
    %47 = tpu.iota {dimensions = array<i32: 1>} : vector<16x128xi32>
    %c0_27 = arith.constant 0 : index
    %c0_28 = arith.constant 0 : index
    %c0_29 = arith.constant 0 : index
    %48 = vector.load %arg8[%c0_27, %c0_28, %c0_29] : memref<1x16x128xf32, #tpu.memory_space<vmem>>, vector<1x16x128xf32>
    %49 = vector.shape_cast %48 : vector<1x16x128xf32> to vector<16x128xf32>
    %c0_i32_30 = arith.constant 0 : i32
    %50 = vector.broadcast %c0_i32_30 : i32 to vector<16x128xi32>
    %51 = arith.cmpi eq, %47, %50 : vector<16x128xi32>
    %cst_31 = arith.constant 0.000000e+00 : f32
    %52 = vector.shape_cast %43 : vector<16x1xf32> to vector<16x1xf32>
    %53 = vector.broadcast %52 : vector<16x1xf32> to vector<16x128xf32>
    %54 = vector.broadcast %cst_31 : f32 to vector<16x128xf32>
    %55 = arith.select %51, %53, %54 : vector<16x128xi1>, vector<16x128xf32>
    %c1_i32_32 = arith.constant 1 : i32
    %56 = vector.broadcast %c1_i32_32 : i32 to vector<16x128xi32>
    %57 = arith.cmpi eq, %47, %56 : vector<16x128xi32>
    %cst_33 = arith.constant 0.000000e+00 : f32
    %58 = vector.shape_cast %46 : vector<16x1xf32> to vector<16x1xf32>
    %59 = vector.broadcast %58 : vector<16x1xf32> to vector<16x128xf32>
    %60 = vector.broadcast %cst_33 : f32 to vector<16x128xf32>
    %61 = arith.select %57, %59, %60 : vector<16x128xi1>, vector<16x128xf32>
    %62 = arith.addf %55, %61 : vector<16x128xf32>
    %63 = arith.addf %49, %62 : vector<16x128xf32>
    %c0_34 = arith.constant 0 : index
    %c0_35 = arith.constant 0 : index
    %c0_36 = arith.constant 0 : index
    %64 = vector.load %arg8[%c0_34, %c0_35, %c0_36] : memref<1x16x128xf32, #tpu.memory_space<vmem>>, vector<1x16x128xf32>
    %65 = vector.shape_cast %64 : vector<1x16x128xf32> to vector<16x128xf32>
    %66 = vector.shape_cast %63 : vector<16x128xf32> to vector<1x16x128xf32>
    tpu.vector_store %arg8[%c0_34, %c0_35, %c0_36], %66 {strides = array<i32>} : memref<1x16x128xf32, #tpu.memory_space<vmem>>, vector<1x16x128xf32>,
    return
  }
  func.func @transform_0(%arg0: i32, %arg1: i32) -> (i32, i32, i32) {
    %c0_i32 = arith.constant 0 : i32
    %c0_i32_0 = arith.constant 0 : i32
    return %arg0, %c0_i32, %arg1 : i32, i32, i32
  }
  func.func @transform_1(%arg0: i32, %arg1: i32) -> (i32, i32) {
    %c0_i32 = arith.constant 0 : i32
    %c0_i32_0 = arith.constant 0 : i32
    %c0_i32_1 = arith.constant 0 : i32
    return %c0_i32, %c0_i32_0 : i32, i32
  }
  func.func @transform_2(%arg0: i32, %arg1: i32) -> (i32, i32) {
    %c0_i32 = arith.constant 0 : i32
    %c0_i32_0 = arith.constant 0 : i32
    %c0_i32_1 = arith.constant 0 : i32
    return %c0_i32, %c0_i32_0 : i32, i32
  }
  func.func @transform_3(%arg0: i32, %arg1: i32) -> (i32, i32, i32) {
    %c0_i32 = arith.constant 0 : i32
    %c0_i32_0 = arith.constant 0 : i32
    return %arg0, %c0_i32, %arg1 : i32, i32, i32
  }
  func.func @transform_4(%arg0: i32, %arg1: i32) -> (i32, i32, i32) {
    %c0_i32 = arith.constant 0 : i32
    %c0_i32_0 = arith.constant 0 : i32
    return %arg0, %c0_i32, %arg1 : i32, i32, i32
  }
  func.func @transform_5(%arg0: i32, %arg1: i32) -> (i32, i32, i32) {
    %c0_i32 = arith.constant 0 : i32
    %c0_i32_0 = arith.constant 0 : i32
    %c0_i32_1 = arith.constant 0 : i32
    return %arg0, %c0_i32, %c0_i32_0 : i32, i32, i32
  }
  func.func @transform_6(%arg0: i32, %arg1: i32) -> (i32, i32, i32) {
    %c0_i32 = arith.constant 0 : i32
    %c0_i32_0 = arith.constant 0 : i32
    %c0_i32_1 = arith.constant 0 : i32
    return %arg0, %c0_i32, %c0_i32_0 : i32, i32, i32
  }
}

module attributes {stable_mosaic.version = 11 : i64} {
  func.func @kernel(%arg0: i32, %arg1: i32, %arg2: memref<1x16x128xbf16, #tpu.memory_space<vmem>>, %arg3: memref<16x16xbf16, #tpu.memory_space<vmem>>, %arg4: memref<16x2xf32, #tpu.memory_space<vmem>>, %arg5: memref<1x16x128xf32, #tpu.memory_space<vmem>>, %arg6: memref<1x16x128xbf16, #tpu.memory_space<vmem>>, %arg7: memref<1x16x128xf32, #tpu.memory_space<vmem>>) attributes {dimension_semantics = [#tpu.dimension_semantics<parallel>, #tpu.dimension_semantics<arbitrary>], iteration_bounds = array<i64: 2, 1>, scalar_prefetch = 0 : i64, scratch_operands = 0 : i64, tpu.core_type = #tpu.core_type<tc>, window_params = [{transform_indices = @transform_0, window_bounds = array<i64: 1, 16, 128>}, {pipeline_mode = #tpu.pipeline_mode<synchronous>, transform_indices = @transform_1, window_bounds = array<i64: 16, 16>}, {pipeline_mode = #tpu.pipeline_mode<synchronous>, transform_indices = @transform_2, window_bounds = array<i64: 16, 2>}, {transform_indices = @transform_3, window_bounds = array<i64: 1, 16, 128>}, {transform_indices = @transform_4, window_bounds = array<i64: 1, 16, 128>}, {transform_indices = @transform_5, window_bounds = array<i64: 1, 16, 128>}]} {
    %c0_i32 = arith.constant 0 : i32
    %0 = arith.cmpi eq, %arg1, %c0_i32 : i32
    %1 = arith.extui %0 : i1 to i32
    %c0_i32_0 = arith.constant 0 : i32
    %2 = arith.cmpi ne, %1, %c0_i32_0 : i32
    scf.if %2 {
      %cst_27 = arith.constant 0.000000e+00 : f32
      %59 = vector.broadcast %cst_27 : f32 to vector<1x16x128xf32>
      %c0_28 = arith.constant 0 : index
      %c0_29 = arith.constant 0 : index
      %c0_30 = arith.constant 0 : index
      %60 = vector.load %arg7[%c0_28, %c0_29, %c0_30] : memref<1x16x128xf32, #tpu.memory_space<vmem>>, vector<1x16x128xf32>
      tpu.vector_store %arg7[%c0_28, %c0_29, %c0_30], %59 {strides = array<i32>} : memref<1x16x128xf32, #tpu.memory_space<vmem>>, vector<1x16x128xf32>,
    } else {
    }
    %c0 = arith.constant 0 : index
    %c0_1 = arith.constant 0 : index
    %3 = vector.load %arg4[%c0, %c0_1] : memref<16x2xf32, #tpu.memory_space<vmem>>, vector<16x1xf32>
    %c0_2 = arith.constant 0 : index
    %c1 = arith.constant 1 : index
    %4 = vector.load %arg4[%c0_2, %c1] : memref<16x2xf32, #tpu.memory_space<vmem>>, vector<16x1xf32>
    %c0_3 = arith.constant 0 : index
    %c0_4 = arith.constant 0 : index
    %c0_5 = arith.constant 0 : index
    %5 = vector.load %arg2[%c0_3, %c0_4, %c0_5] : memref<1x16x128xbf16, #tpu.memory_space<vmem>>, vector<1x16x128xbf16>
    %6 = vector.shape_cast %5 : vector<1x16x128xbf16> to vector<16x128xbf16>
    %7 = arith.extf %6 : vector<16x128xbf16> to vector<16x128xf32>
    %8 = vector.broadcast %3 : vector<16x1xf32> to vector<16x128xf32>
    %9 = arith.mulf %7, %8 : vector<16x128xf32>
    %10 = vector.broadcast %4 : vector<16x1xf32> to vector<16x128xf32>
    %11 = arith.addf %9, %10 : vector<16x128xf32>
    %cst = arith.constant 0.000000e+00 : f32
    %12 = vector.broadcast %cst : f32 to vector<16x128xf32>
    %13 = arith.maximumf %11, %12 : vector<16x128xf32>
    %14 = tpu.iota {dimensions = array<i32: 1>} : vector<1x128xi32>
    %c128_i32 = arith.constant 128 : i32
    %15 = arith.muli %arg1, %c128_i32 : i32
    %16 = vector.broadcast %15 : i32 to vector<1x128xi32>
    %17 = arith.addi %16, %14 : vector<1x128xi32>
    %c16_i32 = arith.constant 16 : i32
    %18 = vector.broadcast %c16_i32 : i32 to vector<1x128xi32>
    %19 = arith.cmpi slt, %17, %18 : vector<1x128xi32>
    %cst_6 = arith.constant 0.000000e+00 : f32
    %20 = vector.shape_cast %19 : vector<1x128xi1> to vector<1x128xi1>
    %21 = vector.broadcast %20 : vector<1x128xi1> to vector<16x128xi1>
    %22 = vector.broadcast %cst_6 : f32 to vector<16x128xf32>
    %23 = arith.select %21, %13, %22 : vector<16x128xi1>, vector<16x128xf32>
    %c0_7 = arith.constant 0 : index
    %c0_8 = arith.constant 0 : index
    %c0_9 = arith.constant 0 : index
    %24 = vector.load %arg5[%c0_7, %c0_8, %c0_9] : memref<1x16x128xf32, #tpu.memory_space<vmem>>, vector<1x16x128xf32>
    %25 = vector.shape_cast %24 : vector<1x16x128xf32> to vector<16x128xf32>
    %26 = vector.shape_cast %23 : vector<16x128xf32> to vector<1x16x128xf32>
    tpu.vector_store %arg5[%c0_7, %c0_8, %c0_9], %26 {strides = array<i32>} : memref<1x16x128xf32, #tpu.memory_space<vmem>>, vector<1x16x128xf32>,
    %c0_10 = arith.constant 0 : index
    %c0_11 = arith.constant 0 : index
    %27 = vector.load %arg3[%c0_10, %c0_11] : memref<16x16xbf16, #tpu.memory_space<vmem>>, vector<16x16xbf16>
    %28 = arith.truncf %23 : vector<16x128xf32> to vector<16x128xbf16>
    %cst_12 = arith.constant dense<0.000000e+00> : vector<16x128xf32>
    %29 = tpu.matmul %27, %28, %cst_12 {dimension_numbers = #tpu.dot_dimension_numbers<[1], [0], [0], [1], [0, 0, 1, 1], [], []>} : vector<16x16xbf16>, vector<16x128xbf16>, vector<16x128xf32> -> vector<16x128xf32>
    %30 = arith.truncf %29 : vector<16x128xf32> to vector<16x128xbf16>
    %c0_13 = arith.constant 0 : index
    %c0_14 = arith.constant 0 : index
    %c0_15 = arith.constant 0 : index
    %31 = vector.load %arg6[%c0_13, %c0_14, %c0_15] : memref<1x16x128xbf16, #tpu.memory_space<vmem>>, vector<1x16x128xbf16>
    %32 = vector.shape_cast %31 : vector<1x16x128xbf16> to vector<16x128xbf16>
    %33 = vector.shape_cast %30 : vector<16x128xbf16> to vector<1x16x128xbf16>
    tpu.vector_store %arg6[%c0_13, %c0_14, %c0_15], %33 {strides = array<i32>} : memref<1x16x128xbf16, #tpu.memory_space<vmem>>, vector<1x16x128xbf16>,
    %cst_16 = arith.constant dense<0.000000e+00> : vector<16xf32>
    %34 = vector.multi_reduction <add>, %29, %cst_16 [1] : vector<16x128xf32> to vector<16xf32>
    %35 = vector.shape_cast %34 : vector<16xf32> to vector<16x1xf32>
    %36 = arith.mulf %29, %29 : vector<16x128xf32>
    %cst_17 = arith.constant dense<0.000000e+00> : vector<16xf32>
    %37 = vector.multi_reduction <add>, %36, %cst_17 [1] : vector<16x128xf32> to vector<16xf32>
    %38 = vector.shape_cast %37 : vector<16xf32> to vector<16x1xf32>
    %39 = tpu.iota {dimensions = array<i32: 1>} : vector<16x128xi32>
    %c0_18 = arith.constant 0 : index
    %c0_19 = arith.constant 0 : index
    %c0_20 = arith.constant 0 : index
    %40 = vector.load %arg7[%c0_18, %c0_19, %c0_20] : memref<1x16x128xf32, #tpu.memory_space<vmem>>, vector<1x16x128xf32>
    %41 = vector.shape_cast %40 : vector<1x16x128xf32> to vector<16x128xf32>
    %c0_i32_21 = arith.constant 0 : i32
    %42 = vector.broadcast %c0_i32_21 : i32 to vector<16x128xi32>
    %43 = arith.cmpi eq, %39, %42 : vector<16x128xi32>
    %cst_22 = arith.constant 0.000000e+00 : f32
    %44 = vector.shape_cast %35 : vector<16x1xf32> to vector<16x1xf32>
    %45 = vector.broadcast %44 : vector<16x1xf32> to vector<16x128xf32>
    %46 = vector.broadcast %cst_22 : f32 to vector<16x128xf32>
    %47 = arith.select %43, %45, %46 : vector<16x128xi1>, vector<16x128xf32>
    %c1_i32 = arith.constant 1 : i32
    %48 = vector.broadcast %c1_i32 : i32 to vector<16x128xi32>
    %49 = arith.cmpi eq, %39, %48 : vector<16x128xi32>
    %cst_23 = arith.constant 0.000000e+00 : f32
    %50 = vector.shape_cast %38 : vector<16x1xf32> to vector<16x1xf32>
    %51 = vector.broadcast %50 : vector<16x1xf32> to vector<16x128xf32>
    %52 = vector.broadcast %cst_23 : f32 to vector<16x128xf32>
    %53 = arith.select %49, %51, %52 : vector<16x128xi1>, vector<16x128xf32>
    %54 = arith.addf %47, %53 : vector<16x128xf32>
    %55 = arith.addf %41, %54 : vector<16x128xf32>
    %c0_24 = arith.constant 0 : index
    %c0_25 = arith.constant 0 : index
    %c0_26 = arith.constant 0 : index
    %56 = vector.load %arg7[%c0_24, %c0_25, %c0_26] : memref<1x16x128xf32, #tpu.memory_space<vmem>>, vector<1x16x128xf32>
    %57 = vector.shape_cast %56 : vector<1x16x128xf32> to vector<16x128xf32>
    %58 = vector.shape_cast %55 : vector<16x128xf32> to vector<1x16x128xf32>
    tpu.vector_store %arg7[%c0_24, %c0_25, %c0_26], %58 {strides = array<i32>} : memref<1x16x128xf32, #tpu.memory_space<vmem>>, vector<1x16x128xf32>,
    return
  }
  func.func @transform_0(%arg0: i32, %arg1: i32) -> (i32, i32, i32) {
    %c0_i32 = arith.constant 0 : i32
    %c0_i32_0 = arith.constant 0 : i32
    return %arg0, %c0_i32, %arg1 : i32, i32, i32
  }
  func.func @transform_1(%arg0: i32, %arg1: i32) -> (i32, i32) {
    %c0_i32 = arith.constant 0 : i32
    %c0_i32_0 = arith.constant 0 : i32
    %c0_i32_1 = arith.constant 0 : i32
    return %c0_i32, %c0_i32_0 : i32, i32
  }
  func.func @transform_2(%arg0: i32, %arg1: i32) -> (i32, i32) {
    %c0_i32 = arith.constant 0 : i32
    %c0_i32_0 = arith.constant 0 : i32
    %c0_i32_1 = arith.constant 0 : i32
    return %c0_i32, %c0_i32_0 : i32, i32
  }
  func.func @transform_3(%arg0: i32, %arg1: i32) -> (i32, i32, i32) {
    %c0_i32 = arith.constant 0 : i32
    %c0_i32_0 = arith.constant 0 : i32
    return %arg0, %c0_i32, %arg1 : i32, i32, i32
  }
  func.func @transform_4(%arg0: i32, %arg1: i32) -> (i32, i32, i32) {
    %c0_i32 = arith.constant 0 : i32
    %c0_i32_0 = arith.constant 0 : i32
    return %arg0, %c0_i32, %arg1 : i32, i32, i32
  }
  func.func @transform_5(%arg0: i32, %arg1: i32) -> (i32, i32, i32) {
    %c0_i32 = arith.constant 0 : i32
    %c0_i32_0 = arith.constant 0 : i32
    %c0_i32_1 = arith.constant 0 : i32
    return %arg0, %c0_i32, %c0_i32_0 : i32, i32, i32
  }
}

module attributes {stable_mosaic.version = 11 : i64} {
  func.func @kernel(%arg0: i32, %arg1: i32, %arg2: memref<1x16x128xbf16, #tpu.memory_space<vmem>>, %arg3: memref<1x16x128xbf16, #tpu.memory_space<vmem>>, %arg4: memref<1x16x128xbf16, #tpu.memory_space<vmem>>, %arg5: memref<3x16x16xbf16, #tpu.memory_space<vmem>>, %arg6: memref<16x2xf32, #tpu.memory_space<vmem>>, %arg7: memref<1x16x128xbf16, #tpu.memory_space<vmem>>, %arg8: memref<1x16x128xf32, #tpu.memory_space<vmem>>) attributes {dimension_semantics = [#tpu.dimension_semantics<parallel>, #tpu.dimension_semantics<arbitrary>], iteration_bounds = array<i64: 2, 1>, scalar_prefetch = 0 : i64, scratch_operands = 0 : i64, tpu.core_type = #tpu.core_type<tc>, window_params = [{transform_indices = @transform_0, window_bounds = array<i64: 1, 16, 128>}, {transform_indices = @transform_1, window_bounds = array<i64: 1, 16, 128>}, {transform_indices = @transform_2, window_bounds = array<i64: 1, 16, 128>}, {pipeline_mode = #tpu.pipeline_mode<synchronous>, transform_indices = @transform_3, window_bounds = array<i64: 3, 16, 16>}, {pipeline_mode = #tpu.pipeline_mode<synchronous>, transform_indices = @transform_4, window_bounds = array<i64: 16, 2>}, {transform_indices = @transform_5, window_bounds = array<i64: 1, 16, 128>}, {transform_indices = @transform_6, window_bounds = array<i64: 1, 16, 128>}]} {
    %c0_i32 = arith.constant 0 : i32
    %0 = arith.cmpi eq, %arg1, %c0_i32 : i32
    %1 = arith.extui %0 : i1 to i32
    %c0_i32_0 = arith.constant 0 : i32
    %2 = arith.cmpi ne, %1, %c0_i32_0 : i32
    scf.if %2 {
      %cst_50 = arith.constant 0.000000e+00 : f32
      %107 = vector.broadcast %cst_50 : f32 to vector<1x16x128xf32>
      %c0_51 = arith.constant 0 : index
      %c0_52 = arith.constant 0 : index
      %c0_53 = arith.constant 0 : index
      %108 = vector.load %arg8[%c0_51, %c0_52, %c0_53] : memref<1x16x128xf32, #tpu.memory_space<vmem>>, vector<1x16x128xf32>
      tpu.vector_store %arg8[%c0_51, %c0_52, %c0_53], %107 {strides = array<i32>} : memref<1x16x128xf32, #tpu.memory_space<vmem>>, vector<1x16x128xf32>,
    } else {
    }
    %c0 = arith.constant 0 : index
    %c0_1 = arith.constant 0 : index
    %3 = vector.load %arg6[%c0, %c0_1] : memref<16x2xf32, #tpu.memory_space<vmem>>, vector<16x1xf32>
    %c0_2 = arith.constant 0 : index
    %c1 = arith.constant 1 : index
    %4 = vector.load %arg6[%c0_2, %c1] : memref<16x2xf32, #tpu.memory_space<vmem>>, vector<16x1xf32>
    %c128_i32 = arith.constant 128 : i32
    %5 = arith.muli %arg1, %c128_i32 : i32
    %c0_3 = arith.constant 0 : index
    %c0_4 = arith.constant 0 : index
    %c0_5 = arith.constant 0 : index
    %6 = vector.load %arg2[%c0_3, %c0_4, %c0_5] : memref<1x16x128xbf16, #tpu.memory_space<vmem>>, vector<1x16x128xbf16>
    %7 = vector.shape_cast %6 : vector<1x16x128xbf16> to vector<16x128xbf16>
    %8 = arith.extf %7 : vector<16x128xbf16> to vector<16x128xf32>
    %9 = vector.broadcast %3 : vector<16x1xf32> to vector<16x128xf32>
    %10 = arith.mulf %8, %9 : vector<16x128xf32>
    %11 = vector.broadcast %4 : vector<16x1xf32> to vector<16x128xf32>
    %12 = arith.addf %10, %11 : vector<16x128xf32>
    %cst = arith.constant 0.000000e+00 : f32
    %13 = vector.broadcast %cst : f32 to vector<16x128xf32>
    %14 = arith.maximumf %12, %13 : vector<16x128xf32>
    %15 = tpu.iota {dimensions = array<i32: 1>} : vector<1x128xi32>
    %16 = vector.broadcast %5 : i32 to vector<1x128xi32>
    %17 = arith.addi %16, %15 : vector<1x128xi32>
    %c16_i32 = arith.constant 16 : i32
    %18 = vector.broadcast %c16_i32 : i32 to vector<1x128xi32>
    %19 = arith.cmpi slt, %17, %18 : vector<1x128xi32>
    %cst_6 = arith.constant 0.000000e+00 : f32
    %20 = vector.shape_cast %19 : vector<1x128xi1> to vector<1x128xi1>
    %21 = vector.broadcast %20 : vector<1x128xi1> to vector<16x128xi1>
    %22 = vector.broadcast %cst_6 : f32 to vector<16x128xf32>
    %23 = arith.select %21, %14, %22 : vector<16x128xi1>, vector<16x128xf32>
    %c0_7 = arith.constant 0 : index
    %c0_8 = arith.constant 0 : index
    %c0_9 = arith.constant 0 : index
    %24 = vector.load %arg3[%c0_7, %c0_8, %c0_9] : memref<1x16x128xbf16, #tpu.memory_space<vmem>>, vector<1x16x128xbf16>
    %25 = vector.shape_cast %24 : vector<1x16x128xbf16> to vector<16x128xbf16>
    %26 = vector.extract_strided_slice %25 {offsets = [0, 127], sizes = [16, 1], strides = [1, 1]} : vector<16x128xbf16> to vector<16x1xbf16>
    %27 = arith.extf %26 : vector<16x1xbf16> to vector<16x1xf32>
    %28 = arith.mulf %27, %3 : vector<16x1xf32>
    %29 = arith.addf %28, %4 : vector<16x1xf32>
    %cst_10 = arith.constant 0.000000e+00 : f32
    %30 = vector.broadcast %cst_10 : f32 to vector<16x1xf32>
    %31 = arith.maximumf %29, %30 : vector<16x1xf32>
    %c0_11 = arith.constant 0 : index
    %c0_12 = arith.constant 0 : index
    %c0_13 = arith.constant 0 : index
    %32 = vector.load %arg4[%c0_11, %c0_12, %c0_13] : memref<1x16x128xbf16, #tpu.memory_space<vmem>>, vector<1x16x128xbf16>
    %33 = vector.shape_cast %32 : vector<1x16x128xbf16> to vector<16x128xbf16>
    %34 = vector.extract_strided_slice %33 {offsets = [0, 0], sizes = [16, 1], strides = [1, 1]} : vector<16x128xbf16> to vector<16x1xbf16>
    %35 = arith.extf %34 : vector<16x1xbf16> to vector<16x1xf32>
    %36 = arith.mulf %35, %3 : vector<16x1xf32>
    %37 = arith.addf %36, %4 : vector<16x1xf32>
    %cst_14 = arith.constant 0.000000e+00 : f32
    %38 = vector.broadcast %cst_14 : f32 to vector<16x1xf32>
    %39 = arith.maximumf %37, %38 : vector<16x1xf32>
    %c0_i32_15 = arith.constant 0 : i32
    %40 = arith.cmpi sgt, %arg1, %c0_i32_15 : i32
    %c1_i32 = arith.constant 1 : i32
    %41 = arith.subi %5, %c1_i32 : i32
    %c16_i32_16 = arith.constant 16 : i32
    %42 = arith.cmpi slt, %41, %c16_i32_16 : i32
    %43 = arith.andi %40, %42 : i1
    %cst_17 = arith.constant 0.000000e+00 : f32
    %44 = vector.broadcast %cst_17 : f32 to vector<16x1xf32>
    %45 = arith.select %43, %31, %44 : vector<16x1xf32>
    %c128_i32_18 = arith.constant 128 : i32
    %46 = arith.addi %5, %c128_i32_18 : i32
    %c16_i32_19 = arith.constant 16 : i32
    %47 = arith.cmpi slt, %46, %c16_i32_19 : i32
    %cst_20 = arith.constant 0.000000e+00 : f32
    %48 = vector.broadcast %cst_20 : f32 to vector<16x1xf32>
    %49 = arith.select %47, %39, %48 : vector<16x1xf32>
    %50 = arith.truncf %23 : vector<16x128xf32> to vector<16x128xbf16>
    %51 = arith.truncf %45 : vector<16x1xf32> to vector<16x1xbf16>
    %52 = vector.extract_strided_slice %50 {offsets = [0, 0], sizes = [16, 127], strides = [1, 1]} : vector<16x128xbf16> to vector<16x127xbf16>
    %53 = tpu.concatenate %51, %52 in 1 : vector<16x1xbf16>, vector<16x127xbf16> -> vector<16x128xbf16>
    %54 = vector.extract_strided_slice %50 {offsets = [0, 1], sizes = [16, 127], strides = [1, 1]} : vector<16x128xbf16> to vector<16x127xbf16>
    %55 = arith.truncf %49 : vector<16x1xf32> to vector<16x1xbf16>
    %56 = tpu.concatenate %54, %55 in 1 : vector<16x127xbf16>, vector<16x1xbf16> -> vector<16x128xbf16>
    %c0_21 = arith.constant 0 : index
    %c0_22 = arith.constant 0 : index
    %c0_23 = arith.constant 0 : index
    %57 = vector.load %arg5[%c0_21, %c0_22, %c0_23] : memref<3x16x16xbf16, #tpu.memory_space<vmem>>, vector<1x16x16xbf16>
    %58 = vector.shape_cast %57 : vector<1x16x16xbf16> to vector<16x16xbf16>
    %cst_24 = arith.constant dense<0.000000e+00> : vector<16x128xf32>
    %59 = tpu.matmul %58, %53, %cst_24 {dimension_numbers = #tpu.dot_dimension_numbers<[1], [0], [0], [1], [0, 0, 1, 1], [], []>} : vector<16x16xbf16>, vector<16x128xbf16>, vector<16x128xf32> -> vector<16x128xf32>
    %c1_25 = arith.constant 1 : index
    %c0_26 = arith.constant 0 : index
    %c0_27 = arith.constant 0 : index
    %60 = vector.load %arg5[%c1_25, %c0_26, %c0_27] : memref<3x16x16xbf16, #tpu.memory_space<vmem>>, vector<1x16x16xbf16>
    %61 = vector.shape_cast %60 : vector<1x16x16xbf16> to vector<16x16xbf16>
    %cst_28 = arith.constant dense<0.000000e+00> : vector<16x128xf32>
    %62 = tpu.matmul %61, %50, %cst_28 {dimension_numbers = #tpu.dot_dimension_numbers<[1], [0], [0], [1], [0, 0, 1, 1], [], []>} : vector<16x16xbf16>, vector<16x128xbf16>, vector<16x128xf32> -> vector<16x128xf32>
    %63 = arith.addf %59, %62 : vector<16x128xf32>
    %c2 = arith.constant 2 : index
    %c0_29 = arith.constant 0 : index
    %c0_30 = arith.constant 0 : index
    %64 = vector.load %arg5[%c2, %c0_29, %c0_30] : memref<3x16x16xbf16, #tpu.memory_space<vmem>>, vector<1x16x16xbf16>
    %65 = vector.shape_cast %64 : vector<1x16x16xbf16> to vector<16x16xbf16>
    %cst_31 = arith.constant dense<0.000000e+00> : vector<16x128xf32>
    %66 = tpu.matmul %65, %56, %cst_31 {dimension_numbers = #tpu.dot_dimension_numbers<[1], [0], [0], [1], [0, 0, 1, 1], [], []>} : vector<16x16xbf16>, vector<16x128xbf16>, vector<16x128xf32> -> vector<16x128xf32>
    %67 = arith.addf %63, %66 : vector<16x128xf32>
    %68 = tpu.iota {dimensions = array<i32: 1>} : vector<1x128xi32>
    %c128_i32_32 = arith.constant 128 : i32
    %69 = arith.muli %arg1, %c128_i32_32 : i32
    %70 = vector.broadcast %69 : i32 to vector<1x128xi32>
    %71 = arith.addi %70, %68 : vector<1x128xi32>
    %c16_i32_33 = arith.constant 16 : i32
    %72 = vector.broadcast %c16_i32_33 : i32 to vector<1x128xi32>
    %73 = arith.cmpi slt, %71, %72 : vector<1x128xi32>
    %cst_34 = arith.constant 0.000000e+00 : f32
    %74 = vector.shape_cast %73 : vector<1x128xi1> to vector<1x128xi1>
    %75 = vector.broadcast %74 : vector<1x128xi1> to vector<16x128xi1>
    %76 = vector.broadcast %cst_34 : f32 to vector<16x128xf32>
    %77 = arith.select %75, %67, %76 : vector<16x128xi1>, vector<16x128xf32>
    %78 = arith.truncf %77 : vector<16x128xf32> to vector<16x128xbf16>
    %c0_35 = arith.constant 0 : index
    %c0_36 = arith.constant 0 : index
    %c0_37 = arith.constant 0 : index
    %79 = vector.load %arg7[%c0_35, %c0_36, %c0_37] : memref<1x16x128xbf16, #tpu.memory_space<vmem>>, vector<1x16x128xbf16>
    %80 = vector.shape_cast %79 : vector<1x16x128xbf16> to vector<16x128xbf16>
    %81 = vector.shape_cast %78 : vector<16x128xbf16> to vector<1x16x128xbf16>
    tpu.vector_store %arg7[%c0_35, %c0_36, %c0_37], %81 {strides = array<i32>} : memref<1x16x128xbf16, #tpu.memory_space<vmem>>, vector<1x16x128xbf16>,
    %cst_38 = arith.constant dense<0.000000e+00> : vector<16xf32>
    %82 = vector.multi_reduction <add>, %77, %cst_38 [1] : vector<16x128xf32> to vector<16xf32>
    %83 = vector.shape_cast %82 : vector<16xf32> to vector<16x1xf32>
    %84 = arith.mulf %77, %77 : vector<16x128xf32>
    %cst_39 = arith.constant dense<0.000000e+00> : vector<16xf32>
    %85 = vector.multi_reduction <add>, %84, %cst_39 [1] : vector<16x128xf32> to vector<16xf32>
    %86 = vector.shape_cast %85 : vector<16xf32> to vector<16x1xf32>
    %87 = tpu.iota {dimensions = array<i32: 1>} : vector<16x128xi32>
    %c0_40 = arith.constant 0 : index
    %c0_41 = arith.constant 0 : index
    %c0_42 = arith.constant 0 : index
    %88 = vector.load %arg8[%c0_40, %c0_41, %c0_42] : memref<1x16x128xf32, #tpu.memory_space<vmem>>, vector<1x16x128xf32>
    %89 = vector.shape_cast %88 : vector<1x16x128xf32> to vector<16x128xf32>
    %c0_i32_43 = arith.constant 0 : i32
    %90 = vector.broadcast %c0_i32_43 : i32 to vector<16x128xi32>
    %91 = arith.cmpi eq, %87, %90 : vector<16x128xi32>
    %cst_44 = arith.constant 0.000000e+00 : f32
    %92 = vector.shape_cast %83 : vector<16x1xf32> to vector<16x1xf32>
    %93 = vector.broadcast %92 : vector<16x1xf32> to vector<16x128xf32>
    %94 = vector.broadcast %cst_44 : f32 to vector<16x128xf32>
    %95 = arith.select %91, %93, %94 : vector<16x128xi1>, vector<16x128xf32>
    %c1_i32_45 = arith.constant 1 : i32
    %96 = vector.broadcast %c1_i32_45 : i32 to vector<16x128xi32>
    %97 = arith.cmpi eq, %87, %96 : vector<16x128xi32>
    %cst_46 = arith.constant 0.000000e+00 : f32
    %98 = vector.shape_cast %86 : vector<16x1xf32> to vector<16x1xf32>
    %99 = vector.broadcast %98 : vector<16x1xf32> to vector<16x128xf32>
    %100 = vector.broadcast %cst_46 : f32 to vector<16x128xf32>
    %101 = arith.select %97, %99, %100 : vector<16x128xi1>, vector<16x128xf32>
    %102 = arith.addf %95, %101 : vector<16x128xf32>
    %103 = arith.addf %89, %102 : vector<16x128xf32>
    %c0_47 = arith.constant 0 : index
    %c0_48 = arith.constant 0 : index
    %c0_49 = arith.constant 0 : index
    %104 = vector.load %arg8[%c0_47, %c0_48, %c0_49] : memref<1x16x128xf32, #tpu.memory_space<vmem>>, vector<1x16x128xf32>
    %105 = vector.shape_cast %104 : vector<1x16x128xf32> to vector<16x128xf32>
    %106 = vector.shape_cast %103 : vector<16x128xf32> to vector<1x16x128xf32>
    tpu.vector_store %arg8[%c0_47, %c0_48, %c0_49], %106 {strides = array<i32>} : memref<1x16x128xf32, #tpu.memory_space<vmem>>, vector<1x16x128xf32>,
    return
  }
  func.func @transform_0(%arg0: i32, %arg1: i32) -> (i32, i32, i32) {
    %c0_i32 = arith.constant 0 : i32
    %c0_i32_0 = arith.constant 0 : i32
    return %arg0, %c0_i32, %arg1 : i32, i32, i32
  }
  func.func @transform_1(%arg0: i32, %arg1: i32) -> (i32, i32, i32) {
    %c1_i32 = arith.constant 1 : i32
    %0 = arith.muli %arg1, %c1_i32 : i32
    %c1_i32_0 = arith.constant 1 : i32
    %1 = arith.subi %0, %c1_i32_0 : i32
    %c0_i32 = arith.constant 0 : i32
    %2 = arith.maxsi %1, %c0_i32 : i32
    %c0_i32_1 = arith.constant 0 : i32
    %c0_i32_2 = arith.constant 0 : i32
    return %arg0, %c0_i32_1, %2 : i32, i32, i32
  }
  func.func @transform_2(%arg0: i32, %arg1: i32) -> (i32, i32, i32) {
    %c1_i32 = arith.constant 1 : i32
    %0 = arith.addi %arg1, %c1_i32 : i32
    %c1_i32_0 = arith.constant 1 : i32
    %1 = arith.muli %0, %c1_i32_0 : i32
    %c0_i32 = arith.constant 0 : i32
    %2 = arith.minsi %1, %c0_i32 : i32
    %c0_i32_1 = arith.constant 0 : i32
    %c0_i32_2 = arith.constant 0 : i32
    return %arg0, %c0_i32_1, %2 : i32, i32, i32
  }
  func.func @transform_3(%arg0: i32, %arg1: i32) -> (i32, i32, i32) {
    %c0_i32 = arith.constant 0 : i32
    %c0_i32_0 = arith.constant 0 : i32
    %c0_i32_1 = arith.constant 0 : i32
    %c0_i32_2 = arith.constant 0 : i32
    return %c0_i32, %c0_i32_0, %c0_i32_1 : i32, i32, i32
  }
  func.func @transform_4(%arg0: i32, %arg1: i32) -> (i32, i32) {
    %c0_i32 = arith.constant 0 : i32
    %c0_i32_0 = arith.constant 0 : i32
    %c0_i32_1 = arith.constant 0 : i32
    return %c0_i32, %c0_i32_0 : i32, i32
  }
  func.func @transform_5(%arg0: i32, %arg1: i32) -> (i32, i32, i32) {
    %c0_i32 = arith.constant 0 : i32
    %c0_i32_0 = arith.constant 0 : i32
    return %arg0, %c0_i32, %arg1 : i32, i32, i32
  }
  func.func @transform_6(%arg0: i32, %arg1: i32) -> (i32, i32, i32) {
    %c0_i32 = arith.constant 0 : i32
    %c0_i32_0 = arith.constant 0 : i32
    %c0_i32_1 = arith.constant 0 : i32
    return %arg0, %c0_i32, %c0_i32_0 : i32, i32, i32
  }
}

module attributes {stable_mosaic.version = 11 : i64} {
  func.func @_pass4_kernel(%arg0: i32, %arg1: i32, %arg2: memref<1x16x128xbf16, #tpu.memory_space<vmem>>, %arg3: memref<1x16x128xbf16, #tpu.memory_space<vmem>>, %arg4: memref<16x4xf32, #tpu.memory_space<vmem>>, %arg5: memref<1x16x128xf32, #tpu.memory_space<vmem>>) attributes {dimension_semantics = [#tpu.dimension_semantics<parallel>, #tpu.dimension_semantics<parallel>], iteration_bounds = array<i64: 2, 1>, scalar_prefetch = 0 : i64, scratch_operands = 0 : i64, tpu.core_type = #tpu.core_type<tc>, window_params = [{transform_indices = @transform_0, window_bounds = array<i64: 1, 16, 128>}, {transform_indices = @transform_1, window_bounds = array<i64: 1, 16, 128>}, {pipeline_mode = #tpu.pipeline_mode<synchronous>, transform_indices = @transform_2, window_bounds = array<i64: 16, 4>}, {transform_indices = @transform_3, window_bounds = array<i64: 1, 16, 128>}]} {
    %c0 = arith.constant 0 : index
    %c0_0 = arith.constant 0 : index
    %0 = vector.load %arg4[%c0, %c0_0] : memref<16x4xf32, #tpu.memory_space<vmem>>, vector<16x1xf32>
    %c0_1 = arith.constant 0 : index
    %c1 = arith.constant 1 : index
    %1 = vector.load %arg4[%c0_1, %c1] : memref<16x4xf32, #tpu.memory_space<vmem>>, vector<16x1xf32>
    %c0_2 = arith.constant 0 : index
    %c2 = arith.constant 2 : index
    %2 = vector.load %arg4[%c0_2, %c2] : memref<16x4xf32, #tpu.memory_space<vmem>>, vector<16x1xf32>
    %c0_3 = arith.constant 0 : index
    %c3 = arith.constant 3 : index
    %3 = vector.load %arg4[%c0_3, %c3] : memref<16x4xf32, #tpu.memory_space<vmem>>, vector<16x1xf32>
    %c0_4 = arith.constant 0 : index
    %c0_5 = arith.constant 0 : index
    %c0_6 = arith.constant 0 : index
    %4 = vector.load %arg2[%c0_4, %c0_5, %c0_6] : memref<1x16x128xbf16, #tpu.memory_space<vmem>>, vector<1x16x128xbf16>
    %5 = vector.shape_cast %4 : vector<1x16x128xbf16> to vector<16x128xbf16>
    %6 = arith.extf %5 : vector<16x128xbf16> to vector<16x128xf32>
    %7 = vector.broadcast %0 : vector<16x1xf32> to vector<16x128xf32>
    %8 = arith.mulf %6, %7 : vector<16x128xf32>
    %9 = vector.broadcast %1 : vector<16x1xf32> to vector<16x128xf32>
    %10 = arith.addf %8, %9 : vector<16x128xf32>
    %c0_7 = arith.constant 0 : index
    %c0_8 = arith.constant 0 : index
    %c0_9 = arith.constant 0 : index
    %11 = vector.load %arg3[%c0_7, %c0_8, %c0_9] : memref<1x16x128xbf16, #tpu.memory_space<vmem>>, vector<1x16x128xbf16>
    %12 = vector.shape_cast %11 : vector<1x16x128xbf16> to vector<16x128xbf16>
    %13 = arith.extf %12 : vector<16x128xbf16> to vector<16x128xf32>
    %14 = vector.broadcast %2 : vector<16x1xf32> to vector<16x128xf32>
    %15 = arith.mulf %13, %14 : vector<16x128xf32>
    %16 = arith.addf %10, %15 : vector<16x128xf32>
    %17 = vector.broadcast %3 : vector<16x1xf32> to vector<16x128xf32>
    %18 = arith.addf %16, %17 : vector<16x128xf32>
    %cst = arith.constant 0.000000e+00 : f32
    %19 = vector.broadcast %cst : f32 to vector<16x128xf32>
    %20 = arith.maximumf %18, %19 : vector<16x128xf32>
    %c0_10 = arith.constant 0 : index
    %c0_11 = arith.constant 0 : index
    %c0_12 = arith.constant 0 : index
    %21 = vector.load %arg5[%c0_10, %c0_11, %c0_12] : memref<1x16x128xf32, #tpu.memory_space<vmem>>, vector<1x16x128xf32>
    %22 = vector.shape_cast %21 : vector<1x16x128xf32> to vector<16x128xf32>
    %23 = vector.shape_cast %20 : vector<16x128xf32> to vector<1x16x128xf32>
    tpu.vector_store %arg5[%c0_10, %c0_11, %c0_12], %23 {strides = array<i32>} : memref<1x16x128xf32, #tpu.memory_space<vmem>>, vector<1x16x128xf32>,
    return
  }
  func.func @transform_0(%arg0: i32, %arg1: i32) -> (i32, i32, i32) {
    %c0_i32 = arith.constant 0 : i32
    %c0_i32_0 = arith.constant 0 : i32
    return %arg0, %c0_i32, %arg1 : i32, i32, i32
  }
  func.func @transform_1(%arg0: i32, %arg1: i32) -> (i32, i32, i32) {
    %c0_i32 = arith.constant 0 : i32
    %c0_i32_0 = arith.constant 0 : i32
    return %arg0, %c0_i32, %arg1 : i32, i32, i32
  }
  func.func @transform_2(%arg0: i32, %arg1: i32) -> (i32, i32) {
    %c0_i32 = arith.constant 0 : i32
    %c0_i32_0 = arith.constant 0 : i32
    %c0_i32_1 = arith.constant 0 : i32
    return %c0_i32, %c0_i32_0 : i32, i32
  }
  func.func @transform_3(%arg0: i32, %arg1: i32) -> (i32, i32, i32) {
    %c0_i32 = arith.constant 0 : i32
    %c0_i32_0 = arith.constant 0 : i32
    return %arg0, %c0_i32, %arg1 : i32, i32, i32
  }
}

</mosaic_0001>

<llo_original>
// kernel: conv_block_forward.4
$region0: #{conv_block_forward.4}
  #allocation0 [shape = 'u32[]', space=smem, size = 0x4, offset = 0x4, fixed_abs, tag = 'smem constant byte address 0x4 - core index']
  #allocation1 [shape = 'u32[144,128]{1,0:T(1,128)}', space=vmem, size = 0x12000, scoped, tag = 'internal scratch']
  %s0 = inlined_call_operand.vmem [shape: bf16[2,16,128], index: 0, kind: input, shape index: {}]
  %s1 = inlined_call_operand.vmem [shape: bf16[16,16], index: 1, kind: input, shape index: {}]
  %s2 = inlined_call_operand.vmem [shape: bf16[16,16], index: 2, kind: input, shape index: {}]
  %s3 = inlined_call_operand.vmem [shape: bf16[2,16,128], index: 3, kind: output, shape index: {0}]
  %s4 = inlined_call_operand.vmem [shape: bf16[2,16,128], index: 4, kind: output, shape index: {1}]
  %s5 = inlined_call_operand.vmem [shape: f32[2,16,128], index: 5, kind: output, shape index: {2}]
  %s6 = inlined_call_operand.vmem [shape: f32[2,16,128], index: 6, kind: output, shape index: {3}]
  %7 = xla_tuple %s3, %s4, %s5, %s6
  %s8 = sld [smem:[#allocation0]]
  $region73: #{conv_block_forward.4} parent=0
    _
  %s10 = ssub.s32 1, %s8
  %s11 = scalar_select 0, %s10, %s8
  loop: start=0, step=1, limit=4
  $region2: #{conv_block_forward.4} parent=0 // loop_pre_header
    _
  $region3: #{conv_block_forward.4} parent=0 // loop_header
    %s13 = sphi 0, %s17
    %p14 = scmp.ge.s32.totalorder %s13, 4
    %s20 = sphi 0, %s32
    %s21 = sphi 0, %s28
    %s22 = sphi 0, %s20
    %s23 = sphi 0, %s21
    %s24 = sphi 0, %s22
    %s25 = sphi 0, %s23
    %s37 = sphi 0, %s39
    %s40 = sphi 0, %s37
    %s41 = sphi 0, %s40
    %s57 = sphi 0, %s41
    %s61 = sphi 0, %s61
    %s63 = sphi 0, %s61
    %s64 = sphi 0, %s63
    %s78 = sphi 0, %s64
    %s82 = sphi 0, %s82
    %s84 = sphi 0, %s82
    %s85 = sphi 0, %s84
    %s99 = sphi 0, %s85
    %s107 = sphi 0, %s109
    %s110 = sphi 0, %s107
    %s111 = sphi 0, %s110
    %s127 = sphi 0, %s111
    %s135 = sphi 0, %s137
    %s138 = sphi 0, %s135
    %s139 = sphi 0, %s138
    %s155 = sphi 0, %s139
    %s161 = sphi 0, %s163
    %s164 = sphi 0, %s161
    %s165 = sphi 0, %s164
    %s181 = sphi 0, %s165
    %s187 = sphi 0, %s189
    %s190 = sphi 0, %s187
    %s191 = sphi 0, %s190
    %s207 = sphi 0, %s191
  $region4: #{conv_block_forward.4} parent=0 // loop_header_branch
    %16 = sbr.rel (%p14) target = $region8
  $region5: #{conv_block_forward.4} parent=0 // loop_body
    %s18 = ssub.s32 %s13, 1
    %s19 = ssub.s32 %s13, 2
    %s26 = sadd.s32 1, %s21
    %p27 = scmp.ge.s32.totalorder %s26, 1
    %s28 = scalar_select %p27, 0, %s26
    %s29 = sadd.s32 1, %s20
    %s30 = scalar_select %p27, %s29, %s20
    %p31 = scmp.ge.s32.totalorder %s30, 2
    %s32 = scalar_select %p31, 0, %s30
    %s33 = ssub.s32 %s20, %s32
    %s34 = ssub.s32 %s21, %s28
    %s35 = sor.u32 %s33, %s34
    %p36 = scmp.eq.s32.totalorder %s35, 0
    %s38 = sadd.s32 %s37, 1
    %s39 = scalar_select %p36, %s37, %s38
    %p42 = pneg %p36
    %p43 = scmp.eq.s32.totalorder %s13, 1
    %p44 = por %p42, %p43
    %p45 = scmp.ne.s32.totalorder %s37, %s40
    %p46 = scmp.eq.s32.totalorder %s13, 0
    %p47 = por %p45, %p46
    %p48 = scmp.ne.s32.totalorder %s37, %s40
    %p49 = scmp.eq.s32.totalorder %s18, 1
    %p50 = por %p48, %p49
    %p51 = scmp.ne.s32.totalorder %s40, %s41
    %p52 = scmp.eq.s32.totalorder %s18, 0
    %p53 = por %p51, %p52
    %p54 = scmp.ne.s32.totalorder %s40, %s41
    %p55 = scmp.eq.s32.totalorder %s19, 1
    %p56 = por %p54, %p55
    %p58 = scmp.ne.s32.totalorder %s41, %s57
    %p59 = scmp.eq.s32.totalorder %s19, 0
    %p60 = por %p58, %p59
    %s62 = sadd.s32 %s61, 1
    %p65 = scmp.eq.s32.totalorder %s13, 1
    %p66 = scmp.ne.s32.totalorder %s61, %s63
    %p67 = scmp.eq.s32.totalorder %s13, 0
    %p68 = por %p66, %p67
    %p69 = scmp.ne.s32.totalorder %s61, %s63
    %p70 = scmp.eq.s32.totalorder %s18, 1
    %p71 = por %p69, %p70
    %p72 = scmp.ne.s32.totalorder %s63, %s64
    %p73 = scmp.eq.s32.totalorder %s18, 0
    %p74 = por %p72, %p73
    %p75 = scmp.ne.s32.totalorder %s63, %s64
    %p76 = scmp.eq.s32.totalorder %s19, 1
    %p77 = por %p75, %p76
    %p79 = scmp.ne.s32.totalorder %s64, %s78
    %p80 = scmp.eq.s32.totalorder %s19, 0
    %p81 = por %p79, %p80
    %s83 = sadd.s32 %s82, 1
    %p86 = scmp.eq.s32.totalorder %s13, 1
    %p87 = scmp.ne.s32.totalorder %s82, %s84
    %p88 = scmp.eq.s32.totalorder %s13, 0
    %p89 = por %p87, %p88
    %p90 = scmp.ne.s32.totalorder %s82, %s84
    %p91 = scmp.eq.s32.totalorder %s18, 1
    %p92 = por %p90, %p91
    %p93 = scmp.ne.s32.totalorder %s84, %s85
    %p94 = scmp.eq.s32.totalorder %s18, 0
    %p95 = por %p93, %p94
    %p96 = scmp.ne.s32.totalorder %s84, %s85
    %p97 = scmp.eq.s32.totalorder %s19, 1
    %p98 = por %p96, %p97
    %p100 = scmp.ne.s32.totalorder %s85, %s99
    %p101 = scmp.eq.s32.totalorder %s19, 0
    %p102 = por %p100, %p101
    %s103 = ssub.s32 %s20, %s32
    %s104 = ssub.s32 %s21, %s28
    %s105 = sor.u32 %s103, %s104
    %p106 = scmp.eq.s32.totalorder %s105, 0
    %s108 = sadd.s32 %s107, 1
    %s109 = scalar_select %p106, %s107, %s108
    %p112 = pneg %p106
    %p113 = scmp.eq.s32.totalorder %s13, 1
    %p114 = por %p112, %p113
    %p115 = scmp.ne.s32.totalorder %s107, %s110
    %p116 = scmp.eq.s32.totalorder %s13, 0
    %p117 = por %p115, %p116
    %p118 = scmp.ne.s32.totalorder %s107, %s110
    %p119 = scmp.eq.s32.totalorder %s18, 1
    %p120 = por %p118, %p119
    %p121 = scmp.ne.s32.totalorder %s110, %s111
    %p122 = scmp.eq.s32.totalorder %s18, 0
    %p123 = por %p121, %p122
    %p124 = scmp.ne.s32.totalorder %s110, %s111
    %p125 = scmp.eq.s32.totalorder %s19, 1
    %p126 = por %p124, %p125
    %p128 = scmp.ne.s32.totalorder %s111, %s127
    %p129 = scmp.eq.s32.totalorder %s19, 0
    %p130 = por %p128, %p129
    %s131 = ssub.s32 %s20, %s32
    %s132 = ssub.s32 %s21, %s28
    %s133 = sor.u32 %s131, %s132
    %p134 = scmp.eq.s32.totalorder %s133, 0
    %s136 = sadd.s32 %s135, 1
    %s137 = scalar_select %p134, %s135, %s136
    %p140 = pneg %p134
    %p141 = scmp.eq.s32.totalorder %s13, 1
    %p142 = por %p140, %p141
    %p143 = scmp.ne.s32.totalorder %s135, %s138
    %p144 = scmp.eq.s32.totalorder %s13, 0
    %p145 = por %p143, %p144
    %p146 = scmp.ne.s32.totalorder %s135, %s138
    %p147 = scmp.eq.s32.totalorder %s18, 1
    %p148 = por %p146, %p147
    %p149 = scmp.ne.s32.totalorder %s138, %s139
    %p150 = scmp.eq.s32.totalorder %s18, 0
    %p151 = por %p149, %p150
    %p152 = scmp.ne.s32.totalorder %s138, %s139
    %p153 = scmp.eq.s32.totalorder %s19, 1
    %p154 = por %p152, %p153
    %p156 = scmp.ne.s32.totalorder %s139, %s155
    %p157 = scmp.eq.s32.totalorder %s19, 0
    %p158 = por %p156, %p157
    %s159 = ssub.s32 %s20, %s32
    %p160 = scmp.eq.s32.totalorder %s159, 0
    %s162 = sadd.s32 %s161, 1
    %s163 = scalar_select %p160, %s161, %s162
    %p166 = pneg %p160
    %p167 = scmp.eq.s32.totalorder %s13, 1
    %p168 = por %p166, %p167
    %p169 = scmp.ne.s32.totalorder %s161, %s164
    %p170 = scmp.eq.s32.totalorder %s13, 0
    %p171 = por %p169, %p170
    %p172 = scmp.ne.s32.totalorder %s161, %s164
    %p173 = scmp.eq.s32.totalorder %s18, 1
    %p174 = por %p172, %p173
    %p175 = scmp.ne.s32.totalorder %s164, %s165
    %p176 = scmp.eq.s32.totalorder %s18, 0
    %p177 = por %p175, %p176
    %p178 = scmp.ne.s32.totalorder %s164, %s165
    %p179 = scmp.eq.s32.totalorder %s19, 1
    %p180 = por %p178, %p179
    %p182 = scmp.ne.s32.totalorder %s165, %s181
    %p183 = scmp.eq.s32.totalorder %s19, 0
    %p184 = por %p182, %p183
    %s185 = ssub.s32 %s20, %s32
    %p186 = scmp.eq.s32.totalorder %s185, 0
    %s188 = sadd.s32 %s187, 1
    %s189 = scalar_select %p186, %s187, %s188
    %p192 = pneg %p186
    %p193 = scmp.eq.s32.totalorder %s13, 1
    %p194 = por %p192, %p193
    %p195 = scmp.ne.s32.totalorder %s187, %s190
    %p196 = scmp.eq.s32.totalorder %s13, 0
    %p197 = por %p195, %p196
    %p198 = scmp.ne.s32.totalorder %s187, %s190
    %p199 = scmp.eq.s32.totalorder %s18, 1
    %p200 = por %p198, %p199
    %p201 = scmp.ne.s32.totalorder %s190, %s191
    %p202 = scmp.eq.s32.totalorder %s18, 0
    %p203 = por %p201, %p202
    %p204 = scmp.ne.s32.totalorder %s190, %s191
    %p205 = scmp.eq.s32.totalorder %s19, 1
    %p206 = por %p204, %p205
    %p208 = scmp.ne.s32.totalorder %s191, %s207
    %p209 = scmp.eq.s32.totalorder %s19, 0
    %p210 = por %p208, %p209
    %p211 = scmp.le.s32.totalorder 1, %s13
    %p212 = scmp.lt.s32.totalorder %s13, 3
    %p213 = pnand %p211, %p212
    %p214 = pneg %p213
    // Predicated region
    $region9: #{conv_block_forward.4} parent=5 // pred_check
      _
    $region10: #{conv_block_forward.4} parent=5 // pred_check_branch
      %216 = sbr.rel (%p213) target = $region12
    $region11: #{conv_block_forward.4} parent=5 // pred_region
      %s217 = ssub.s32 %s13, 1
      // Predicated region
      $region13: #{conv_block_forward.4} parent=11 // pred_check
        %p218 = pneg %p74
      $region14: #{conv_block_forward.4} parent=11 // pred_check_branch
        %220 = sbr.rel (%p218) target = $region16
      $region15: #{conv_block_forward.4} parent=11 // pred_region
        _
      $region16: #{conv_block_forward.4} parent=11 // pred_fallthru
        _
      // Predicated region
      $region17: #{conv_block_forward.4} parent=11 // pred_check
        %p221 = pneg %p95
      $region18: #{conv_block_forward.4} parent=11 // pred_check_branch
        %223 = sbr.rel (%p221) target = $region20
      $region19: #{conv_block_forward.4} parent=11 // pred_region
        _
      $region20: #{conv_block_forward.4} parent=11 // pred_fallthru
        _
    $region12: #{conv_block_forward.4} parent=5 // pred_fallthru
      _
    %p224 = scmp.lt.s32.totalorder %s13, 2
    // Predicated region
    $region21: #{conv_block_forward.4} parent=5 // pred_check
      %p225 = pneg %p224
    $region22: #{conv_block_forward.4} parent=5 // pred_check_branch
      %227 = sbr.rel (%p225) target = $region24
    $region23: #{conv_block_forward.4} parent=5 // pred_region
      // Predicated region
      $region25: #{conv_block_forward.4} parent=23 // pred_check
        %p228 = pneg %p47
      $region26: #{conv_block_forward.4} parent=23 // pred_check_branch
        %230 = sbr.rel (%p228) target = $region28
      $region27: #{conv_block_forward.4} parent=23 // pred_region
        %p231 = scmp.lt.s32.totalorder %s20, 1
        %s232 = scalar_select %p231, %s20, 1
        %p233 = scmp.lt.s32.totalorder %s21, 0
        %s234 = scalar_select %p233, %s21, 0
        %s235 = smul.addr %s232, 2
        %s236 = sadd.s32 %s234, %s235
        %s237 = smul.addr %s236, 4
        %s238 = scalar_lea.vmem %s0, %s237
      $region28: #{conv_block_forward.4} parent=23 // pred_fallthru
        _
    $region24: #{conv_block_forward.4} parent=5 // pred_fallthru
      _
    %p239 = scmp.le.s32.totalorder 1, %s13
    %p240 = scmp.lt.s32.totalorder %s13, 3
    %p241 = pnand %p239, %p240
    %p242 = pneg %p241
    // Predicated region
    $region29: #{conv_block_forward.4} parent=5 // pred_check
      _
    $region30: #{conv_block_forward.4} parent=5 // pred_check_branch
      %244 = sbr.rel (%p241) target = $region32
    $region31: #{conv_block_forward.4} parent=5 // pred_region
      %s245 = ssub.s32 %s13, 1
      %p246 = scmp.lt.s32.totalorder %s22, 1
      %s247 = scalar_select %p246, %s22, 1
      %p248 = scmp.lt.s32.totalorder %s23, 0
      %s249 = scalar_select %p248, %s23, 0
      %s250 = smul.addr %s247, 2
      %s251 = sadd.s32 %s249, %s250
      %s252 = smul.addr %s251, 4
      %s253 = scalar_lea.vmem %s0, %s252
      %p254 = pneg %p53
      %p255 = pneg %p50
      %p256 = pneg %p74
      %p257 = pneg %p71
      %p258 = pneg %p95
      %p259 = pneg %p92
      %p260 = pneg %p123
      %p261 = pneg %p120
      %p262 = scmp.lt.s32.totalorder %s22, 1
      %s263 = scalar_select %p262, %s22, 1
      %p264 = scmp.lt.s32.totalorder %s23, 0
      %s265 = scalar_select %p264, %s23, 0
      %s266 = smul.addr %s263, 2
      %s267 = sadd.s32 %s265, %s266
      %s268 = smul.addr %s267, 4
      %s269 = scalar_lea.vmem %s3, %s268
      %p270 = pneg %p151
      %p271 = pneg %p148
      %p272 = scmp.lt.s32.totalorder %s22, 1
      %s273 = scalar_select %p272, %s22, 1
      %p274 = scmp.lt.s32.totalorder %s23, 0
      %s275 = scalar_select %p274, %s23, 0
      %s276 = smul.addr %s273, 2
      %s277 = sadd.s32 %s275, %s276
      %s278 = smul.addr %s277, 4
      %s279 = scalar_lea.vmem %s4, %s278
      %p280 = pneg %p177
      %p281 = pneg %p174
      %p282 = scmp.lt.s32.totalorder %s22, 1
      %s283 = scalar_select %p282, %s22, 1
      %s284 = smul.addr %s283, 2
      %s285 = smul.addr %s284, 8
      %s286 = scalar_lea.vmem %s5, %s285
      %p287 = pneg %p203
      %p288 = pneg %p200
      %p289 = scmp.lt.s32.totalorder %s22, 1
      %s290 = scalar_select %p289, %s22, 1
      %s291 = smul.addr %s290, 2
      %s292 = smul.addr %s291, 8
      %s293 = scalar_lea.vmem %s6, %s292
      %p294 = scmp.lt.s32.totalorder %s22, 1
      %s295 = scalar_select %p294, %s22, 1
      %p296 = scmp.lt.s32.totalorder %s23, 0
      %s297 = scalar_select %p296, %s23, 0
      %s298 = smul.addr %s295, 2
      %s299 = sadd.s32 %s297, %s298
      %s300 = smul.addr %s299, 4
      %s301 = scalar_lea.vmem %s0, %s300
      %p302 = scmp.lt.s32.totalorder %s22, 1
      %s303 = scalar_select %p302, %s22, 1
      %p304 = scmp.lt.s32.totalorder %s23, 0
      %s305 = scalar_select %p304, %s23, 0
      %s306 = smul.addr %s303, 2
      %s307 = sadd.s32 %s305, %s306
      %s308 = smul.addr %s307, 4
      %s309 = scalar_lea.vmem %s3, %s308
      %p310 = scmp.lt.s32.totalorder %s22, 1
      %s311 = scalar_select %p310, %s22, 1
      %p312 = scmp.lt.s32.totalorder %s23, 0
      %s313 = scalar_select %p312, %s23, 0
      %s314 = smul.addr %s311, 2
      %s315 = sadd.s32 %s313, %s314
      %s316 = smul.addr %s315, 4
      %s317 = scalar_lea.vmem %s4, %s316
      %p318 = scmp.lt.s32.totalorder %s22, 1
      %s319 = scalar_select %p318, %s22, 1
      %s320 = smul.addr %s319, 2
      %s321 = smul.addr %s320, 8
      %s322 = scalar_lea.vmem %s5, %s321
      %p323 = scmp.lt.s32.totalorder %s22, 1
      %s324 = scalar_select %p323, %s22, 1
      %s325 = smul.addr %s324, 2
      %s326 = smul.addr %s325, 8
      %s327 = scalar_lea.vmem %s6, %s326
      %p329 = scmp.eq.s32.totalorder %s23, 0
      // Predicated region
      $region33: #{conv_block_forward.4} parent=31 // pred_check
        %p330 = pneg %p329
      $region34: #{conv_block_forward.4} parent=31 // pred_check_branch
        %332 = sbr.rel (%p330) target = $region36
      $region35: #{conv_block_forward.4} parent=31 // pred_region
        %333 = vst [vmem:[%s322] sm:$0xff] 0.0
        %334 = vst [vmem:[%s322 + $0x8] sm:$0xff] 0.0
        %335 = vst [vmem:[%s327] sm:$0xff] 0.0
        %336 = vst [vmem:[%s327 + $0x8] sm:$0xff] 0.0
      $region36: #{conv_block_forward.4} parent=31 // pred_fallthru
        _
      %v337 = vld [vmem:[%s301] sm:$0xf]
      %v338 = vld [vmem:[%s301 + $0x4] sm:$0xf]
      %v339 = vld [vmem:[%s1] sm:$0xf]
      %v340 = vld [vmem:[%s1 + $0x4] sm:$0xf]
      %v343 = vunpack.c.l.b16 %v339
      %v344 = vunpack.c.l.b16 %v340
      %v345 = vpack.c.b16 %v344, %v343
      %v348 = vunpack.c.l.b16 %v337
      %v349 = vunpack.c.l.b16 %v338
      %v350 = vpack.c.b16 %v349, %v348
      %vm352 = vcmask 130048
      %v354 = vsel %vm352, %v345, 0
      %356 = vmatprep.subr.bf16.mxu0 0
      %357 = vmatpush1.bf16.msra.mxu0 %v350
      %358 = vmatprep.subr.bf16.mxu0 0
      %359 = vmatpush1.bf16.msra.mxu0 0
      %360 = vmatprep.subr.bf16.mxu0 0
      %361 = vmatpush1.bf16.msra.mxu0 0
      %362 = vmatprep.subr.bf16.mxu0 0
      %363 = vmatpush1.bf16.msra.mxu0 0
      %364 = vmatprep.subr.bf16.mxu0 0
      %365 = vmatpush1.bf16.msra.mxu0 0
      %366 = vmatprep.subr.bf16.mxu0 0
      %367 = vmatpush1.bf16.msra.mxu0 0
      %368 = vmatprep.subr.bf16.mxu0 0
      %369 = vmatpush1.bf16.msra.mxu0 0
      %370 = vmatprep.subr.bf16.mxu0 0
      %371 = vmatpush1.bf16.msra.mxu0 0
      %372 = vmatprep.subr.bf16.mxu0 0
      %373 = vmatpush1.bf16.msra.mxu0 0
      %374 = vmatprep.subr.bf16.mxu0 0
      %375 = vmatpush1.bf16.msra.mxu0 0
      %376 = vmatprep.subr.bf16.mxu0 0
      %377 = vmatpush1.bf16.msra.mxu0 0
      %378 = vmatprep.subr.bf16.mxu0 0
      %379 = vmatpush1.bf16.msra.mxu0 0
      %380 = vmatprep.subr.bf16.mxu0 0
      %381 = vmatpush1.bf16.msra.mxu0 0
      %382 = vmatprep.subr.bf16.mxu0 0
      %383 = vmatpush1.bf16.msra.mxu0 0
      %384 = vmatprep.subr.bf16.mxu0 0
      %385 = vmatpush1.bf16.msra.mxu0 0
      %386 = vmatprep.subr.bf16.mxu0 0
      %387 = vmatpush1.bf16.msra.mxu0 0
      %388 = vmatprep.mubr.bf16.mxu0 0
      %389 = vmatmul.mubr.bf16.gmra.mrb[0].mxu0 %v354
      %v390 = vpop.f32.mrb[0].mxu0
      %v391 = vadd.f32 0.0, %v390
      %v392 = vpop.f32.mrb[0].mxu0
      %v393 = vpop.f32.mrb[0].mxu0
      %v394 = vadd.f32 0.0, %v393
      %v395 = vpop.f32.mrb[0].mxu0
      %396 = vdwg.mxu0
      %v397 = vpack.c.bf16 %v394, %v391
      %v399 = vunpack.c.l.b16 %v397
      %v400 = vunpack.c.h.b16 %v397
      %v401 = vpack.c.b16 %v399, %v399
      %v402 = vpack.c.b16 %v400, %v400
      %405 = vst [vmem:[%s309] sm:$0xf] %v401
      %406 = vst [vmem:[%s309 + $0x4] sm:$0xf] %v402
      %407 = vadd.xlane.f32.xlu0 %v391
      %v408 = vpop.xlane.xlu0 %407
      %409 = vadd.xlane.f32.xlu0 %v394
      %v410 = vpop.xlane.xlu0 %409
      %v411 = vmul.f32 %v391, %v391
      %v412 = vmul.f32 %v394, %v394
      %413 = vadd.xlane.f32.xlu0 %v411
      %v414 = vpop.xlane.xlu0 %413
      %415 = vadd.xlane.f32.xlu0 %v412
      %v416 = vpop.xlane.xlu0 %415
      %v417 = vlaneseq
      %v418 = vand.u32 %v417, 127
      %v419 = vld [vmem:[%s322] sm:$0xff]
      %v420 = vld [vmem:[%s322 + $0x8] sm:$0xff]
      %vm421 = vcmp.eq.s32.totalorder %v418, 0
      %v422 = vsel %vm421, %v408, 0.0
      %v423 = vsel %vm421, %v410, 0.0
      %vm424 = vcmp.eq.s32.totalorder %v418, 1
      %v425 = vsel %vm424, %v414, 0.0
      %v426 = vsel %vm424, %v416, 0.0
      %v427 = vadd.f32 %v422, %v425
      %v428 = vadd.f32 %v423, %v426
      %v429 = vadd.f32 %v419, %v427
      %v430 = vadd.f32 %v420, %v428
      %431 = vst [vmem:[%s322] sm:$0xff] %v429
      %432 = vst [vmem:[%s322 + $0x8] sm:$0xff] %v430
      %v433 = vld [vmem:[%s2] sm:$0xf]
      %v434 = vld [vmem:[%s2 + $0x4] sm:$0xf]
      %v437 = vunpack.c.l.b16 %v433
      %v438 = vunpack.c.l.b16 %v434
      %v439 = vpack.c.b16 %v438, %v437
      %v441 = vsel %vm352, %v439, 0
      %443 = vmatprep.subr.bf16.mxu0 0
      %444 = vmatpush1.bf16.msra.mxu0 %v350
      %445 = vmatprep.subr.bf16.mxu0 0
      %446 = vmatpush1.bf16.msra.mxu0 0
      %447 = vmatprep.subr.bf16.mxu0 0
      %448 = vmatpush1.bf16.msra.mxu0 0
      %449 = vmatprep.subr.bf16.mxu0 0
      %450 = vmatpush1.bf16.msra.mxu0 0
      %451 = vmatprep.subr.bf16.mxu0 0
      %452 = vmatpush1.bf16.msra.mxu0 0
      %453 = vmatprep.subr.bf16.mxu0 0
      %454 = vmatpush1.bf16.msra.mxu0 0
      %455 = vmatprep.subr.bf16.mxu0 0
      %456 = vmatpush1.bf16.msra.mxu0 0
      %457 = vmatprep.subr.bf16.mxu0 0
      %458 = vmatpush1.bf16.msra.mxu0 0
      %459 = vmatprep.subr.bf16.mxu0 0
      %460 = vmatpush1.bf16.msra.mxu0 0
      %461 = vmatprep.subr.bf16.mxu0 0
      %462 = vmatpush1.bf16.msra.mxu0 0
      %463 = vmatprep.subr.bf16.mxu0 0
      %464 = vmatpush1.bf16.msra.mxu0 0
      %465 = vmatprep.subr.bf16.mxu0 0
      %466 = vmatpush1.bf16.msra.mxu0 0
      %467 = vmatprep.subr.bf16.mxu0 0
      %468 = vmatpush1.bf16.msra.mxu0 0
      %469 = vmatprep.subr.bf16.mxu0 0
      %470 = vmatpush1.bf16.msra.mxu0 0
      %471 = vmatprep.subr.bf16.mxu0 0
      %472 = vmatpush1.bf16.msra.mxu0 0
      %473 = vmatprep.subr.bf16.mxu0 0
      %474 = vmatpush1.bf16.msra.mxu0 0
      %475 = vmatprep.mubr.bf16.mxu0 0
      %476 = vmatmul.mubr.bf16.gmra.mrb[0].mxu0 %v441
      %v477 = vpop.f32.mrb[0].mxu0
      %v478 = vadd.f32 0.0, %v477
      %v479 = vpop.f32.mrb[0].mxu0
      %v480 = vpop.f32.mrb[0].mxu0
      %v481 = vadd.f32 0.0, %v480
      %v482 = vpop.f32.mrb[0].mxu0
      %483 = vdwg.mxu0
      %v484 = vpack.c.bf16 %v481, %v478
      %v486 = vunpack.c.l.b16 %v484
      %v487 = vunpack.c.h.b16 %v484
      %v488 = vpack.c.b16 %v486, %v486
      %v489 = vpack.c.b16 %v487, %v487
      %492 = vst [vmem:[%s317] sm:$0xf] %v488
      %493 = vst [vmem:[%s317 + $0x4] sm:$0xf] %v489
      %494 = vadd.xlane.f32.xlu0 %v478
      %v495 = vpop.xlane.xlu0 %494
      %496 = vadd.xlane.f32.xlu0 %v481
      %v497 = vpop.xlane.xlu0 %496
      %v498 = vmul.f32 %v478, %v478
      %v499 = vmul.f32 %v481, %v481
      %500 = vadd.xlane.f32.xlu0 %v498
      %v501 = vpop.xlane.xlu0 %500
      %502 = vadd.xlane.f32.xlu0 %v499
      %v503 = vpop.xlane.xlu0 %502
      %v504 = vld [vmem:[%s327] sm:$0xff]
      %v505 = vld [vmem:[%s327 + $0x8] sm:$0xff]
      %v506 = vsel %vm421, %v495, 0.0
      %v507 = vsel %vm421, %v497, 0.0
      %v508 = vsel %vm424, %v501, 0.0
      %v509 = vsel %vm424, %v503, 0.0
      %v510 = vadd.f32 %v506, %v508
      %v511 = vadd.f32 %v507, %v509
      %v512 = vadd.f32 %v504, %v510
      %v513 = vadd.f32 %v505, %v511
      %514 = vst [vmem:[%s327] sm:$0xff] %v512
      %515 = vst [vmem:[%s327 + $0x8] sm:$0xff] %v513
      %p516 = scmp.lt.s32.totalorder %s22, 1
      %s517 = scalar_select %p516, %s22, 1
      %p518 = scmp.lt.s32.totalorder %s23, 0
      %s519 = scalar_select %p518, %s23, 0
      %s520 = smul.addr %s517, 2
      %s521 = sadd.s32 %s519, %s520
      %s522 = smul.addr %s521, 4
      %s523 = scalar_lea.vmem %s3, %s522
      %p524 = scmp.lt.s32.totalorder %s22, 1
      %s525 = scalar_select %p524, %s22, 1
      %p526 = scmp.lt.s32.totalorder %s23, 0
      %s527 = scalar_select %p526, %s23, 0
      %s528 = smul.addr %s525, 2
      %s529 = sadd.s32 %s527, %s528
      %s530 = smul.addr %s529, 4
      %s531 = scalar_lea.vmem %s4, %s530
      %p532 = scmp.lt.s32.totalorder %s22, 1
      %s533 = scalar_select %p532, %s22, 1
      %s534 = smul.addr %s533, 2
      %s535 = smul.addr %s534, 8
      %s536 = scalar_lea.vmem %s5, %s535
      %p537 = scmp.lt.s32.totalorder %s22, 1
      %s538 = scalar_select %p537, %s22, 1
      %s539 = smul.addr %s538, 2
      %s540 = smul.addr %s539, 8
      %s541 = scalar_lea.vmem %s6, %s540
      // Predicated region
      $region37: #{conv_block_forward.4} parent=31 // pred_check
        %p542 = pneg %p120
      $region38: #{conv_block_forward.4} parent=31 // pred_check_branch
        %544 = sbr.rel (%p542) target = $region40
      $region39: #{conv_block_forward.4} parent=31 // pred_region
        _
      $region40: #{conv_block_forward.4} parent=31 // pred_fallthru
        _
      // Predicated region
      $region41: #{conv_block_forward.4} parent=31 // pred_check
        %p545 = pneg %p148
      $region42: #{conv_block_forward.4} parent=31 // pred_check_branch
        %547 = sbr.rel (%p545) target = $region44
      $region43: #{conv_block_forward.4} parent=31 // pred_region
        _
      $region44: #{conv_block_forward.4} parent=31 // pred_fallthru
        _
      // Predicated region
      $region45: #{conv_block_forward.4} parent=31 // pred_check
        %p548 = pneg %p174
      $region46: #{conv_block_forward.4} parent=31 // pred_check_branch
        %550 = sbr.rel (%p548) target = $region48
      $region47: #{conv_block_forward.4} parent=31 // pred_region
        _
      $region48: #{conv_block_forward.4} parent=31 // pred_fallthru
        _
      // Predicated region
      $region49: #{conv_block_forward.4} parent=31 // pred_check
        %p551 = pneg %p200
      $region50: #{conv_block_forward.4} parent=31 // pred_check_branch
        %553 = sbr.rel (%p551) target = $region52
      $region51: #{conv_block_forward.4} parent=31 // pred_region
        _
      $region52: #{conv_block_forward.4} parent=31 // pred_fallthru
        _
    $region32: #{conv_block_forward.4} parent=5 // pred_fallthru
      _
    %p554 = scmp.le.s32.totalorder 2, %s13
    // Predicated region
    $region53: #{conv_block_forward.4} parent=5 // pred_check
      %p555 = pneg %p554
    $region54: #{conv_block_forward.4} parent=5 // pred_check_branch
      %557 = sbr.rel (%p555) target = $region56
    $region55: #{conv_block_forward.4} parent=5 // pred_region
      %s558 = ssub.s32 %s13, 2
      // Predicated region
      $region57: #{conv_block_forward.4} parent=55 // pred_check
        %p559 = pneg %p126
      $region58: #{conv_block_forward.4} parent=55 // pred_check_branch
        %561 = sbr.rel (%p559) target = $region60
      $region59: #{conv_block_forward.4} parent=55 // pred_region
        %p562 = scmp.lt.s32.totalorder %s24, 1
        %s563 = scalar_select %p562, %s24, 1
        %p564 = scmp.lt.s32.totalorder %s25, 0
        %s565 = scalar_select %p564, %s25, 0
        %s566 = smul.addr %s563, 2
        %s567 = sadd.s32 %s565, %s566
        %s568 = smul.addr %s567, 4
        %s569 = scalar_lea.vmem %s3, %s568
      $region60: #{conv_block_forward.4} parent=55 // pred_fallthru
        _
      // Predicated region
      $region61: #{conv_block_forward.4} parent=55 // pred_check
        %p570 = pneg %p154
      $region62: #{conv_block_forward.4} parent=55 // pred_check_branch
        %572 = sbr.rel (%p570) target = $region64
      $region63: #{conv_block_forward.4} parent=55 // pred_region
        %p573 = scmp.lt.s32.totalorder %s24, 1
        %s574 = scalar_select %p573, %s24, 1
        %p575 = scmp.lt.s32.totalorder %s25, 0
        %s576 = scalar_select %p575, %s25, 0
        %s577 = smul.addr %s574, 2
        %s578 = sadd.s32 %s576, %s577
        %s579 = smul.addr %s578, 4
        %s580 = scalar_lea.vmem %s4, %s579
      $region64: #{conv_block_forward.4} parent=55 // pred_fallthru
        _
      // Predicated region
      $region65: #{conv_block_forward.4} parent=55 // pred_check
        %p581 = pneg %p180
      $region66: #{conv_block_forward.4} parent=55 // pred_check_branch
        %583 = sbr.rel (%p581) target = $region68
      $region67: #{conv_block_forward.4} parent=55 // pred_region
        %p584 = scmp.lt.s32.totalorder %s24, 1
        %s585 = scalar_select %p584, %s24, 1
        %s586 = smul.addr %s585, 2
        %s587 = smul.addr %s586, 8
        %s588 = scalar_lea.vmem %s5, %s587
      $region68: #{conv_block_forward.4} parent=55 // pred_fallthru
        _
      // Predicated region
      $region69: #{conv_block_forward.4} parent=55 // pred_check
        %p589 = pneg %p206
      $region70: #{conv_block_forward.4} parent=55 // pred_check_branch
        %591 = sbr.rel (%p589) target = $region72
      $region71: #{conv_block_forward.4} parent=55 // pred_region
        %p592 = scmp.lt.s32.totalorder %s24, 1
        %s593 = scalar_select %p592, %s24, 1
        %s594 = smul.addr %s593, 2
        %s595 = smul.addr %s594, 8
        %s596 = scalar_lea.vmem %s6, %s595
      $region72: #{conv_block_forward.4} parent=55 // pred_fallthru
        _
    $region56: #{conv_block_forward.4} parent=5 // pred_fallthru
      _
  $region6: #{conv_block_forward.4} parent=0 // loop_footer
    %s17 = sadd.s32 1, %s13
  $region7: #{conv_block_forward.4} parent=0 // loop_footer_branch
    %12 = sbr.rel target = $region3
  $region8: #{conv_block_forward.4} parent=0 // loop_exit
    _

// kernel: conv_block_forward.6
$region0: #{conv_block_forward.6}
  #allocation0 [shape = 'u32[]', space=smem, size = 0x4, offset = 0x4, fixed_abs, tag = 'smem constant byte address 0x4 - core index']
  #allocation1 [shape = 'u32[144,128]{1,0:T(1,128)}', space=vmem, size = 0x12000, scoped, tag = 'internal scratch']
  %s0 = inlined_call_operand.vmem [shape: bf16[2,16,128], index: 0, kind: input, shape index: {}]
  %s1 = inlined_call_operand.vmem [shape: bf16[16,16], index: 1, kind: input, shape index: {}]
  %s2 = inlined_call_operand.vmem [shape: f32[16,2], index: 2, kind: input, shape index: {}]
  %s3 = inlined_call_operand.vmem [shape: f32[2,16,128], index: 3, kind: output, shape index: {0}]
  %s4 = inlined_call_operand.vmem [shape: bf16[2,16,128], index: 4, kind: output, shape index: {1}]
  %s5 = inlined_call_operand.vmem [shape: f32[2,16,128], index: 5, kind: output, shape index: {2}]
  %6 = xla_tuple %s3, %s4, %s5
  %s7 = sld [smem:[#allocation0]]
  $region65: #{conv_block_forward.6} parent=0
    _
  %s9 = ssub.s32 1, %s7
  %s10 = scalar_select 0, %s9, %s7
  loop: start=0, step=1, limit=4
  $region2: #{conv_block_forward.6} parent=0 // loop_pre_header
    _
  $region3: #{conv_block_forward.6} parent=0 // loop_header
    %s12 = sphi 0, %s16
    %p13 = scmp.ge.s32.totalorder %s12, 4
    %s19 = sphi 0, %s31
    %s20 = sphi 0, %s27
    %s21 = sphi 0, %s19
    %s22 = sphi 0, %s20
    %s23 = sphi 0, %s21
    %s24 = sphi 0, %s22
    %s36 = sphi 0, %s38
    %s39 = sphi 0, %s36
    %s40 = sphi 0, %s39
    %s56 = sphi 0, %s40
    %s60 = sphi 0, %s60
    %s62 = sphi 0, %s60
    %s63 = sphi 0, %s62
    %s77 = sphi 0, %s63
    %s81 = sphi 0, %s81
    %s83 = sphi 0, %s81
    %s84 = sphi 0, %s83
    %s98 = sphi 0, %s84
    %s106 = sphi 0, %s108
    %s109 = sphi 0, %s106
    %s110 = sphi 0, %s109
    %s126 = sphi 0, %s110
    %s134 = sphi 0, %s136
    %s137 = sphi 0, %s134
    %s138 = sphi 0, %s137
    %s154 = sphi 0, %s138
    %s160 = sphi 0, %s162
    %s163 = sphi 0, %s160
    %s164 = sphi 0, %s163
    %s180 = sphi 0, %s164
  $region4: #{conv_block_forward.6} parent=0 // loop_header_branch
    %15 = sbr.rel (%p13) target = $region8
  $region5: #{conv_block_forward.6} parent=0 // loop_body
    %s17 = ssub.s32 %s12, 1
    %s18 = ssub.s32 %s12, 2
    %s25 = sadd.s32 1, %s20
    %p26 = scmp.ge.s32.totalorder %s25, 1
    %s27 = scalar_select %p26, 0, %s25
    %s28 = sadd.s32 1, %s19
    %s29 = scalar_select %p26, %s28, %s19
    %p30 = scmp.ge.s32.totalorder %s29, 2
    %s31 = scalar_select %p30, 0, %s29
    %s32 = ssub.s32 %s19, %s31
    %s33 = ssub.s32 %s20, %s27
    %s34 = sor.u32 %s32, %s33
    %p35 = scmp.eq.s32.totalorder %s34, 0
    %s37 = sadd.s32 %s36, 1
    %s38 = scalar_select %p35, %s36, %s37
    %p41 = pneg %p35
    %p42 = scmp.eq.s32.totalorder %s12, 1
    %p43 = por %p41, %p42
    %p44 = scmp.ne.s32.totalorder %s36, %s39
    %p45 = scmp.eq.s32.totalorder %s12, 0
    %p46 = por %p44, %p45
    %p47 = scmp.ne.s32.totalorder %s36, %s39
    %p48 = scmp.eq.s32.totalorder %s17, 1
    %p49 = por %p47, %p48
    %p50 = scmp.ne.s32.totalorder %s39, %s40
    %p51 = scmp.eq.s32.totalorder %s17, 0
    %p52 = por %p50, %p51
    %p53 = scmp.ne.s32.totalorder %s39, %s40
    %p54 = scmp.eq.s32.totalorder %s18, 1
    %p55 = por %p53, %p54
    %p57 = scmp.ne.s32.totalorder %s40, %s56
    %p58 = scmp.eq.s32.totalorder %s18, 0
    %p59 = por %p57, %p58
    %s61 = sadd.s32 %s60, 1
    %p64 = scmp.eq.s32.totalorder %s12, 1
    %p65 = scmp.ne.s32.totalorder %s60, %s62
    %p66 = scmp.eq.s32.totalorder %s12, 0
    %p67 = por %p65, %p66
    %p68 = scmp.ne.s32.totalorder %s60, %s62
    %p69 = scmp.eq.s32.totalorder %s17, 1
    %p70 = por %p68, %p69
    %p71 = scmp.ne.s32.totalorder %s62, %s63
    %p72 = scmp.eq.s32.totalorder %s17, 0
    %p73 = por %p71, %p72
    %p74 = scmp.ne.s32.totalorder %s62, %s63
    %p75 = scmp.eq.s32.totalorder %s18, 1
    %p76 = por %p74, %p75
    %p78 = scmp.ne.s32.totalorder %s63, %s77
    %p79 = scmp.eq.s32.totalorder %s18, 0
    %p80 = por %p78, %p79
    %s82 = sadd.s32 %s81, 1
    %p85 = scmp.eq.s32.totalorder %s12, 1
    %p86 = scmp.ne.s32.totalorder %s81, %s83
    %p87 = scmp.eq.s32.totalorder %s12, 0
    %p88 = por %p86, %p87
    %p89 = scmp.ne.s32.totalorder %s81, %s83
    %p90 = scmp.eq.s32.totalorder %s17, 1
    %p91 = por %p89, %p90
    %p92 = scmp.ne.s32.totalorder %s83, %s84
    %p93 = scmp.eq.s32.totalorder %s17, 0
    %p94 = por %p92, %p93
    %p95 = scmp.ne.s32.totalorder %s83, %s84
    %p96 = scmp.eq.s32.totalorder %s18, 1
    %p97 = por %p95, %p96
    %p99 = scmp.ne.s32.totalorder %s84, %s98
    %p100 = scmp.eq.s32.totalorder %s18, 0
    %p101 = por %p99, %p100
    %s102 = ssub.s32 %s19, %s31
    %s103 = ssub.s32 %s20, %s27
    %s104 = sor.u32 %s102, %s103
    %p105 = scmp.eq.s32.totalorder %s104, 0
    %s107 = sadd.s32 %s106, 1
    %s108 = scalar_select %p105, %s106, %s107
    %p111 = pneg %p105
    %p112 = scmp.eq.s32.totalorder %s12, 1
    %p113 = por %p111, %p112
    %p114 = scmp.ne.s32.totalorder %s106, %s109
    %p115 = scmp.eq.s32.totalorder %s12, 0
    %p116 = por %p114, %p115
    %p117 = scmp.ne.s32.totalorder %s106, %s109
    %p118 = scmp.eq.s32.totalorder %s17, 1
    %p119 = por %p117, %p118
    %p120 = scmp.ne.s32.totalorder %s109, %s110
    %p121 = scmp.eq.s32.totalorder %s17, 0
    %p122 = por %p120, %p121
    %p123 = scmp.ne.s32.totalorder %s109, %s110
    %p124 = scmp.eq.s32.totalorder %s18, 1
    %p125 = por %p123, %p124
    %p127 = scmp.ne.s32.totalorder %s110, %s126
    %p128 = scmp.eq.s32.totalorder %s18, 0
    %p129 = por %p127, %p128
    %s130 = ssub.s32 %s19, %s31
    %s131 = ssub.s32 %s20, %s27
    %s132 = sor.u32 %s130, %s131
    %p133 = scmp.eq.s32.totalorder %s132, 0
    %s135 = sadd.s32 %s134, 1
    %s136 = scalar_select %p133, %s134, %s135
    %p139 = pneg %p133
    %p140 = scmp.eq.s32.totalorder %s12, 1
    %p141 = por %p139, %p140
    %p142 = scmp.ne.s32.totalorder %s134, %s137
    %p143 = scmp.eq.s32.totalorder %s12, 0
    %p144 = por %p142, %p143
    %p145 = scmp.ne.s32.totalorder %s134, %s137
    %p146 = scmp.eq.s32.totalorder %s17, 1
    %p147 = por %p145, %p146
    %p148 = scmp.ne.s32.totalorder %s137, %s138
    %p149 = scmp.eq.s32.totalorder %s17, 0
    %p150 = por %p148, %p149
    %p151 = scmp.ne.s32.totalorder %s137, %s138
    %p152 = scmp.eq.s32.totalorder %s18, 1
    %p153 = por %p151, %p152
    %p155 = scmp.ne.s32.totalorder %s138, %s154
    %p156 = scmp.eq.s32.totalorder %s18, 0
    %p157 = por %p155, %p156
    %s158 = ssub.s32 %s19, %s31
    %p159 = scmp.eq.s32.totalorder %s158, 0
    %s161 = sadd.s32 %s160, 1
    %s162 = scalar_select %p159, %s160, %s161
    %p165 = pneg %p159
    %p166 = scmp.eq.s32.totalorder %s12, 1
    %p167 = por %p165, %p166
    %p168 = scmp.ne.s32.totalorder %s160, %s163
    %p169 = scmp.eq.s32.totalorder %s12, 0
    %p170 = por %p168, %p169
    %p171 = scmp.ne.s32.totalorder %s160, %s163
    %p172 = scmp.eq.s32.totalorder %s17, 1
    %p173 = por %p171, %p172
    %p174 = scmp.ne.s32.totalorder %s163, %s164
    %p175 = scmp.eq.s32.totalorder %s17, 0
    %p176 = por %p174, %p175
    %p177 = scmp.ne.s32.totalorder %s163, %s164
    %p178 = scmp.eq.s32.totalorder %s18, 1
    %p179 = por %p177, %p178
    %p181 = scmp.ne.s32.totalorder %s164, %s180
    %p182 = scmp.eq.s32.totalorder %s18, 0
    %p183 = por %p181, %p182
    %p184 = scmp.le.s32.totalorder 1, %s12
    %p185 = scmp.lt.s32.totalorder %s12, 3
    %p186 = pnand %p184, %p185
    %p187 = pneg %p186
    // Predicated region
    $region9: #{conv_block_forward.6} parent=5 // pred_check
      _
    $region10: #{conv_block_forward.6} parent=5 // pred_check_branch
      %189 = sbr.rel (%p186) target = $region12
    $region11: #{conv_block_forward.6} parent=5 // pred_region
      %s190 = ssub.s32 %s12, 1
      // Predicated region
      $region13: #{conv_block_forward.6} parent=11 // pred_check
        %p191 = pneg %p73
      $region14: #{conv_block_forward.6} parent=11 // pred_check_branch
        %193 = sbr.rel (%p191) target = $region16
      $region15: #{conv_block_forward.6} parent=11 // pred_region
        _
      $region16: #{conv_block_forward.6} parent=11 // pred_fallthru
        _
      // Predicated region
      $region17: #{conv_block_forward.6} parent=11 // pred_check
        %p194 = pneg %p94
      $region18: #{conv_block_forward.6} parent=11 // pred_check_branch
        %196 = sbr.rel (%p194) target = $region20
      $region19: #{conv_block_forward.6} parent=11 // pred_region
        _
      $region20: #{conv_block_forward.6} parent=11 // pred_fallthru
        _
    $region12: #{conv_block_forward.6} parent=5 // pred_fallthru
      _
    %p197 = scmp.lt.s32.totalorder %s12, 2
    // Predicated region
    $region21: #{conv_block_forward.6} parent=5 // pred_check
      %p198 = pneg %p197
    $region22: #{conv_block_forward.6} parent=5 // pred_check_branch
      %200 = sbr.rel (%p198) target = $region24
    $region23: #{conv_block_forward.6} parent=5 // pred_region
      // Predicated region
      $region25: #{conv_block_forward.6} parent=23 // pred_check
        %p201 = pneg %p46
      $region26: #{conv_block_forward.6} parent=23 // pred_check_branch
        %203 = sbr.rel (%p201) target = $region28
      $region27: #{conv_block_forward.6} parent=23 // pred_region
        %p204 = scmp.lt.s32.totalorder %s19, 1
        %s205 = scalar_select %p204, %s19, 1
        %p206 = scmp.lt.s32.totalorder %s20, 0
        %s207 = scalar_select %p206, %s20, 0
        %s208 = smul.addr %s205, 2
        %s209 = sadd.s32 %s207, %s208
        %s210 = smul.addr %s209, 4
        %s211 = scalar_lea.vmem %s0, %s210
      $region28: #{conv_block_forward.6} parent=23 // pred_fallthru
        _
    $region24: #{conv_block_forward.6} parent=5 // pred_fallthru
      _
    %p212 = scmp.le.s32.totalorder 1, %s12
    %p213 = scmp.lt.s32.totalorder %s12, 3
    %p214 = pnand %p212, %p213
    %p215 = pneg %p214
    // Predicated region
    $region29: #{conv_block_forward.6} parent=5 // pred_check
      _
    $region30: #{conv_block_forward.6} parent=5 // pred_check_branch
      %217 = sbr.rel (%p214) target = $region32
    $region31: #{conv_block_forward.6} parent=5 // pred_region
      %s218 = ssub.s32 %s12, 1
      %p219 = scmp.lt.s32.totalorder %s21, 1
      %s220 = scalar_select %p219, %s21, 1
      %p221 = scmp.lt.s32.totalorder %s22, 0
      %s222 = scalar_select %p221, %s22, 0
      %s223 = smul.addr %s220, 2
      %s224 = sadd.s32 %s222, %s223
      %s225 = smul.addr %s224, 4
      %s226 = scalar_lea.vmem %s0, %s225
      %p227 = pneg %p52
      %p228 = pneg %p49
      %p229 = pneg %p73
      %p230 = pneg %p70
      %p231 = pneg %p94
      %p232 = pneg %p91
      %p233 = pneg %p122
      %p234 = pneg %p119
      %p235 = scmp.lt.s32.totalorder %s21, 1
      %s236 = scalar_select %p235, %s21, 1
      %p237 = scmp.lt.s32.totalorder %s22, 0
      %s238 = scalar_select %p237, %s22, 0
      %s239 = smul.addr %s236, 2
      %s240 = sadd.s32 %s238, %s239
      %s241 = smul.addr %s240, 8
      %s242 = scalar_lea.vmem %s3, %s241
      %p243 = pneg %p150
      %p244 = pneg %p147
      %p245 = scmp.lt.s32.totalorder %s21, 1
      %s246 = scalar_select %p245, %s21, 1
      %p247 = scmp.lt.s32.totalorder %s22, 0
      %s248 = scalar_select %p247, %s22, 0
      %s249 = smul.addr %s246, 2
      %s250 = sadd.s32 %s248, %s249
      %s251 = smul.addr %s250, 4
      %s252 = scalar_lea.vmem %s4, %s251
      %p253 = pneg %p176
      %p254 = pneg %p173
      %p255 = scmp.lt.s32.totalorder %s21, 1
      %s256 = scalar_select %p255, %s21, 1
      %s257 = smul.addr %s256, 2
      %s258 = smul.addr %s257, 8
      %s259 = scalar_lea.vmem %s5, %s258
      %p260 = scmp.lt.s32.totalorder %s21, 1
      %s261 = scalar_select %p260, %s21, 1
      %p262 = scmp.lt.s32.totalorder %s22, 0
      %s263 = scalar_select %p262, %s22, 0
      %s264 = smul.addr %s261, 2
      %s265 = sadd.s32 %s263, %s264
      %s266 = smul.addr %s265, 4
      %s267 = scalar_lea.vmem %s0, %s266
      %p268 = scmp.lt.s32.totalorder %s21, 1
      %s269 = scalar_select %p268, %s21, 1
      %p270 = scmp.lt.s32.totalorder %s22, 0
      %s271 = scalar_select %p270, %s22, 0
      %s272 = smul.addr %s269, 2
      %s273 = sadd.s32 %s271, %s272
      %s274 = smul.addr %s273, 8
      %s275 = scalar_lea.vmem %s3, %s274
      %p276 = scmp.lt.s32.totalorder %s21, 1
      %s277 = scalar_select %p276, %s21, 1
      %p278 = scmp.lt.s32.totalorder %s22, 0
      %s279 = scalar_select %p278, %s22, 0
      %s280 = smul.addr %s277, 2
      %s281 = sadd.s32 %s279, %s280
      %s282 = smul.addr %s281, 4
      %s283 = scalar_lea.vmem %s4, %s282
      %p284 = scmp.lt.s32.totalorder %s21, 1
      %s285 = scalar_select %p284, %s21, 1
      %s286 = smul.addr %s285, 2
      %s287 = smul.addr %s286, 8
      %s288 = scalar_lea.vmem %s5, %s287
      %p290 = scmp.eq.s32.totalorder %s22, 0
      // Predicated region
      $region33: #{conv_block_forward.6} parent=31 // pred_check
        %p291 = pneg %p290
      $region34: #{conv_block_forward.6} parent=31 // pred_check_branch
        %293 = sbr.rel (%p291) target = $region36
      $region35: #{conv_block_forward.6} parent=31 // pred_region
        %294 = vst [vmem:[%s288] sm:$0xff] 0.0
        %295 = vst [vmem:[%s288 + $0x8] sm:$0xff] 0.0
      $region36: #{conv_block_forward.6} parent=31 // pred_fallthru
        _
      %v296 = vld [vmem:[%s2] sm:$0xff]
      %v297 = vld [vmem:[%s2 + $0x8] sm:$0xff]
      %v298 = vld [vmem:[%s267] sm:$0xf]
      %v299 = vld [vmem:[%s267 + $0x4] sm:$0xf]
      %v300 = vunpack.c.l.bf16 %v298
      %v301 = vunpack.c.l.bf16 %v299
      %303 = vset.pattern.permute.xlu0 0
      %304 = vperm.xlu0 %303, %v296
      %v305 = vpop.permute.xlu0 %304
      %308 = vset.pattern.permute.xlu0 0
      %309 = vperm.xlu0 %308, %v297
      %v310 = vpop.permute.xlu0 %309
      %v312 = vmul.f32 %v300, %v305
      %v313 = vmul.f32 %v301, %v310
      %314 = vset.pattern.permute.xlu0 1
      %315 = vperm.xlu0 %314, %v296
      %v316 = vpop.permute.xlu0 %315
      %318 = vset.pattern.permute.xlu0 1
      %319 = vperm.xlu0 %318, %v297
      %v320 = vpop.permute.xlu0 %319
      %v322 = vadd.f32 %v312, %v316
      %v323 = vadd.f32 %v313, %v320
      %v324 = vmax.f32 %v322, 0.0
      %v325 = vmax.f32 %v323, 0.0
      %v326 = vlaneseq
      %v327 = vand.u32 %v326, 127
      %s328 = smul.u32 %s22, 128
      %v329 = vstv %s328
      %v330 = vadd.s32 %v329, %v327
      %vm331 = vcmp.lt.s32.totalorder %v330, 16
      %v332 = vsel %vm331, 1, 0
      %vm333 = vcmp.eq.s32.totalorder %v332, 1
      %v334 = vsel %vm333, %v324, 0.0
      %v335 = vsel %vm333, %v325, 0.0
      %336 = vst [vmem:[%s275] sm:$0xff] %v334
      %337 = vst [vmem:[%s275 + $0x8] sm:$0xff] %v335
      %v338 = vld [vmem:[%s1] sm:$0xf]
      %v339 = vld [vmem:[%s1 + $0x4] sm:$0xf]
      %v340 = vpack.c.bf16 %v335, %v334
      %v343 = vunpack.c.l.b16 %v338
      %v344 = vunpack.c.l.b16 %v339
      %v345 = vpack.c.b16 %v344, %v343
      %vm346 = vcmask 130048
      %v348 = vsel %vm346, %v345, 0
      %350 = vmatprep.subr.bf16.mxu0 0
      %351 = vmatpush1.bf16.msra.mxu0 %v340
      %352 = vmatprep.subr.bf16.mxu0 0
      %353 = vmatpush1.bf16.msra.mxu0 0
      %354 = vmatprep.subr.bf16.mxu0 0
      %355 = vmatpush1.bf16.msra.mxu0 0
      %356 = vmatprep.subr.bf16.mxu0 0
      %357 = vmatpush1.bf16.msra.mxu0 0
      %358 = vmatprep.subr.bf16.mxu0 0
      %359 = vmatpush1.bf16.msra.mxu0 0
      %360 = vmatprep.subr.bf16.mxu0 0
      %361 = vmatpush1.bf16.msra.mxu0 0
      %362 = vmatprep.subr.bf16.mxu0 0
      %363 = vmatpush1.bf16.msra.mxu0 0
      %364 = vmatprep.subr.bf16.mxu0 0
      %365 = vmatpush1.bf16.msra.mxu0 0
      %366 = vmatprep.subr.bf16.mxu0 0
      %367 = vmatpush1.bf16.msra.mxu0 0
      %368 = vmatprep.subr.bf16.mxu0 0
      %369 = vmatpush1.bf16.msra.mxu0 0
      %370 = vmatprep.subr.bf16.mxu0 0
      %371 = vmatpush1.bf16.msra.mxu0 0
      %372 = vmatprep.subr.bf16.mxu0 0
      %373 = vmatpush1.bf16.msra.mxu0 0
      %374 = vmatprep.subr.bf16.mxu0 0
      %375 = vmatpush1.bf16.msra.mxu0 0
      %376 = vmatprep.subr.bf16.mxu0 0
      %377 = vmatpush1.bf16.msra.mxu0 0
      %378 = vmatprep.subr.bf16.mxu0 0
      %379 = vmatpush1.bf16.msra.mxu0 0
      %380 = vmatprep.subr.bf16.mxu0 0
      %381 = vmatpush1.bf16.msra.mxu0 0
      %382 = vmatprep.mubr.bf16.mxu0 0
      %383 = vmatmul.mubr.bf16.gmra.mrb[0].mxu0 %v348
      %v384 = vpop.f32.mrb[0].mxu0
      %v385 = vadd.f32 0.0, %v384
      %v386 = vpop.f32.mrb[0].mxu0
      %v387 = vpop.f32.mrb[0].mxu0
      %v388 = vadd.f32 0.0, %v387
      %v389 = vpop.f32.mrb[0].mxu0
      %390 = vdwg.mxu0
      %v391 = vpack.c.bf16 %v388, %v385
      %v393 = vunpack.c.l.b16 %v391
      %v394 = vunpack.c.h.b16 %v391
      %v395 = vpack.c.b16 %v393, %v393
      %v396 = vpack.c.b16 %v394, %v394
      %399 = vst [vmem:[%s283] sm:$0xf] %v395
      %400 = vst [vmem:[%s283 + $0x4] sm:$0xf] %v396
      %401 = vadd.xlane.f32.xlu0 %v385
      %v402 = vpop.xlane.xlu0 %401
      %403 = vadd.xlane.f32.xlu0 %v388
      %v404 = vpop.xlane.xlu0 %403
      %v405 = vmul.f32 %v385, %v385
      %v406 = vmul.f32 %v388, %v388
      %407 = vadd.xlane.f32.xlu0 %v405
      %v408 = vpop.xlane.xlu0 %407
      %409 = vadd.xlane.f32.xlu0 %v406
      %v410 = vpop.xlane.xlu0 %409
      %v411 = vld [vmem:[%s288] sm:$0xff]
      %v412 = vld [vmem:[%s288 + $0x8] sm:$0xff]
      %vm413 = vcmp.eq.s32.totalorder %v327, 0
      %v414 = vsel %vm413, %v402, 0.0
      %v415 = vsel %vm413, %v404, 0.0
      %vm416 = vcmp.eq.s32.totalorder %v327, 1
      %v417 = vsel %vm416, %v408, 0.0
      %v418 = vsel %vm416, %v410, 0.0
      %v419 = vadd.f32 %v414, %v417
      %v420 = vadd.f32 %v415, %v418
      %v421 = vadd.f32 %v411, %v419
      %v422 = vadd.f32 %v412, %v420
      %423 = vst [vmem:[%s288] sm:$0xff] %v421
      %424 = vst [vmem:[%s288 + $0x8] sm:$0xff] %v422
      %p425 = scmp.lt.s32.totalorder %s21, 1
      %s426 = scalar_select %p425, %s21, 1
      %p427 = scmp.lt.s32.totalorder %s22, 0
      %s428 = scalar_select %p427, %s22, 0
      %s429 = smul.addr %s426, 2
      %s430 = sadd.s32 %s428, %s429
      %s431 = smul.addr %s430, 8
      %s432 = scalar_lea.vmem %s3, %s431
      %p433 = scmp.lt.s32.totalorder %s21, 1
      %s434 = scalar_select %p433, %s21, 1
      %p435 = scmp.lt.s32.totalorder %s22, 0
      %s436 = scalar_select %p435, %s22, 0
      %s437 = smul.addr %s434, 2
      %s438 = sadd.s32 %s436, %s437
      %s439 = smul.addr %s438, 4
      %s440 = scalar_lea.vmem %s4, %s439
      %p441 = scmp.lt.s32.totalorder %s21, 1
      %s442 = scalar_select %p441, %s21, 1
      %s443 = smul.addr %s442, 2
      %s444 = smul.addr %s443, 8
      %s445 = scalar_lea.vmem %s5, %s444
      // Predicated region
      $region37: #{conv_block_forward.6} parent=31 // pred_check
        %p446 = pneg %p119
      $region38: #{conv_block_forward.6} parent=31 // pred_check_branch
        %448 = sbr.rel (%p446) target = $region40
      $region39: #{conv_block_forward.6} parent=31 // pred_region
        _
      $region40: #{conv_block_forward.6} parent=31 // pred_fallthru
        _
      // Predicated region
      $region41: #{conv_block_forward.6} parent=31 // pred_check
        %p449 = pneg %p147
      $region42: #{conv_block_forward.6} parent=31 // pred_check_branch
        %451 = sbr.rel (%p449) target = $region44
      $region43: #{conv_block_forward.6} parent=31 // pred_region
        _
      $region44: #{conv_block_forward.6} parent=31 // pred_fallthru
        _
      // Predicated region
      $region45: #{conv_block_forward.6} parent=31 // pred_check
        %p452 = pneg %p173
      $region46: #{conv_block_forward.6} parent=31 // pred_check_branch
        %454 = sbr.rel (%p452) target = $region48
      $region47: #{conv_block_forward.6} parent=31 // pred_region
        _
      $region48: #{conv_block_forward.6} parent=31 // pred_fallthru
        _
    $region32: #{conv_block_forward.6} parent=5 // pred_fallthru
      _
    %p455 = scmp.le.s32.totalorder 2, %s12
    // Predicated region
    $region49: #{conv_block_forward.6} parent=5 // pred_check
      %p456 = pneg %p455
    $region50: #{conv_block_forward.6} parent=5 // pred_check_branch
      %458 = sbr.rel (%p456) target = $region52
    $region51: #{conv_block_forward.6} parent=5 // pred_region
      %s459 = ssub.s32 %s12, 2
      // Predicated region
      $region53: #{conv_block_forward.6} parent=51 // pred_check
        %p460 = pneg %p125
      $region54: #{conv_block_forward.6} parent=51 // pred_check_branch
        %462 = sbr.rel (%p460) target = $region56
      $region55: #{conv_block_forward.6} parent=51 // pred_region
        %p463 = scmp.lt.s32.totalorder %s23, 1
        %s464 = scalar_select %p463, %s23, 1
        %p465 = scmp.lt.s32.totalorder %s24, 0
        %s466 = scalar_select %p465, %s24, 0
        %s467 = smul.addr %s464, 2
        %s468 = sadd.s32 %s466, %s467
        %s469 = smul.addr %s468, 8
        %s470 = scalar_lea.vmem %s3, %s469
      $region56: #{conv_block_forward.6} parent=51 // pred_fallthru
        _
      // Predicated region
      $region57: #{conv_block_forward.6} parent=51 // pred_check
        %p471 = pneg %p153
      $region58: #{conv_block_forward.6} parent=51 // pred_check_branch
        %473 = sbr.rel (%p471) target = $region60
      $region59: #{conv_block_forward.6} parent=51 // pred_region
        %p474 = scmp.lt.s32.totalorder %s23, 1
        %s475 = scalar_select %p474, %s23, 1
        %p476 = scmp.lt.s32.totalorder %s24, 0
        %s477 = scalar_select %p476, %s24, 0
        %s478 = smul.addr %s475, 2
        %s479 = sadd.s32 %s477, %s478
        %s480 = smul.addr %s479, 4
        %s481 = scalar_lea.vmem %s4, %s480
      $region60: #{conv_block_forward.6} parent=51 // pred_fallthru
        _
      // Predicated region
      $region61: #{conv_block_forward.6} parent=51 // pred_check
        %p482 = pneg %p179
      $region62: #{conv_block_forward.6} parent=51 // pred_check_branch
        %484 = sbr.rel (%p482) target = $region64
      $region63: #{conv_block_forward.6} parent=51 // pred_region
        %p485 = scmp.lt.s32.totalorder %s23, 1
        %s486 = scalar_select %p485, %s23, 1
        %s487 = smul.addr %s486, 2
        %s488 = smul.addr %s487, 8
        %s489 = scalar_lea.vmem %s5, %s488
      $region64: #{conv_block_forward.6} parent=51 // pred_fallthru
        _
    $region52: #{conv_block_forward.6} parent=5 // pred_fallthru
      _
  $region6: #{conv_block_forward.6} parent=0 // loop_footer
    %s16 = sadd.s32 1, %s12
  $region7: #{conv_block_forward.6} parent=0 // loop_footer_branch
    %11 = sbr.rel target = $region3
  $region8: #{conv_block_forward.6} parent=0 // loop_exit
    _

// kernel: conv_block_forward.7
$region0: #{conv_block_forward.7}
  #allocation0 [shape = 'u32[]', space=smem, size = 0x4, offset = 0x4, fixed_abs, tag = 'smem constant byte address 0x4 - core index']
  #allocation1 [shape = 'u32[144,128]{1,0:T(1,128)}', space=vmem, size = 0x12000, scoped, tag = 'internal scratch']
  %s0 = inlined_call_operand.vmem [shape: bf16[2,16,128], index: 0, kind: input, shape index: {}]
  %s1 = inlined_call_operand.vmem [shape: bf16[2,16,128], index: 1, kind: input, shape index: {}]
  %s2 = inlined_call_operand.vmem [shape: f32[16,4], index: 2, kind: input, shape index: {}]
  %s3 = inlined_call_operand.hbm [shape: f32[2,16,128], index: 3, kind: output, shape index: {}]
  %s4 = sld [smem:[#allocation0]]
  $region45: #{conv_block_forward.7} parent=0
    _
  %s6 = ssub.s32 1, %s4
  %s7 = scalar_select 0, %s6, %s4
  $region1: #{conv_block_forward.7} parent=0
    #allocation2 [shape = 'u8[16384]{0}', space=vmem, size = 0x4000, scoped, tag = 'output window, operand 0']
    #allocation3 [shape = 's32[2]{0}', space=sflag, size = 0x8, scoped, tag = 'scoped memory for conv_block_forward.7']
    %8 = vsyncpa [#allocation3], 0
    %s9 = scalar_lea.sflag [#allocation3], 1
    %10 = vsyncpa %s9, 0
    loop: start=0, step=1, limit=4
    $region2: #{conv_block_forward.7} parent=1 // loop_pre_header
      _
    $region3: #{conv_block_forward.7} parent=1 // loop_header
      %s12 = sphi 0, %s16
      %p13 = scmp.ge.s32.totalorder %s12, 4
      %s19 = sphi 0, %s31
      %s20 = sphi 0, %s27
      %s21 = sphi 0, %s19
      %s22 = sphi 0, %s20
      %s23 = sphi 0, %s21
      %s24 = sphi 0, %s22
      %s36 = sphi 0, %s38
      %s39 = sphi 0, %s36
      %s40 = sphi 0, %s39
      %s56 = sphi 0, %s40
      %s64 = sphi 0, %s66
      %s67 = sphi 0, %s64
      %s68 = sphi 0, %s67
      %s84 = sphi 0, %s68
      %s88 = sphi 0, %s88
      %s90 = sphi 0, %s88
      %s91 = sphi 0, %s90
      %s105 = sphi 0, %s91
      %s113 = sphi 0, %s115
      %s116 = sphi 0, %s113
      %s117 = sphi 0, %s116
      %s133 = sphi 0, %s117
    $region4: #{conv_block_forward.7} parent=1 // loop_header_branch
      %15 = sbr.rel (%p13) target = $region8
    $region5: #{conv_block_forward.7} parent=1 // loop_body
      %s17 = ssub.s32 %s12, 1
      %s18 = ssub.s32 %s12, 2
      %s25 = sadd.s32 1, %s20
      %p26 = scmp.ge.s32.totalorder %s25, 1
      %s27 = scalar_select %p26, 0, %s25
      %s28 = sadd.s32 1, %s19
      %s29 = scalar_select %p26, %s28, %s19
      %p30 = scmp.ge.s32.totalorder %s29, 2
      %s31 = scalar_select %p30, 0, %s29
      %s32 = ssub.s32 %s19, %s31
      %s33 = ssub.s32 %s20, %s27
      %s34 = sor.u32 %s32, %s33
      %p35 = scmp.eq.s32.totalorder %s34, 0
      %s37 = sadd.s32 %s36, 1
      %s38 = scalar_select %p35, %s36, %s37
      %p41 = pneg %p35
      %p42 = scmp.eq.s32.totalorder %s12, 1
      %p43 = por %p41, %p42
      %p44 = scmp.ne.s32.totalorder %s36, %s39
      %p45 = scmp.eq.s32.totalorder %s12, 0
      %p46 = por %p44, %p45
      %p47 = scmp.ne.s32.totalorder %s36, %s39
      %p48 = scmp.eq.s32.totalorder %s17, 1
      %p49 = por %p47, %p48
      %p50 = scmp.ne.s32.totalorder %s39, %s40
      %p51 = scmp.eq.s32.totalorder %s17, 0
      %p52 = por %p50, %p51
      %p53 = scmp.ne.s32.totalorder %s39, %s40
      %p54 = scmp.eq.s32.totalorder %s18, 1
      %p55 = por %p53, %p54
      %p57 = scmp.ne.s32.totalorder %s40, %s56
      %p58 = scmp.eq.s32.totalorder %s18, 0
      %p59 = por %p57, %p58
      %s60 = ssub.s32 %s19, %s31
      %s61 = ssub.s32 %s20, %s27
      %s62 = sor.u32 %s60, %s61
      %p63 = scmp.eq.s32.totalorder %s62, 0
      %s65 = sadd.s32 %s64, 1
      %s66 = scalar_select %p63, %s64, %s65
      %p69 = pneg %p63
      %p70 = scmp.eq.s32.totalorder %s12, 1
      %p71 = por %p69, %p70
      %p72 = scmp.ne.s32.totalorder %s64, %s67
      %p73 = scmp.eq.s32.totalorder %s12, 0
      %p74 = por %p72, %p73
      %p75 = scmp.ne.s32.totalorder %s64, %s67
      %p76 = scmp.eq.s32.totalorder %s17, 1
      %p77 = por %p75, %p76
      %p78 = scmp.ne.s32.totalorder %s67, %s68
      %p79 = scmp.eq.s32.totalorder %s17, 0
      %p80 = por %p78, %p79
      %p81 = scmp.ne.s32.totalorder %s67, %s68
      %p82 = scmp.eq.s32.totalorder %s18, 1
      %p83 = por %p81, %p82
      %p85 = scmp.ne.s32.totalorder %s68, %s84
      %p86 = scmp.eq.s32.totalorder %s18, 0
      %p87 = por %p85, %p86
      %s89 = sadd.s32 %s88, 1
      %p92 = scmp.eq.s32.totalorder %s12, 1
      %p93 = scmp.ne.s32.totalorder %s88, %s90
      %p94 = scmp.eq.s32.totalorder %s12, 0
      %p95 = por %p93, %p94
      %p96 = scmp.ne.s32.totalorder %s88, %s90
      %p97 = scmp.eq.s32.totalorder %s17, 1
      %p98 = por %p96, %p97
      %p99 = scmp.ne.s32.totalorder %s90, %s91
      %p100 = scmp.eq.s32.totalorder %s17, 0
      %p101 = por %p99, %p100
      %p102 = scmp.ne.s32.totalorder %s90, %s91
      %p103 = scmp.eq.s32.totalorder %s18, 1
      %p104 = por %p102, %p103
      %p106 = scmp.ne.s32.totalorder %s91, %s105
      %p107 = scmp.eq.s32.totalorder %s18, 0
      %p108 = por %p106, %p107
      %s109 = ssub.s32 %s19, %s31
      %s110 = ssub.s32 %s20, %s27
      %s111 = sor.u32 %s109, %s110
      %p112 = scmp.eq.s32.totalorder %s111, 0
      %s114 = sadd.s32 %s113, 1
      %s115 = scalar_select %p112, %s113, %s114
      %p118 = pneg %p112
      %p119 = scmp.eq.s32.totalorder %s12, 1
      %p120 = por %p118, %p119
      %p121 = scmp.ne.s32.totalorder %s113, %s116
      %p122 = scmp.eq.s32.totalorder %s12, 0
      %p123 = por %p121, %p122
      %p124 = scmp.ne.s32.totalorder %s113, %s116
      %p125 = scmp.eq.s32.totalorder %s17, 1
      %p126 = por %p124, %p125
      %p127 = scmp.ne.s32.totalorder %s116, %s117
      %p128 = scmp.eq.s32.totalorder %s17, 0
      %p129 = por %p127, %p128
      %p130 = scmp.ne.s32.totalorder %s116, %s117
      %p131 = scmp.eq.s32.totalorder %s18, 1
      %p132 = por %p130, %p131
      %p134 = scmp.ne.s32.totalorder %s117, %s133
      %p135 = scmp.eq.s32.totalorder %s18, 0
      %p136 = por %p134, %p135
      %p137 = scmp.le.s32.totalorder 1, %s12
      %p138 = scmp.lt.s32.totalorder %s12, 3
      %p139 = pnand %p137, %p138
      %p140 = pneg %p139
      // Predicated region
      $region9: #{conv_block_forward.7} parent=5 // pred_check
        _
      $region10: #{conv_block_forward.7} parent=5 // pred_check_branch
        %142 = sbr.rel (%p139) target = $region12
      $region11: #{conv_block_forward.7} parent=5 // pred_region
        %s143 = ssub.s32 %s12, 1
        // Predicated region
        $region13: #{conv_block_forward.7} parent=11 // pred_check
          %p144 = pneg %p101
        $region14: #{conv_block_forward.7} parent=11 // pred_check_branch
          %146 = sbr.rel (%p144) target = $region16
        $region15: #{conv_block_forward.7} parent=11 // pred_region
          _
        $region16: #{conv_block_forward.7} parent=11 // pred_fallthru
          _
      $region12: #{conv_block_forward.7} parent=5 // pred_fallthru
        _
      %p147 = scmp.lt.s32.totalorder %s12, 2
      // Predicated region
      $region17: #{conv_block_forward.7} parent=5 // pred_check
        %p148 = pneg %p147
      $region18: #{conv_block_forward.7} parent=5 // pred_check_branch
        %150 = sbr.rel (%p148) target = $region20
      $region19: #{conv_block_forward.7} parent=5 // pred_region
        // Predicated region
        $region21: #{conv_block_forward.7} parent=19 // pred_check
          %p151 = pneg %p46
        $region22: #{conv_block_forward.7} parent=19 // pred_check_branch
          %153 = sbr.rel (%p151) target = $region24
        $region23: #{conv_block_forward.7} parent=19 // pred_region
          %p154 = scmp.lt.s32.totalorder %s19, 1
          %s155 = scalar_select %p154, %s19, 1
          %p156 = scmp.lt.s32.totalorder %s20, 0
          %s157 = scalar_select %p156, %s20, 0
          %s158 = smul.addr %s155, 2
          %s159 = sadd.s32 %s157, %s158
          %s160 = smul.addr %s159, 4
          %s161 = scalar_lea.vmem %s0, %s160
        $region24: #{conv_block_forward.7} parent=19 // pred_fallthru
          _
        // Predicated region
        $region25: #{conv_block_forward.7} parent=19 // pred_check
          %p162 = pneg %p74
        $region26: #{conv_block_forward.7} parent=19 // pred_check_branch
          %164 = sbr.rel (%p162) target = $region28
        $region27: #{conv_block_forward.7} parent=19 // pred_region
          %p165 = scmp.lt.s32.totalorder %s19, 1
          %s166 = scalar_select %p165, %s19, 1
          %p167 = scmp.lt.s32.totalorder %s20, 0
          %s168 = scalar_select %p167, %s20, 0
          %s169 = smul.addr %s166, 2
          %s170 = sadd.s32 %s168, %s169
          %s171 = smul.addr %s170, 4
          %s172 = scalar_lea.vmem %s1, %s171
        $region28: #{conv_block_forward.7} parent=19 // pred_fallthru
          _
      $region20: #{conv_block_forward.7} parent=5 // pred_fallthru
        _
      %p173 = scmp.le.s32.totalorder 1, %s12
      %p174 = scmp.lt.s32.totalorder %s12, 3
      %p175 = pnand %p173, %p174
      %p176 = pneg %p175
      // Predicated region
      $region29: #{conv_block_forward.7} parent=5 // pred_check
        _
      $region30: #{conv_block_forward.7} parent=5 // pred_check_branch
        %178 = sbr.rel (%p175) target = $region32
      $region31: #{conv_block_forward.7} parent=5 // pred_region
        %s179 = ssub.s32 %s12, 1
        %p180 = scmp.lt.s32.totalorder %s21, 1
        %s181 = scalar_select %p180, %s21, 1
        %p182 = scmp.lt.s32.totalorder %s22, 0
        %s183 = scalar_select %p182, %s22, 0
        %s184 = smul.addr %s181, 2
        %s185 = sadd.s32 %s183, %s184
        %s186 = smul.addr %s185, 4
        %s187 = scalar_lea.vmem %s0, %s186
        %p188 = pneg %p52
        %p189 = pneg %p49
        %p190 = scmp.lt.s32.totalorder %s21, 1
        %s191 = scalar_select %p190, %s21, 1
        %p192 = scmp.lt.s32.totalorder %s22, 0
        %s193 = scalar_select %p192, %s22, 0
        %s194 = smul.addr %s191, 2
        %s195 = sadd.s32 %s193, %s194
        %s196 = smul.addr %s195, 4
        %s197 = scalar_lea.vmem %s1, %s196
        %p198 = pneg %p80
        %p199 = pneg %p77
        %p200 = pneg %p101
        %p201 = pneg %p98
        %p202 = pneg %p129
        %p203 = pneg %p126
        %s204 = sand.u32 %s116, 1
        %s205 = scalar_lea.sflag [#allocation3], %s204
        %s206 = sand.u32 %s116, 1
        %s207 = smul.addr %s206, 16
        %s208 = scalar_lea.vmem [#allocation2], %s207
        %p209 = scmp.lt.s32.totalorder %s21, 1
        %s210 = scalar_select %p209, %s21, 1
        %p211 = scmp.lt.s32.totalorder %s22, 0
        %s212 = scalar_select %p211, %s22, 0
        %s213 = smul.addr %s210, 2
        %s214 = sadd.s32 %s212, %s213
        %s215 = smul.addr %s214, 4
        %s216 = scalar_lea.vmem %s0, %s215
        %p217 = scmp.lt.s32.totalorder %s21, 1
        %s218 = scalar_select %p217, %s21, 1
        %p219 = scmp.lt.s32.totalorder %s22, 0
        %s220 = scalar_select %p219, %s22, 0
        %s221 = smul.addr %s218, 2
        %s222 = sadd.s32 %s220, %s221
        %s223 = smul.addr %s222, 4
        %s224 = scalar_lea.vmem %s1, %s223
        %v225 = vld [vmem:[%s2] sm:$0xff]
        %v226 = vld [vmem:[%s2 + $0x8] sm:$0xff]
        %v227 = vld [vmem:[%s216] sm:$0xf]
        %v228 = vld [vmem:[%s216 + $0x4] sm:$0xf]
        %v229 = vunpack.c.l.bf16 %v227
        %v230 = vunpack.c.l.bf16 %v228
        %232 = vset.pattern.permute.xlu0 0
        %233 = vperm.xlu0 %232, %v225
        %v234 = vpop.permute.xlu0 %233
        %237 = vset.pattern.permute.xlu0 0
        %238 = vperm.xlu0 %237, %v226
        %v239 = vpop.permute.xlu0 %238
        %v241 = vmul.f32 %v229, %v234
        %v242 = vmul.f32 %v230, %v239
        %243 = vset.pattern.permute.xlu0 1
        %244 = vperm.xlu0 %243, %v225
        %v245 = vpop.permute.xlu0 %244
        %247 = vset.pattern.permute.xlu0 1
        %248 = vperm.xlu0 %247, %v226
        %v249 = vpop.permute.xlu0 %248
        %v251 = vadd.f32 %v241, %v245
        %v252 = vadd.f32 %v242, %v249
        %v253 = vld [vmem:[%s224] sm:$0xf]
        %v254 = vld [vmem:[%s224 + $0x4] sm:$0xf]
        %v255 = vunpack.c.l.bf16 %v253
        %v256 = vunpack.c.l.bf16 %v254
        %257 = vset.pattern.permute.xlu0 2
        %258 = vperm.xlu0 %257, %v225
        %v259 = vpop.permute.xlu0 %258
        %261 = vset.pattern.permute.xlu0 2
        %262 = vperm.xlu0 %261, %v226
        %v263 = vpop.permute.xlu0 %262
        %v265 = vmul.f32 %v255, %v259
        %v266 = vmul.f32 %v256, %v263
        %v267 = vadd.f32 %v251, %v265
        %v268 = vadd.f32 %v252, %v266
        %269 = vset.pattern.permute.xlu0 3
        %270 = vperm.xlu0 %269, %v225
        %v271 = vpop.permute.xlu0 %270
        %273 = vset.pattern.permute.xlu0 3
        %274 = vperm.xlu0 %273, %v226
        %v275 = vpop.permute.xlu0 %274
        %v277 = vadd.f32 %v267, %v271
        %v278 = vadd.f32 %v268, %v275
        %v279 = vmax.f32 %v277, 0.0
        %v280 = vmax.f32 %v278, 0.0
        %281 = vst [vmem:[%s208] sm:$0xff] %v279
        %282 = vst [vmem:[%s208 + $0x8] sm:$0xff] %v280
        %s283 = sand.u32 %s116, 1
        %s284 = scalar_lea.sflag [#allocation3], %s283
        %s285 = sand.u32 %s116, 1
        %s286 = smul.addr %s285, 16
        %s287 = scalar_lea.vmem [#allocation2], %s286
        // Predicated region
        $region33: #{conv_block_forward.7} parent=31 // pred_check
          %p288 = pneg %p126
        $region34: #{conv_block_forward.7} parent=31 // pred_check_branch
          %290 = sbr.rel (%p288) target = $region36
        $region35: #{conv_block_forward.7} parent=31 // pred_region
          %s292 = ssub.s32 256, 256
          %293 = vsyncadd %s284, %s292
          %s294 = smul.addr %s21, 2
          %s295 = sadd.s32 %s22, %s294
          %s296 = smul.addr %s295, 128
          %s297 = scalar_lea.hbm %s3, %s296
          %s298 = sshll.u32 %s287, 4
          %s299 = int_to_ptr.vmem [resolvable:$true] %s298
          %304 = dma.vmem_to_hbm [thread:$0]  %s299, 256, %s297, %s284, 128, 128, 8
        $region36: #{conv_block_forward.7} parent=31 // pred_fallthru
          _
      $region32: #{conv_block_forward.7} parent=5 // pred_fallthru
        _
      %p305 = scmp.le.s32.totalorder 2, %s12
      // Predicated region
      $region37: #{conv_block_forward.7} parent=5 // pred_check
        %p306 = pneg %p305
      $region38: #{conv_block_forward.7} parent=5 // pred_check_branch
        %308 = sbr.rel (%p306) target = $region40
      $region39: #{conv_block_forward.7} parent=5 // pred_region
        %s309 = ssub.s32 %s12, 2
        // Predicated region
        $region41: #{conv_block_forward.7} parent=39 // pred_check
          %p310 = pneg %p132
        $region42: #{conv_block_forward.7} parent=39 // pred_check_branch
          %312 = sbr.rel (%p310) target = $region44
        $region43: #{conv_block_forward.7} parent=39 // pred_region
          %s313 = sand.u32 %s117, 1
          %s314 = scalar_lea.sflag [#allocation3], %s313
          %s315 = sand.u32 %s117, 1
          %s316 = smul.addr %s315, 16
          %s317 = scalar_lea.vmem [#allocation2], %s316
          %318 = dma.done %s314, 256
        $region44: #{conv_block_forward.7} parent=39 // pred_fallthru
          _
      $region40: #{conv_block_forward.7} parent=5 // pred_fallthru
        _
    $region6: #{conv_block_forward.7} parent=1 // loop_footer
      %s16 = sadd.s32 1, %s12
    $region7: #{conv_block_forward.7} parent=1 // loop_footer_branch
      %11 = sbr.rel target = $region3
    $region8: #{conv_block_forward.7} parent=1 // loop_exit
      _
    %319 = vsyncpa [#allocation3], 1
    %s320 = scalar_lea.sflag [#allocation3], 1
    %321 = vsyncpa %s320, 1

// kernel: conv_block_forward.5
$region0: #{conv_block_forward.5}
  #allocation0 [shape = 'u32[]', space=smem, size = 0x4, offset = 0x4, fixed_abs, tag = 'smem constant byte address 0x4 - core index']
  #allocation1 [shape = 'u32[144,128]{1,0:T(1,128)}', space=vmem, size = 0x12000, scoped, tag = 'internal scratch']
  %s0 = inlined_call_operand.vmem [shape: bf16[2,16,128], index: 0, kind: input, shape index: {}, may-alias: {0,1,2}]
  %s1 = inlined_call_operand.vmem [shape: bf16[2,16,128], index: 1, kind: input, shape index: {}, may-alias: {0,1,2}]
  %s2 = inlined_call_operand.vmem [shape: bf16[2,16,128], index: 2, kind: input, shape index: {}, may-alias: {0,1,2}]
  %s3 = inlined_call_operand.vmem [shape: bf16[3,16,16], index: 3, kind: input, shape index: {}]
  %s4 = inlined_call_operand.vmem [shape: f32[16,2], index: 4, kind: input, shape index: {}]
  %s5 = inlined_call_operand.vmem [shape: bf16[2,16,128], index: 5, kind: output, shape index: {0}]
  %s6 = inlined_call_operand.vmem [shape: f32[2,16,128], index: 6, kind: output, shape index: {1}]
  %7 = xla_tuple %s5, %s6
  %s8 = sld [smem:[#allocation0]]
  $region65: #{conv_block_forward.5} parent=0
    _
  %s10 = ssub.s32 1, %s8
  %s11 = scalar_select 0, %s10, %s8
  loop: start=0, step=1, limit=4
  $region2: #{conv_block_forward.5} parent=0 // loop_pre_header
    _
  $region3: #{conv_block_forward.5} parent=0 // loop_header
    %s13 = sphi 0, %s17
    %p14 = scmp.ge.s32.totalorder %s13, 4
    %s20 = sphi 0, %s32
    %s21 = sphi 0, %s28
    %s22 = sphi 0, %s20
    %s23 = sphi 0, %s21
    %s24 = sphi 0, %s22
    %s25 = sphi 0, %s23
    %s37 = sphi 0, %s39
    %s40 = sphi 0, %s37
    %s41 = sphi 0, %s40
    %s57 = sphi 0, %s41
    %s71 = sphi 0, %s73
    %s74 = sphi 0, %s71
    %s75 = sphi 0, %s74
    %s91 = sphi 0, %s75
    %s105 = sphi 0, %s107
    %s108 = sphi 0, %s105
    %s109 = sphi 0, %s108
    %s125 = sphi 0, %s109
    %s129 = sphi 0, %s129
    %s131 = sphi 0, %s129
    %s132 = sphi 0, %s131
    %s146 = sphi 0, %s132
    %s150 = sphi 0, %s150
    %s152 = sphi 0, %s150
    %s153 = sphi 0, %s152
    %s167 = sphi 0, %s153
    %s175 = sphi 0, %s177
    %s178 = sphi 0, %s175
    %s179 = sphi 0, %s178
    %s195 = sphi 0, %s179
    %s201 = sphi 0, %s203
    %s204 = sphi 0, %s201
    %s205 = sphi 0, %s204
    %s221 = sphi 0, %s205
  $region4: #{conv_block_forward.5} parent=0 // loop_header_branch
    %16 = sbr.rel (%p14) target = $region8
  $region5: #{conv_block_forward.5} parent=0 // loop_body
    %s18 = ssub.s32 %s13, 1
    %s19 = ssub.s32 %s13, 2
    %s26 = sadd.s32 1, %s21
    %p27 = scmp.ge.s32.totalorder %s26, 1
    %s28 = scalar_select %p27, 0, %s26
    %s29 = sadd.s32 1, %s20
    %s30 = scalar_select %p27, %s29, %s20
    %p31 = scmp.ge.s32.totalorder %s30, 2
    %s32 = scalar_select %p31, 0, %s30
    %s33 = ssub.s32 %s20, %s32
    %s34 = ssub.s32 %s21, %s28
    %s35 = sor.u32 %s33, %s34
    %p36 = scmp.eq.s32.totalorder %s35, 0
    %s38 = sadd.s32 %s37, 1
    %s39 = scalar_select %p36, %s37, %s38
    %p42 = pneg %p36
    %p43 = scmp.eq.s32.totalorder %s13, 1
    %p44 = por %p42, %p43
    %p45 = scmp.ne.s32.totalorder %s37, %s40
    %p46 = scmp.eq.s32.totalorder %s13, 0
    %p47 = por %p45, %p46
    %p48 = scmp.ne.s32.totalorder %s37, %s40
    %p49 = scmp.eq.s32.totalorder %s18, 1
    %p50 = por %p48, %p49
    %p51 = scmp.ne.s32.totalorder %s40, %s41
    %p52 = scmp.eq.s32.totalorder %s18, 0
    %p53 = por %p51, %p52
    %p54 = scmp.ne.s32.totalorder %s40, %s41
    %p55 = scmp.eq.s32.totalorder %s19, 1
    %p56 = por %p54, %p55
    %p58 = scmp.ne.s32.totalorder %s41, %s57
    %p59 = scmp.eq.s32.totalorder %s19, 0
    %p60 = por %p58, %p59
    %s61 = ssub.s32 %s21, 1
    %p62 = scmp.gt.s32.totalorder %s61, 0
    %s63 = scalar_select %p62, %s61, 0
    %s64 = ssub.s32 %s28, 1
    %p65 = scmp.gt.s32.totalorder %s64, 0
    %s66 = scalar_select %p65, %s64, 0
    %s67 = ssub.s32 %s20, %s32
    %s68 = ssub.s32 %s63, %s66
    %s69 = sor.u32 %s67, %s68
    %p70 = scmp.eq.s32.totalorder %s69, 0
    %s72 = sadd.s32 %s71, 1
    %s73 = scalar_select %p70, %s71, %s72
    %p76 = pneg %p70
    %p77 = scmp.eq.s32.totalorder %s13, 1
    %p78 = por %p76, %p77
    %p79 = scmp.ne.s32.totalorder %s71, %s74
    %p80 = scmp.eq.s32.totalorder %s13, 0
    %p81 = por %p79, %p80
    %p82 = scmp.ne.s32.totalorder %s71, %s74
    %p83 = scmp.eq.s32.totalorder %s18, 1
    %p84 = por %p82, %p83
    %p85 = scmp.ne.s32.totalorder %s74, %s75
    %p86 = scmp.eq.s32.totalorder %s18, 0
    %p87 = por %p85, %p86
    %p88 = scmp.ne.s32.totalorder %s74, %s75
    %p89 = scmp.eq.s32.totalorder %s19, 1
    %p90 = por %p88, %p89
    %p92 = scmp.ne.s32.totalorder %s75, %s91
    %p93 = scmp.eq.s32.totalorder %s19, 0
    %p94 = por %p92, %p93
    %s95 = sadd.s32 %s21, 1
    %p96 = scmp.lt.s32.totalorder %s95, 0
    %s97 = scalar_select %p96, %s95, 0
    %s98 = sadd.s32 %s28, 1
    %p99 = scmp.lt.s32.totalorder %s98, 0
    %s100 = scalar_select %p99, %s98, 0
    %s101 = ssub.s32 %s20, %s32
    %s102 = ssub.s32 %s97, %s100
    %s103 = sor.u32 %s101, %s102
    %p104 = scmp.eq.s32.totalorder %s103, 0
    %s106 = sadd.s32 %s105, 1
    %s107 = scalar_select %p104, %s105, %s106
    %p110 = pneg %p104
    %p111 = scmp.eq.s32.totalorder %s13, 1
    %p112 = por %p110, %p111
    %p113 = scmp.ne.s32.totalorder %s105, %s108
    %p114 = scmp.eq.s32.totalorder %s13, 0
    %p115 = por %p113, %p114
    %p116 = scmp.ne.s32.totalorder %s105, %s108
    %p117 = scmp.eq.s32.totalorder %s18, 1
    %p118 = por %p116, %p117
    %p119 = scmp.ne.s32.totalorder %s108, %s109
    %p120 = scmp.eq.s32.totalorder %s18, 0
    %p121 = por %p119, %p120
    %p122 = scmp.ne.s32.totalorder %s108, %s109
    %p123 = scmp.eq.s32.totalorder %s19, 1
    %p124 = por %p122, %p123
    %p126 = scmp.ne.s32.totalorder %s109, %s125
    %p127 = scmp.eq.s32.totalorder %s19, 0
    %p128 = por %p126, %p127
    %s130 = sadd.s32 %s129, 1
    %p133 = scmp.eq.s32.totalorder %s13, 1
    %p134 = scmp.ne.s32.totalorder %s129, %s131
    %p135 = scmp.eq.s32.totalorder %s13, 0
    %p136 = por %p134, %p135
    %p137 = scmp.ne.s32.totalorder %s129, %s131
    %p138 = scmp.eq.s32.totalorder %s18, 1
    %p139 = por %p137, %p138
    %p140 = scmp.ne.s32.totalorder %s131, %s132
    %p141 = scmp.eq.s32.totalorder %s18, 0
    %p142 = por %p140, %p141
    %p143 = scmp.ne.s32.totalorder %s131, %s132
    %p144 = scmp.eq.s32.totalorder %s19, 1
    %p145 = por %p143, %p144
    %p147 = scmp.ne.s32.totalorder %s132, %s146
    %p148 = scmp.eq.s32.totalorder %s19, 0
    %p149 = por %p147, %p148
    %s151 = sadd.s32 %s150, 1
    %p154 = scmp.eq.s32.totalorder %s13, 1
    %p155 = scmp.ne.s32.totalorder %s150, %s152
    %p156 = scmp.eq.s32.totalorder %s13, 0
    %p157 = por %p155, %p156
    %p158 = scmp.ne.s32.totalorder %s150, %s152
    %p159 = scmp.eq.s32.totalorder %s18, 1
    %p160 = por %p158, %p159
    %p161 = scmp.ne.s32.totalorder %s152, %s153
    %p162 = scmp.eq.s32.totalorder %s18, 0
    %p163 = por %p161, %p162
    %p164 = scmp.ne.s32.totalorder %s152, %s153
    %p165 = scmp.eq.s32.totalorder %s19, 1
    %p166 = por %p164, %p165
    %p168 = scmp.ne.s32.totalorder %s153, %s167
    %p169 = scmp.eq.s32.totalorder %s19, 0
    %p170 = por %p168, %p169
    %s171 = ssub.s32 %s20, %s32
    %s172 = ssub.s32 %s21, %s28
    %s173 = sor.u32 %s171, %s172
    %p174 = scmp.eq.s32.totalorder %s173, 0
    %s176 = sadd.s32 %s175, 1
    %s177 = scalar_select %p174, %s175, %s176
    %p180 = pneg %p174
    %p181 = scmp.eq.s32.totalorder %s13, 1
    %p182 = por %p180, %p181
    %p183 = scmp.ne.s32.totalorder %s175, %s178
    %p184 = scmp.eq.s32.totalorder %s13, 0
    %p185 = por %p183, %p184
    %p186 = scmp.ne.s32.totalorder %s175, %s178
    %p187 = scmp.eq.s32.totalorder %s18, 1
    %p188 = por %p186, %p187
    %p189 = scmp.ne.s32.totalorder %s178, %s179
    %p190 = scmp.eq.s32.totalorder %s18, 0
    %p191 = por %p189, %p190
    %p192 = scmp.ne.s32.totalorder %s178, %s179
    %p193 = scmp.eq.s32.totalorder %s19, 1
    %p194 = por %p192, %p193
    %p196 = scmp.ne.s32.totalorder %s179, %s195
    %p197 = scmp.eq.s32.totalorder %s19, 0
    %p198 = por %p196, %p197
    %s199 = ssub.s32 %s20, %s32
    %p200 = scmp.eq.s32.totalorder %s199, 0
    %s202 = sadd.s32 %s201, 1
    %s203 = scalar_select %p200, %s201, %s202
    %p206 = pneg %p200
    %p207 = scmp.eq.s32.totalorder %s13, 1
    %p208 = por %p206, %p207
    %p209 = scmp.ne.s32.totalorder %s201, %s204
    %p210 = scmp.eq.s32.totalorder %s13, 0
    %p211 = por %p209, %p210
    %p212 = scmp.ne.s32.totalorder %s201, %s204
    %p213 = scmp.eq.s32.totalorder %s18, 1
    %p214 = por %p212, %p213
    %p215 = scmp.ne.s32.totalorder %s204, %s205
    %p216 = scmp.eq.s32.totalorder %s18, 0
    %p217 = por %p215, %p216
    %p218 = scmp.ne.s32.totalorder %s204, %s205
    %p219 = scmp.eq.s32.totalorder %s19, 1
    %p220 = por %p218, %p219
    %p222 = scmp.ne.s32.totalorder %s205, %s221
    %p223 = scmp.eq.s32.totalorder %s19, 0
    %p224 = por %p222, %p223
    %p225 = scmp.le.s32.totalorder 1, %s13
    %p226 = scmp.lt.s32.totalorder %s13, 3
    %p227 = pnand %p225, %p226
    %p228 = pneg %p227
    // Predicated region
    $region9: #{conv_block_forward.5} parent=5 // pred_check
      _
    $region10: #{conv_block_forward.5} parent=5 // pred_check_branch
      %230 = sbr.rel (%p227) target = $region12
    $region11: #{conv_block_forward.5} parent=5 // pred_region
      %s231 = ssub.s32 %s13, 1
      // Predicated region
      $region13: #{conv_block_forward.5} parent=11 // pred_check
        %p232 = pneg %p142
      $region14: #{conv_block_forward.5} parent=11 // pred_check_branch
        %234 = sbr.rel (%p232) target = $region16
      $region15: #{conv_block_forward.5} parent=11 // pred_region
        _
      $region16: #{conv_block_forward.5} parent=11 // pred_fallthru
        _
      // Predicated region
      $region17: #{conv_block_forward.5} parent=11 // pred_check
        %p235 = pneg %p163
      $region18: #{conv_block_forward.5} parent=11 // pred_check_branch
        %237 = sbr.rel (%p235) target = $region20
      $region19: #{conv_block_forward.5} parent=11 // pred_region
        _
      $region20: #{conv_block_forward.5} parent=11 // pred_fallthru
        _
    $region12: #{conv_block_forward.5} parent=5 // pred_fallthru
      _
    %p238 = scmp.lt.s32.totalorder %s13, 2
    // Predicated region
    $region21: #{conv_block_forward.5} parent=5 // pred_check
      %p239 = pneg %p238
    $region22: #{conv_block_forward.5} parent=5 // pred_check_branch
      %241 = sbr.rel (%p239) target = $region24
    $region23: #{conv_block_forward.5} parent=5 // pred_region
      // Predicated region
      $region25: #{conv_block_forward.5} parent=23 // pred_check
        %p242 = pneg %p47
      $region26: #{conv_block_forward.5} parent=23 // pred_check_branch
        %244 = sbr.rel (%p242) target = $region28
      $region27: #{conv_block_forward.5} parent=23 // pred_region
        %p245 = scmp.lt.s32.totalorder %s20, 1
        %s246 = scalar_select %p245, %s20, 1
        %p247 = scmp.lt.s32.totalorder %s21, 0
        %s248 = scalar_select %p247, %s21, 0
        %s249 = smul.addr %s246, 2
        %s250 = sadd.s32 %s248, %s249
        %s251 = smul.addr %s250, 4
        %s252 = scalar_lea.vmem %s0, %s251
      $region28: #{conv_block_forward.5} parent=23 // pred_fallthru
        _
      // Predicated region
      $region29: #{conv_block_forward.5} parent=23 // pred_check
        %p253 = pneg %p81
      $region30: #{conv_block_forward.5} parent=23 // pred_check_branch
        %255 = sbr.rel (%p253) target = $region32
      $region31: #{conv_block_forward.5} parent=23 // pred_region
        %s256 = ssub.s32 %s21, 1
        %p257 = scmp.gt.s32.totalorder %s256, 0
        %s258 = scalar_select %p257, %s256, 0
        %p259 = scmp.lt.s32.totalorder %s20, 1
        %s260 = scalar_select %p259, %s20, 1
        %p261 = scmp.lt.s32.totalorder %s258, 0
        %s262 = scalar_select %p261, %s258, 0
        %s263 = smul.addr %s260, 2
        %s264 = sadd.s32 %s262, %s263
        %s265 = smul.addr %s264, 4
        %s266 = scalar_lea.vmem %s1, %s265
        %s267 = ssub.s32 %s21, 1
        %p268 = scmp.gt.s32.totalorder %s267, 0
        %s269 = scalar_select %p268, %s267, 0
      $region32: #{conv_block_forward.5} parent=23 // pred_fallthru
        _
      // Predicated region
      $region33: #{conv_block_forward.5} parent=23 // pred_check
        %p270 = pneg %p115
      $region34: #{conv_block_forward.5} parent=23 // pred_check_branch
        %272 = sbr.rel (%p270) target = $region36
      $region35: #{conv_block_forward.5} parent=23 // pred_region
        %s273 = sadd.s32 %s21, 1
        %p274 = scmp.lt.s32.totalorder %s273, 0
        %s275 = scalar_select %p274, %s273, 0
        %p276 = scmp.lt.s32.totalorder %s20, 1
        %s277 = scalar_select %p276, %s20, 1
        %p278 = scmp.lt.s32.totalorder %s275, 0
        %s279 = scalar_select %p278, %s275, 0
        %s280 = smul.addr %s277, 2
        %s281 = sadd.s32 %s279, %s280
        %s282 = smul.addr %s281, 4
        %s283 = scalar_lea.vmem %s2, %s282
        %s284 = sadd.s32 %s21, 1
        %p285 = scmp.lt.s32.totalorder %s284, 0
        %s286 = scalar_select %p285, %s284, 0
      $region36: #{conv_block_forward.5} parent=23 // pred_fallthru
        _
    $region24: #{conv_block_forward.5} parent=5 // pred_fallthru
      _
    %p287 = scmp.le.s32.totalorder 1, %s13
    %p288 = scmp.lt.s32.totalorder %s13, 3
    %p289 = pnand %p287, %p288
    %p290 = pneg %p289
    // Predicated region
    $region37: #{conv_block_forward.5} parent=5 // pred_check
      _
    $region38: #{conv_block_forward.5} parent=5 // pred_check_branch
      %292 = sbr.rel (%p289) target = $region40
    $region39: #{conv_block_forward.5} parent=5 // pred_region
      %s293 = ssub.s32 %s13, 1
      %p294 = scmp.lt.s32.totalorder %s22, 1
      %s295 = scalar_select %p294, %s22, 1
      %p296 = scmp.lt.s32.totalorder %s23, 0
      %s297 = scalar_select %p296, %s23, 0
      %s298 = smul.addr %s295, 2
      %s299 = sadd.s32 %s297, %s298
      %s300 = smul.addr %s299, 4
      %s301 = scalar_lea.vmem %s0, %s300
      %p302 = pneg %p53
      %p303 = pneg %p50
      %s304 = ssub.s32 %s23, 1
      %p305 = scmp.gt.s32.totalorder %s304, 0
      %s306 = scalar_select %p305, %s304, 0
      %p307 = scmp.lt.s32.totalorder %s22, 1
      %s308 = scalar_select %p307, %s22, 1
      %p309 = scmp.lt.s32.totalorder %s306, 0
      %s310 = scalar_select %p309, %s306, 0
      %s311 = smul.addr %s308, 2
      %s312 = sadd.s32 %s310, %s311
      %s313 = smul.addr %s312, 4
      %s314 = scalar_lea.vmem %s1, %s313
      %p315 = pneg %p87
      %p316 = pneg %p84
      %s317 = sadd.s32 %s23, 1
      %p318 = scmp.lt.s32.totalorder %s317, 0
      %s319 = scalar_select %p318, %s317, 0
      %p320 = scmp.lt.s32.totalorder %s22, 1
      %s321 = scalar_select %p320, %s22, 1
      %p322 = scmp.lt.s32.totalorder %s319, 0
      %s323 = scalar_select %p322, %s319, 0
      %s324 = smul.addr %s321, 2
      %s325 = sadd.s32 %s323, %s324
      %s326 = smul.addr %s325, 4
      %s327 = scalar_lea.vmem %s2, %s326
      %p328 = pneg %p121
      %p329 = pneg %p118
      %p330 = pneg %p142
      %p331 = pneg %p139
      %p332 = pneg %p163
      %p333 = pneg %p160
      %p334 = pneg %p191
      %p335 = pneg %p188
      %p336 = scmp.lt.s32.totalorder %s22, 1
      %s337 = scalar_select %p336, %s22, 1
      %p338 = scmp.lt.s32.totalorder %s23, 0
      %s339 = scalar_select %p338, %s23, 0
      %s340 = smul.addr %s337, 2
      %s341 = sadd.s32 %s339, %s340
      %s342 = smul.addr %s341, 4
      %s343 = scalar_lea.vmem %s5, %s342
      %p344 = pneg %p217
      %p345 = pneg %p214
      %p346 = scmp.lt.s32.totalorder %s22, 1
      %s347 = scalar_select %p346, %s22, 1
      %s348 = smul.addr %s347, 2
      %s349 = smul.addr %s348, 8
      %s350 = scalar_lea.vmem %s6, %s349
      %p351 = scmp.lt.s32.totalorder %s22, 1
      %s352 = scalar_select %p351, %s22, 1
      %p353 = scmp.lt.s32.totalorder %s23, 0
      %s354 = scalar_select %p353, %s23, 0
      %s355 = smul.addr %s352, 2
      %s356 = sadd.s32 %s354, %s355
      %s357 = smul.addr %s356, 4
      %s358 = scalar_lea.vmem %s0, %s357
      %s359 = ssub.s32 %s23, 1
      %p360 = scmp.gt.s32.totalorder %s359, 0
      %s361 = scalar_select %p360, %s359, 0
      %p362 = scmp.lt.s32.totalorder %s22, 1
      %s363 = scalar_select %p362, %s22, 1
      %p364 = scmp.lt.s32.totalorder %s361, 0
      %s365 = scalar_select %p364, %s361, 0
      %s366 = smul.addr %s363, 2
      %s367 = sadd.s32 %s365, %s366
      %s368 = smul.addr %s367, 4
      %s369 = scalar_lea.vmem %s1, %s368
      %s370 = ssub.s32 %s23, 1
      %p371 = scmp.gt.s32.totalorder %s370, 0
      %s372 = scalar_select %p371, %s370, 0
      %s373 = sadd.s32 %s23, 1
      %p374 = scmp.lt.s32.totalorder %s373, 0
      %s375 = scalar_select %p374, %s373, 0
      %p376 = scmp.lt.s32.totalorder %s22, 1
      %s377 = scalar_select %p376, %s22, 1
      %p378 = scmp.lt.s32.totalorder %s375, 0
      %s379 = scalar_select %p378, %s375, 0
      %s380 = smul.addr %s377, 2
      %s381 = sadd.s32 %s379, %s380
      %s382 = smul.addr %s381, 4
      %s383 = scalar_lea.vmem %s2, %s382
      %s384 = sadd.s32 %s23, 1
      %p385 = scmp.lt.s32.totalorder %s384, 0
      %s386 = scalar_select %p385, %s384, 0
      %p387 = scmp.lt.s32.totalorder %s22, 1
      %s388 = scalar_select %p387, %s22, 1
      %p389 = scmp.lt.s32.totalorder %s23, 0
      %s390 = scalar_select %p389, %s23, 0
      %s391 = smul.addr %s388, 2
      %s392 = sadd.s32 %s390, %s391
      %s393 = smul.addr %s392, 4
      %s394 = scalar_lea.vmem %s5, %s393
      %p395 = scmp.lt.s32.totalorder %s22, 1
      %s396 = scalar_select %p395, %s22, 1
      %s397 = smul.addr %s396, 2
      %s398 = smul.addr %s397, 8
      %s399 = scalar_lea.vmem %s6, %s398
      %p401 = scmp.eq.s32.totalorder %s23, 0
      // Predicated region
      $region41: #{conv_block_forward.5} parent=39 // pred_check
        %p402 = pneg %p401
      $region42: #{conv_block_forward.5} parent=39 // pred_check_branch
        %404 = sbr.rel (%p402) target = $region44
      $region43: #{conv_block_forward.5} parent=39 // pred_region
        %405 = vst [vmem:[%s399] sm:$0xff] 0.0
        %406 = vst [vmem:[%s399 + $0x8] sm:$0xff] 0.0
      $region44: #{conv_block_forward.5} parent=39 // pred_fallthru
        _
      %v407 = vld [vmem:[%s4] sm:$0xff]
      %v408 = vld [vmem:[%s4 + $0x8] sm:$0xff]
      %s409 = smul.u32 %s23, 128
      %v410 = vld [vmem:[%s358] sm:$0xf]
      %v411 = vld [vmem:[%s358 + $0x4] sm:$0xf]
      %v412 = vunpack.c.l.bf16 %v410
      %v413 = vunpack.c.l.bf16 %v411
      %415 = vset.pattern.permute.xlu0 0
      %416 = vperm.xlu0 %415, %v407
      %v417 = vpop.permute.xlu0 %416
      %420 = vset.pattern.permute.xlu0 0
      %421 = vperm.xlu0 %420, %v408
      %v422 = vpop.permute.xlu0 %421
      %v424 = vmul.f32 %v412, %v417
      %v425 = vmul.f32 %v413, %v422
      %426 = vset.pattern.permute.xlu0 1
      %427 = vperm.xlu0 %426, %v407
      %v428 = vpop.permute.xlu0 %427
      %430 = vset.pattern.permute.xlu0 1
      %431 = vperm.xlu0 %430, %v408
      %v432 = vpop.permute.xlu0 %431
      %v434 = vadd.f32 %v424, %v428
      %v435 = vadd.f32 %v425, %v432
      %v436 = vmax.f32 %v434, 0.0
      %v437 = vmax.f32 %v435, 0.0
      %v438 = vlaneseq
      %v439 = vand.u32 %v438, 127
      %v440 = vstv %s409
      %v441 = vadd.s32 %v440, %v439
      %vm442 = vcmp.lt.s32.totalorder %v441, 16
      %v443 = vsel %vm442, 1, 0
      %vm444 = vcmp.eq.s32.totalorder %v443, 1
      %v445 = vsel %vm444, %v436, 0.0
      %v446 = vsel %vm444, %v437, 0.0
      %v447 = vld [vmem:[%s369] sm:$0xf]
      %v448 = vld [vmem:[%s369 + $0x4] sm:$0xf]
      %v449 = vunpack.c.l.bf16 %v447
      %v450 = vunpack.c.l.bf16 %v448
      %451 = vrot.lane.b32.xlu0 %v407, 127
      %v452 = vpop.permute.xlu0 %451
      %453 = vrot.lane.b32.xlu0 %v408, 127
      %v454 = vpop.permute.xlu0 %453
      %v457 = vmul.f32 %v449, %v452
      %v458 = vmul.f32 %v450, %v454
      %459 = vrot.lane.b32.xlu0 %v407, 126
      %v460 = vpop.permute.xlu0 %459
      %461 = vrot.lane.b32.xlu0 %v408, 126
      %v462 = vpop.permute.xlu0 %461
      %v465 = vadd.f32 %v457, %v460
      %v466 = vadd.f32 %v458, %v462
      %v467 = vmax.f32 %v465, 0.0
      %v468 = vmax.f32 %v466, 0.0
      %v469 = vld [vmem:[%s383] sm:$0xf]
      %v470 = vld [vmem:[%s383 + $0x4] sm:$0xf]
      %v471 = vunpack.c.l.bf16 %v469
      %v472 = vunpack.c.l.bf16 %v470
      %v473 = vmul.f32 %v471, %v407
      %v474 = vmul.f32 %v472, %v408
      %v475 = vadd.f32 %v473, %v452
      %v476 = vadd.f32 %v474, %v454
      %v477 = vmax.f32 %v475, 0.0
      %v478 = vmax.f32 %v476, 0.0
      %p479 = scmp.gt.s32.totalorder %s23, 0
      %s480 = ssub.s32 %s409, 1
      %p481 = scmp.lt.s32.totalorder %s480, 16
      %p482 = pnand %p479, %p481
      %p483 = pneg %p482
      %s484 = scalar_select %p483, 1, 0
      %v485 = vstv %s484
      %vm486 = vcmp.eq.s32.totalorder %v485, 1
      %v487 = vsel %vm486, %v467, 0.0
      %v488 = vsel %vm486, %v468, 0.0
      %s489 = sadd.s32 %s409, 128
      %p490 = scmp.lt.s32.totalorder %s489, 16
      %s491 = scalar_select %p490, 1, 0
      %v492 = vstv %s491
      %vm493 = vcmp.eq.s32.totalorder %v492, 1
      %v494 = vsel %vm493, %v477, 0.0
      %v495 = vsel %vm493, %v478, 0.0
      %v496 = vpack.c.bf16 %v446, %v445
      %v497 = vpack.c.bf16 %v488, %v487
      %499 = vrot.lane.b32.xlu0 %v497, 1
      %v500 = vpop.permute.xlu0 %499
      %502 = vrot.lane.b32.xlu0 %v496, 1
      %v503 = vpop.permute.xlu0 %502
      %vm504 = vcmask 7168
      %v507 = vsel %vm504, %v500, %v503
      %v509 = vpack.c.bf16 %v495, %v494
      %510 = vrot.lane.b32.xlu0 %v496, 127
      %v511 = vpop.permute.xlu0 %510
      %513 = vrot.lane.b32.xlu0 %v509, 127
      %v514 = vpop.permute.xlu0 %513
      %vm515 = vcmask 1039360
      %v518 = vsel %vm515, %v511, %v514
      %v520 = vld [vmem:[%s3] sm:$0xf]
      %v521 = vld [vmem:[%s3 + $0x4] sm:$0xf]
      %s522 = scalar_lea.vmem %s3, 8
      %v523 = vld [vmem:[%s522] sm:$0xf]
      %v524 = vld [vmem:[%s522 + $0x4] sm:$0xf]
      %v527 = vunpack.c.l.b16 %v523
      %v528 = vunpack.c.l.b16 %v524
      %v529 = vpack.c.b16 %v528, %v527
      %vm530 = vcmask 130048
      %v532 = vsel %vm530, %v529, 0
      %534 = vmatprep.subr.bf16.mxu0 0
      %535 = vmatpush1.bf16.msra.mxu0 %v496
      %536 = vmatprep.subr.bf16.mxu0 0
      %537 = vmatpush1.bf16.msra.mxu0 0
      %538 = vmatprep.subr.bf16.mxu0 0
      %539 = vmatpush1.bf16.msra.mxu0 0
      %540 = vmatprep.subr.bf16.mxu0 0
      %541 = vmatpush1.bf16.msra.mxu0 0
      %542 = vmatprep.subr.bf16.mxu0 0
      %543 = vmatpush1.bf16.msra.mxu0 0
      %544 = vmatprep.subr.bf16.mxu0 0
      %545 = vmatpush1.bf16.msra.mxu0 0
      %546 = vmatprep.subr.bf16.mxu0 0
      %547 = vmatpush1.bf16.msra.mxu0 0
      %548 = vmatprep.subr.bf16.mxu0 0
      %549 = vmatpush1.bf16.msra.mxu0 0
      %550 = vmatprep.subr.bf16.mxu0 0
      %551 = vmatpush1.bf16.msra.mxu0 0
      %552 = vmatprep.subr.bf16.mxu0 0
      %553 = vmatpush1.bf16.msra.mxu0 0
      %554 = vmatprep.subr.bf16.mxu0 0
      %555 = vmatpush1.bf16.msra.mxu0 0
      %556 = vmatprep.subr.bf16.mxu0 0
      %557 = vmatpush1.bf16.msra.mxu0 0
      %558 = vmatprep.subr.bf16.mxu0 0
      %559 = vmatpush1.bf16.msra.mxu0 0
      %560 = vmatprep.subr.bf16.mxu0 0
      %561 = vmatpush1.bf16.msra.mxu0 0
      %562 = vmatprep.subr.bf16.mxu0 0
      %563 = vmatpush1.bf16.msra.mxu0 0
      %564 = vmatprep.subr.bf16.mxu0 0
      %565 = vmatpush1.bf16.msra.mxu0 0
      %566 = vmatprep.mubr.bf16.mxu0 0
      %567 = vmatmul.mubr.bf16.gmra.mrb[0].mxu0 %v532
      %v568 = vpop.f32.mrb[0].mxu0
      %v569 = vadd.f32 0.0, %v568
      %v570 = vpop.f32.mrb[0].mxu0
      %v571 = vpop.f32.mrb[0].mxu0
      %v572 = vadd.f32 0.0, %v571
      %v573 = vpop.f32.mrb[0].mxu0
      %574 = vdwg.mxu0
      %v577 = vunpack.c.l.b16 %v520
      %v578 = vunpack.c.l.b16 %v521
      %v579 = vpack.c.b16 %v578, %v577
      %v581 = vsel %vm530, %v579, 0
      %583 = vmatprep.subr.bf16.mxu0 0
      %584 = vmatpush1.bf16.msra.mxu0 %v507
      %585 = vmatprep.subr.bf16.mxu0 0
      %586 = vmatpush1.bf16.msra.mxu0 0
      %587 = vmatprep.subr.bf16.mxu0 0
      %588 = vmatpush1.bf16.msra.mxu0 0
      %589 = vmatprep.subr.bf16.mxu0 0
      %590 = vmatpush1.bf16.msra.mxu0 0
      %591 = vmatprep.subr.bf16.mxu0 0
      %592 = vmatpush1.bf16.msra.mxu0 0
      %593 = vmatprep.subr.bf16.mxu0 0
      %594 = vmatpush1.bf16.msra.mxu0 0
      %595 = vmatprep.subr.bf16.mxu0 0
      %596 = vmatpush1.bf16.msra.mxu0 0
      %597 = vmatprep.subr.bf16.mxu0 0
      %598 = vmatpush1.bf16.msra.mxu0 0
      %599 = vmatprep.subr.bf16.mxu0 0
      %600 = vmatpush1.bf16.msra.mxu0 0
      %601 = vmatprep.subr.bf16.mxu0 0
      %602 = vmatpush1.bf16.msra.mxu0 0
      %603 = vmatprep.subr.bf16.mxu0 0
      %604 = vmatpush1.bf16.msra.mxu0 0
      %605 = vmatprep.subr.bf16.mxu0 0
      %606 = vmatpush1.bf16.msra.mxu0 0
      %607 = vmatprep.subr.bf16.mxu0 0
      %608 = vmatpush1.bf16.msra.mxu0 0
      %609 = vmatprep.subr.bf16.mxu0 0
      %610 = vmatpush1.bf16.msra.mxu0 0
      %611 = vmatprep.subr.bf16.mxu0 0
      %612 = vmatpush1.bf16.msra.mxu0 0
      %613 = vmatprep.subr.bf16.mxu0 0
      %614 = vmatpush1.bf16.msra.mxu0 0
      %615 = vmatprep.mubr.bf16.mxu0 0
      %616 = vmatmul.mubr.bf16.gmra.mrb[0].mxu0 %v581
      %v617 = vpop.f32.mrb[0].mxu0
      %v618 = vadd.f32 %v569, %v617
      %v619 = vpop.f32.mrb[0].mxu0
      %v620 = vpop.f32.mrb[0].mxu0
      %v621 = vadd.f32 %v572, %v620
      %v622 = vpop.f32.mrb[0].mxu0
      %623 = vdwg.mxu0
      %s624 = scalar_lea.vmem %s3, 16
      %v625 = vld [vmem:[%s624] sm:$0xf]
      %v626 = vld [vmem:[%s624 + $0x4] sm:$0xf]
      %v629 = vunpack.c.l.b16 %v625
      %v630 = vunpack.c.l.b16 %v626
      %v631 = vpack.c.b16 %v630, %v629
      %v633 = vsel %vm530, %v631, 0
      %635 = vmatprep.subr.bf16.mxu0 0
      %636 = vmatpush1.bf16.msra.mxu0 %v518
      %637 = vmatprep.subr.bf16.mxu0 0
      %638 = vmatpush1.bf16.msra.mxu0 0
      %639 = vmatprep.subr.bf16.mxu0 0
      %640 = vmatpush1.bf16.msra.mxu0 0
      %641 = vmatprep.subr.bf16.mxu0 0
      %642 = vmatpush1.bf16.msra.mxu0 0
      %643 = vmatprep.subr.bf16.mxu0 0
      %644 = vmatpush1.bf16.msra.mxu0 0
      %645 = vmatprep.subr.bf16.mxu0 0
      %646 = vmatpush1.bf16.msra.mxu0 0
      %647 = vmatprep.subr.bf16.mxu0 0
      %648 = vmatpush1.bf16.msra.mxu0 0
      %649 = vmatprep.subr.bf16.mxu0 0
      %650 = vmatpush1.bf16.msra.mxu0 0
      %651 = vmatprep.subr.bf16.mxu0 0
      %652 = vmatpush1.bf16.msra.mxu0 0
      %653 = vmatprep.subr.bf16.mxu0 0
      %654 = vmatpush1.bf16.msra.mxu0 0
      %655 = vmatprep.subr.bf16.mxu0 0
      %656 = vmatpush1.bf16.msra.mxu0 0
      %657 = vmatprep.subr.bf16.mxu0 0
      %658 = vmatpush1.bf16.msra.mxu0 0
      %659 = vmatprep.subr.bf16.mxu0 0
      %660 = vmatpush1.bf16.msra.mxu0 0
      %661 = vmatprep.subr.bf16.mxu0 0
      %662 = vmatpush1.bf16.msra.mxu0 0
      %663 = vmatprep.subr.bf16.mxu0 0
      %664 = vmatpush1.bf16.msra.mxu0 0
      %665 = vmatprep.subr.bf16.mxu0 0
      %666 = vmatpush1.bf16.msra.mxu0 0
      %667 = vmatprep.mubr.bf16.mxu0 0
      %668 = vmatmul.mubr.bf16.gmra.mrb[0].mxu0 %v633
      %v669 = vpop.f32.mrb[0].mxu0
      %v670 = vadd.f32 0.0, %v669
      %v671 = vpop.f32.mrb[0].mxu0
      %v672 = vpop.f32.mrb[0].mxu0
      %v673 = vadd.f32 0.0, %v672
      %v674 = vpop.f32.mrb[0].mxu0
      %675 = vdwg.mxu0
      %v676 = vadd.f32 %v618, %v670
      %v677 = vadd.f32 %v621, %v673
      %v678 = vsel %vm444, %v676, 0.0
      %v679 = vsel %vm444, %v677, 0.0
      %v680 = vpack.c.bf16 %v679, %v678
      %v682 = vunpack.c.l.b16 %v680
      %v683 = vunpack.c.h.b16 %v680
      %v684 = vpack.c.b16 %v682, %v682
      %v685 = vpack.c.b16 %v683, %v683
      %688 = vst [vmem:[%s394] sm:$0xf] %v684
      %689 = vst [vmem:[%s394 + $0x4] sm:$0xf] %v685
      %690 = vadd.xlane.f32.xlu0 %v678
      %v691 = vpop.xlane.xlu0 %690
      %692 = vadd.xlane.f32.xlu0 %v679
      %v693 = vpop.xlane.xlu0 %692
      %v694 = vmul.f32 %v678, %v678
      %v695 = vmul.f32 %v679, %v679
      %696 = vadd.xlane.f32.xlu0 %v694
      %v697 = vpop.xlane.xlu0 %696
      %698 = vadd.xlane.f32.xlu0 %v695
      %v699 = vpop.xlane.xlu0 %698
      %v700 = vld [vmem:[%s399] sm:$0xff]
      %v701 = vld [vmem:[%s399 + $0x8] sm:$0xff]
      %vm702 = vcmp.eq.s32.totalorder %v439, 0
      %v703 = vsel %vm702, %v691, 0.0
      %v704 = vsel %vm702, %v693, 0.0
      %vm705 = vcmp.eq.s32.totalorder %v439, 1
      %v706 = vsel %vm705, %v697, 0.0
      %v707 = vsel %vm705, %v699, 0.0
      %v708 = vadd.f32 %v703, %v706
      %v709 = vadd.f32 %v704, %v707
      %v710 = vadd.f32 %v700, %v708
      %v711 = vadd.f32 %v701, %v709
      %712 = vst [vmem:[%s399] sm:$0xff] %v710
      %713 = vst [vmem:[%s399 + $0x8] sm:$0xff] %v711
      %p714 = scmp.lt.s32.totalorder %s22, 1
      %s715 = scalar_select %p714, %s22, 1
      %p716 = scmp.lt.s32.totalorder %s23, 0
      %s717 = scalar_select %p716, %s23, 0
      %s718 = smul.addr %s715, 2
      %s719 = sadd.s32 %s717, %s718
      %s720 = smul.addr %s719, 4
      %s721 = scalar_lea.vmem %s5, %s720
      %p722 = scmp.lt.s32.totalorder %s22, 1
      %s723 = scalar_select %p722, %s22, 1
      %s724 = smul.addr %s723, 2
      %s725 = smul.addr %s724, 8
      %s726 = scalar_lea.vmem %s6, %s725
      // Predicated region
      $region45: #{conv_block_forward.5} parent=39 // pred_check
        %p727 = pneg %p188
      $region46: #{conv_block_forward.5} parent=39 // pred_check_branch
        %729 = sbr.rel (%p727) target = $region48
      $region47: #{conv_block_forward.5} parent=39 // pred_region
        _
      $region48: #{conv_block_forward.5} parent=39 // pred_fallthru
        _
      // Predicated region
      $region49: #{conv_block_forward.5} parent=39 // pred_check
        %p730 = pneg %p214
      $region50: #{conv_block_forward.5} parent=39 // pred_check_branch
        %732 = sbr.rel (%p730) target = $region52
      $region51: #{conv_block_forward.5} parent=39 // pred_region
        _
      $region52: #{conv_block_forward.5} parent=39 // pred_fallthru
        _
    $region40: #{conv_block_forward.5} parent=5 // pred_fallthru
      _
    %p733 = scmp.le.s32.totalorder 2, %s13
    // Predicated region
    $region53: #{conv_block_forward.5} parent=5 // pred_check
      %p734 = pneg %p733
    $region54: #{conv_block_forward.5} parent=5 // pred_check_branch
      %736 = sbr.rel (%p734) target = $region56
    $region55: #{conv_block_forward.5} parent=5 // pred_region
      %s737 = ssub.s32 %s13, 2
      // Predicated region
      $region57: #{conv_block_forward.5} parent=55 // pred_check
        %p738 = pneg %p194
      $region58: #{conv_block_forward.5} parent=55 // pred_check_branch
        %740 = sbr.rel (%p738) target = $region60
      $region59: #{conv_block_forward.5} parent=55 // pred_region
        %p741 = scmp.lt.s32.totalorder %s24, 1
        %s742 = scalar_select %p741, %s24, 1
        %p743 = scmp.lt.s32.totalorder %s25, 0
        %s744 = scalar_select %p743, %s25, 0
        %s745 = smul.addr %s742, 2
        %s746 = sadd.s32 %s744, %s745
        %s747 = smul.addr %s746, 4
        %s748 = scalar_lea.vmem %s5, %s747
      $region60: #{conv_block_forward.5} parent=55 // pred_fallthru
        _
      // Predicated region
      $region61: #{conv_block_forward.5} parent=55 // pred_check
        %p749 = pneg %p220
      $region62: #{conv_block_forward.5} parent=55 // pred_check_branch
        %751 = sbr.rel (%p749) target = $region64
      $region63: #{conv_block_forward.5} parent=55 // pred_region
        %p752 = scmp.lt.s32.totalorder %s24, 1
        %s753 = scalar_select %p752, %s24, 1
        %s754 = smul.addr %s753, 2
        %s755 = smul.addr %s754, 8
        %s756 = scalar_lea.vmem %s6, %s755
      $region64: #{conv_block_forward.5} parent=55 // pred_fallthru
        _
    $region56: #{conv_block_forward.5} parent=5 // pred_fallthru
      _
  $region6: #{conv_block_forward.5} parent=0 // loop_footer
    %s17 = sadd.s32 1, %s13
  $region7: #{conv_block_forward.5} parent=0 // loop_footer_branch
    %12 = sbr.rel target = $region3
  $region8: #{conv_block_forward.5} parent=0 // loop_exit
    _

</llo_original>
